<compile_context>
chip_gen: v7x
topology: tpu7x:2x2x1
jax: 0.10.0
libtpu: 0.0.40
codegen_flags: <defaults>
</compile_context>

<pallas_src>
import functools

import jax
import jax.numpy as jnp
import numpy as np
from jax.experimental import pallas as pl
from jax.experimental.pallas import tpu as pltpu


def _attn_pool_kernel(x_ref, pos_sp_ref, pos0_ref, nmask_ref, w3_ref, b3_ref,
                      wc_ref, bc_ref, seg_ref, segT_ref, o_ref,
                      *, hw_true, approx_recip):
    """Pooled-token attention for one tile of batch elements.

    x_ref      : (Bt, HWp, C)    spatial tokens, channels last (HWp % 8 == 0)
    pos_sp_ref : (HWp, C)  f32   positional embedding rows 1..HW (zero padded)
    pos0_ref   : (1, C)    f32   positional embedding row 0 (mean token)
    nmask_ref  : (HWp, NHp) f32  additive score mask (0 = valid, -1e30 = pad row)
    w3_ref     : (C, 3C)   bf16  fused [Wq*scale | Wk | Wv], pre-transposed
    b3_ref     : (1, 3C)   f32   fused [bq*scale | bk | bv]
    wc_ref     : (C, Dout) bf16  output projection, pre-transposed
    bc_ref     : (1, Dout) f32
    seg_ref    : (C, NHp)  bf16  channel->head one-hot (head axis padded to 128)
    segT_ref   : (NHp, C)  bf16  head->channel one-hot
    o_ref      : (Bt, Dout)      attention output of the pooled (mean) token
    """
    bt, hwp, c = x_ref.shape
    nhp = seg_ref.shape[1]
    bf16 = jnp.bfloat16

    xb = x_ref[...].astype(jnp.float32)                              # (Bt, HWp, C)

    # pooled (mean) token + pos[0]; padded rows of xb are zero -> sum is exact
    tok0 = jnp.sum(xb, axis=1) * (1.0 / hw_true) + pos0_ref[...]     # (Bt, C)
    # spatial tokens + pos[1:]; flatten (free: HWp is a multiple of 8)
    tok_sp = (xb + pos_sp_ref[...][None, :, :]).reshape(bt * hwp, c)

    # pooled-token q/k/v in one MXU pass (softmax scale folded into Wq/bq)
    qkv0 = (jnp.dot(tok0.astype(bf16), w3_ref[...],
                    preferred_element_type=jnp.float32) + b3_ref[...])   # (Bt, 3C)
    q0 = qkv0[:, :c]
    k0 = qkv0[:, c:2 * c]
    v0 = qkv0[:, 2 * c:]

    tok_sp_bf = tok_sp.astype(bf16)

    # --- keys & per-head scores first; values are materialized afterwards so
    #     the key / score temporaries are dead before v_sp exists (peak VMEM) ---
    k_sp = (jnp.dot(tok_sp_bf, w3_ref[:, c:2 * c],
                    preferred_element_type=jnp.float32) + b3_ref[:, c:2 * c])

    # s[b, l, h] = sum_{d in head h} q0[b, d] * k[b, l, d]
    prod = (k_sp.reshape(bt, hwp, c) * q0[:, None, :]).reshape(bt * hwp, c)
    s_sp = jnp.dot(prod.astype(bf16), seg_ref[...],
                   preferred_element_type=jnp.float32).reshape(bt, hwp, nhp)
    s_sp = s_sp + nmask_ref[...][None, :, :]            # drop padded key rows
    s0 = jnp.dot((k0 * q0).astype(bf16), seg_ref[...],
                 preferred_element_type=jnp.float32)                     # (Bt, NHp)

    # numerically-stable softmax over the HW+1 keys (per batch / head), in f32
    m = jnp.maximum(s0, jnp.max(s_sp, axis=1))                           # (Bt, NHp)
    p0 = jnp.exp(s0 - m)
    p_sp = jnp.exp(s_sp - m[:, None, :])
    denom = p0 + jnp.sum(p_sp, axis=1)
    inv = pl.reciprocal(denom, approx=approx_recip)                      # EUP slot
    p0 = p0 * inv
    p_sp = p_sp * inv[:, None, :]

    # expand per-head probabilities back to channels
    pch0 = jnp.dot(p0.astype(bf16), segT_ref[...],
                   preferred_element_type=jnp.float32)                   # (Bt, C)
    pch_sp = jnp.dot(p_sp.reshape(bt * hwp, nhp).astype(bf16), segT_ref[...],
                     preferred_element_type=jnp.float32)                 # (Bt*HWp, C)

    # --- values (key / score temporaries dead by now) ---
    v_sp = (jnp.dot(tok_sp_bf, w3_ref[:, 2 * c:],
                    preferred_element_type=jnp.float32) + b3_ref[:, 2 * c:])

    attn = pch0 * v0 + jnp.sum((pch_sp * v_sp).reshape(bt, hwp, c), axis=1)

    out = (jnp.dot(attn.astype(bf16), wc_ref[...],
                   preferred_element_type=jnp.float32) + bc_ref[...])
    o_ref[...] = out.astype(o_ref.dtype)                                 # (Bt, Dout)


def attention_pool_2d(x_nchw, pos, wq, bq, wk, bk, wv, bv, wc, bc, num_heads,
                      *, batch_tile=8, approx_recip=True):
    """Forward pass of AttentionPool2d. Weights in PyTorch (out, in) layout."""
    n, c, h, w = x_nchw.shape
    hw = h * w
    dout = wc.shape[0]
    assert c % num_heads == 0, "embed_dim must be divisible by num_heads"
    hd = c // num_heads
    scale = 1.0 / np.sqrt(hd)

    f32, bf16 = jnp.float32, jnp.bfloat16

    # padded sizes: HW -> multiple of 8 (sublanes, free reshapes), heads -> 128
    # lanes (dense score tile), batch -> multiple of the batch tile.
    hwp = max(8, ((hw + 7) // 8) * 8)
    nhp = max(128, ((num_heads + 127) // 128) * 128)
    bt = batch_tile
    n_pad = ((n + bt - 1) // bt) * bt

    # ---- wrapper-side layout & param packing (done once per call) ----
    # NOTE: this NCHW->(N,HW,C) transpose is one extra HBM pass; at production
    # sizes it should be fused into the upstream producer of x.
    x_tok = jnp.transpose(x_nchw.reshape(n, c, hw), (0, 2, 1))           # (N, HW, C)
    x_tok = jnp.pad(x_tok, ((0, n_pad - n), (0, hwp - hw), (0, 0)))      # zero pad

    pos_sp = jnp.pad(pos[1:].astype(f32), ((0, hwp - hw), (0, 0)))       # (HWp, C)
    pos0 = pos[0:1].astype(f32)                                          # (1, C)

    # additive score mask for the padded key rows
    nmask_np = np.zeros((hwp, nhp), np.float32)
    nmask_np[hw:, :] = -1e30
    nmask = jnp.asarray(nmask_np)

    # fused [Wq*scale | Wk | Wv] in bf16 (MXU-native); biases stay f32
    w3 = jnp.concatenate([wq.T * scale, wk.T, wv.T], axis=1).astype(bf16)  # (C, 3C)
    b3 = jnp.concatenate([bq * scale, bk, bv]).astype(f32).reshape(1, 3 * c)
    wc_t = wc.T.astype(bf16)                                               # (C, Dout)
    bc2 = bc.astype(f32).reshape(1, dout)

    # channel <-> head one-hot segment matrices (hoisted constants, bf16)
    heads_of_ch = np.arange(c) // hd
    seg_np = (heads_of_ch[:, None] == np.arange(nhp)[None, :]).astype(np.float32)
    seg = jnp.asarray(seg_np, dtype=bf16)                                  # (C, NHp)
    segT = jnp.asarray(seg_np.T, dtype=bf16)                               # (NHp, C)

    kernel = functools.partial(_attn_pool_kernel, hw_true=hw,
                               approx_recip=approx_recip)

    # advisory cost estimate for the XLA scheduler
    flops = 2 * n_pad * (hwp * c * (2 * c)      # spatial K and V projections
                         + c * (3 * c)          # pooled-token fused q/k/v
                         + hwp * c * nhp        # per-head score reduce
                         + hwp * nhp * c        # probability expand
                         + c * dout)            # output projection
    transcendentals = n_pad * (hwp + 1) * nhp
    bytes_accessed = (int(x_tok.size) * 4 + n_pad * dout * 4
                      + (int(w3.size) + int(wc_t.size) + int(seg.size)
                         + int(segT.size)) * 2
                      + (int(pos_sp.size) + int(pos0.size) + int(b3.size)
                         + int(bc2.size) + int(nmask.size)) * 4)
    cost = pl.CostEstimate(flops=int(flops), transcendentals=int(transcendentals),
                           bytes_accessed=int(bytes_accessed))

    def build(single_buffer_invariants):
        inv_kw = ({"pipeline_mode": pl.Buffered(1)}
                  if single_buffer_invariants else {})

        def inv_spec(shape):
            return pl.BlockSpec(shape, lambda i, _r=len(shape): (0,) * _r, **inv_kw)

        return pl.pallas_call(
            kernel,
            out_shape=jax.ShapeDtypeStruct((n_pad, dout), x_nchw.dtype),
            grid=(n_pad // bt,),
            in_specs=[
                pl.BlockSpec((bt, hwp, c), lambda i: (i, 0, 0)),  # x tokens (batch tile)
                inv_spec((hwp, c)),        # pos[1:]
                inv_spec((1, c)),          # pos[0]
                inv_spec((hwp, nhp)),      # padded-row score mask
                inv_spec((c, 3 * c)),      # fused [Wq*scale | Wk | Wv]
                inv_spec((1, 3 * c)),      # fused biases
                inv_spec((c, dout)),       # Wc
                inv_spec((1, dout)),       # bc
                inv_spec((c, nhp)),        # seg
                inv_spec((nhp, c)),        # segT
            ],
            out_specs=pl.BlockSpec((bt, dout), lambda i: (i, 0)),  # lane-dense 2-D
            compiler_params=pltpu.CompilerParams(
                dimension_semantics=("parallel",),
                vmem_limit_bytes=64 * 1024 * 1024),
            cost_estimate=cost,
        )

    args = (x_tok, pos_sp, pos0, nmask, w3, b3, wc_t, bc2, seg, segT)
    try:
        out = build(True)(*args)
    except Exception:
        # Fallback for Pallas builds that reject single-buffered (Buffered(1))
        # invariant operands; identical kernel, default double-buffering.
        out = build(False)(*args)
    return out[:n]                                                   # (N, Dout)


def _reference(x_nchw, pos, wq, bq, wk, bk, wv, bv, wc, bc, num_heads):
    """Pure-JAX port of the PyTorch forward (weights in PyTorch (out, in) form)."""
    n, c, h, w = x_nchw.shape
    hd = c // num_heads
    x = jnp.transpose(x_nchw.reshape(n, c, h * w), (2, 0, 1))            # (HW, N, C)
    x = jnp.concatenate([x.mean(axis=0, keepdims=True), x], axis=0)      # (L, N, C)
    x = x + pos[:, None, :]
    L = x.shape[0]
    q = jnp.einsum("lnc,oc->lno", x, wq) + bq
    k = jnp.einsum("lnc,oc->lno", x, wk) + bk
    v = jnp.einsum("lnc,oc->lno", x, wv) + bv
    qh = q.reshape(L, n, num_heads, hd) * (hd ** -0.5)
    kh = k.reshape(L, n, num_heads, hd)
    vh = v.reshape(L, n, num_heads, hd)
    s = jnp.einsum("lnhd,mnhd->nhlm", qh, kh)
    p = jax.nn.softmax(s, axis=-1)
    o = jnp.einsum("nhlm,mnhd->lnhd", p, vh).reshape(L, n, c)
    o = jnp.einsum("lnc,oc->lno", o, wc) + bc
    return o[0]                                                          # (N, Dout)


if __name__ == "__main__":
    # Module config: spacial_dim=4, embed_dim=32, num_heads=4, output_dim=16.
    # batch=10 is deliberately not a multiple of the batch tile (exercises the
    # batch-padding + slice-off path); grid length is 2.
    spacial_dim, embed_dim, num_heads, output_dim = 4, 32, 4, 16
    batch = 10
    L = spacial_dim ** 2 + 1

    key = jax.random.PRNGKey(0)
    ks = jax.random.split(key, 10)
    x = jax.random.normal(ks[0], (batch, embed_dim, spacial_dim, spacial_dim),
                          dtype=jnp.float32)

    # deterministic parameter init (PyTorch-shaped: Linear weight is (out, in))
    pos = jax.random.normal(ks[1], (L, embed_dim), jnp.float32) / (embed_dim ** 0.5)
    wq = jax.random.normal(ks[2], (embed_dim, embed_dim), jnp.float32) * 0.1
    wk = jax.random.normal(ks[3], (embed_dim, embed_dim), jnp.float32) * 0.1
    wv = jax.random.normal(ks[4], (embed_dim, embed_dim), jnp.float32) * 0.1
    wc = jax.random.normal(ks[5], (output_dim, embed_dim), jnp.float32) * 0.1
    bq = jax.random.normal(ks[6], (embed_dim,), jnp.float32) * 0.1
    bk = jax.random.normal(ks[7], (embed_dim,), jnp.float32) * 0.1
    bv = jax.random.normal(ks[8], (embed_dim,), jnp.float32) * 0.1
    bc = jax.random.normal(ks[9], (output_dim,), jnp.float32) * 0.1

    out = attention_pool_2d(x, pos, wq, bq, wk, bk, wv, bv, wc, bc, num_heads)
    out = jax.block_until_ready(out)

    ref = _reference(x, pos, wq, bq, wk, bk, wv, bv, wc, bc, num_heads)
    ref = jax.block_until_ready(ref)

    assert out.shape == (batch, output_dim), out.shape
    # tolerance covers bf16 matmul operands + the approximate (EUP) reciprocal
    np.testing.assert_allclose(np.asarray(out), np.asarray(ref),
                               rtol=2e-2, atol=2e-2)
    print("KERNEL_OK")
</pallas_src>

<mosaic_0001>
module attributes {stable_mosaic.version = 11 : i64} {
  func.func @_attn_pool_kernel(%arg0: i32, %arg1: memref<8x16x32xf32, #tpu.memory_space<vmem>>, %arg2: memref<16x32xf32, #tpu.memory_space<vmem>>, %arg3: memref<1x32xf32, #tpu.memory_space<vmem>>, %arg4: memref<16x128xf32, #tpu.memory_space<vmem>>, %arg5: memref<32x96xbf16, #tpu.memory_space<vmem>>, %arg6: memref<1x96xf32, #tpu.memory_space<vmem>>, %arg7: memref<32x16xbf16, #tpu.memory_space<vmem>>, %arg8: memref<1x16xf32, #tpu.memory_space<vmem>>, %arg9: memref<32x128xbf16, #tpu.memory_space<vmem>>, %arg10: memref<128x32xbf16, #tpu.memory_space<vmem>>, %arg11: memref<8x16xf32, #tpu.memory_space<vmem>>) attributes {dimension_semantics = [#tpu.dimension_semantics<parallel>], iteration_bounds = array<i64: 2>, scalar_prefetch = 0 : i64, scratch_operands = 0 : i64, tpu.core_type = #tpu.core_type<tc>, window_params = [{transform_indices = @transform_0, window_bounds = array<i64: 8, 16, 32>}, {pipeline_mode = #tpu.pipeline_mode<synchronous>, transform_indices = @transform_1, window_bounds = array<i64: 16, 32>}, {pipeline_mode = #tpu.pipeline_mode<synchronous>, transform_indices = @transform_2, window_bounds = array<i64: 1, 32>}, {pipeline_mode = #tpu.pipeline_mode<synchronous>, transform_indices = @transform_3, window_bounds = array<i64: 16, 128>}, {pipeline_mode = #tpu.pipeline_mode<synchronous>, transform_indices = @transform_4, window_bounds = array<i64: 32, 96>}, {pipeline_mode = #tpu.pipeline_mode<synchronous>, transform_indices = @transform_5, window_bounds = array<i64: 1, 96>}, {pipeline_mode = #tpu.pipeline_mode<synchronous>, transform_indices = @transform_6, window_bounds = array<i64: 32, 16>}, {pipeline_mode = #tpu.pipeline_mode<synchronous>, transform_indices = @transform_7, window_bounds = array<i64: 1, 16>}, {pipeline_mode = #tpu.pipeline_mode<synchronous>, transform_indices = @transform_8, window_bounds = array<i64: 32, 128>}, {pipeline_mode = #tpu.pipeline_mode<synchronous>, transform_indices = @transform_9, window_bounds = array<i64: 128, 32>}, {transform_indices = @transform_10, window_bounds = array<i64: 8, 16>}]} {
    %c0 = arith.constant 0 : index
    %c0_0 = arith.constant 0 : index
    %c0_1 = arith.constant 0 : index
    %0 = vector.load %arg1[%c0, %c0_0, %c0_1] : memref<8x16x32xf32, #tpu.memory_space<vmem>>, vector<8x16x32xf32>
    %cst = arith.constant dense<0.000000e+00> : vector<8x32xf32>
    %1 = vector.multi_reduction <add>, %0, %cst [1] : vector<8x16x32xf32> to vector<8x32xf32>
    %cst_2 = arith.constant 6.250000e-02 : f32
    %2 = vector.broadcast %cst_2 : f32 to vector<8x32xf32>
    %3 = arith.mulf %1, %2 : vector<8x32xf32>
    %c0_3 = arith.constant 0 : index
    %c0_4 = arith.constant 0 : index
    %4 = vector.load %arg3[%c0_3, %c0_4] : memref<1x32xf32, #tpu.memory_space<vmem>>, vector<1x32xf32>
    %5 = vector.broadcast %4 : vector<1x32xf32> to vector<8x32xf32>
    %6 = arith.addf %3, %5 : vector<8x32xf32>
    %c0_5 = arith.constant 0 : index
    %c0_6 = arith.constant 0 : index
    %7 = vector.load %arg2[%c0_5, %c0_6] : memref<16x32xf32, #tpu.memory_space<vmem>>, vector<16x32xf32>
    %8 = vector.shape_cast %7 : vector<16x32xf32> to vector<1x16x32xf32>
    %9 = vector.broadcast %8 : vector<1x16x32xf32> to vector<8x16x32xf32>
    %10 = arith.addf %0, %9 : vector<8x16x32xf32>
    %11 = vector.shape_cast %10 : vector<8x16x32xf32> to vector<128x32xf32>
    %12 = arith.truncf %6 : vector<8x32xf32> to vector<8x32xbf16>
    %c0_7 = arith.constant 0 : index
    %c0_8 = arith.constant 0 : index
    %13 = vector.load %arg5[%c0_7, %c0_8] : memref<32x96xbf16, #tpu.memory_space<vmem>>, vector<32x96xbf16>
    %cst_9 = arith.constant dense<0.000000e+00> : vector<8x96xf32>
    %14 = tpu.matmul %12, %13, %cst_9 {dimension_numbers = #tpu.dot_dimension_numbers<[1], [0], [0], [1], [0, 0, 1, 1], [], []>} : vector<8x32xbf16>, vector<32x96xbf16>, vector<8x96xf32> -> vector<8x96xf32>
    %c0_10 = arith.constant 0 : index
    %c0_11 = arith.constant 0 : index
    %15 = vector.load %arg6[%c0_10, %c0_11] : memref<1x96xf32, #tpu.memory_space<vmem>>, vector<1x96xf32>
    %16 = vector.broadcast %15 : vector<1x96xf32> to vector<8x96xf32>
    %17 = arith.addf %14, %16 : vector<8x96xf32>
    %18 = vector.extract_strided_slice %17 {offsets = [0, 0], sizes = [8, 32], strides = [1, 1]} : vector<8x96xf32> to vector<8x32xf32>
    %19 = vector.extract_strided_slice %17 {offsets = [0, 32], sizes = [8, 32], strides = [1, 1]} : vector<8x96xf32> to vector<8x32xf32>
    %20 = vector.extract_strided_slice %17 {offsets = [0, 64], sizes = [8, 32], strides = [1, 1]} : vector<8x96xf32> to vector<8x32xf32>
    %21 = arith.truncf %11 : vector<128x32xf32> to vector<128x32xbf16>
    %c0_12 = arith.constant 0 : index
    %c32 = arith.constant 32 : index
    %22 = vector.load %arg5[%c0_12, %c32] : memref<32x96xbf16, #tpu.memory_space<vmem>>, vector<32x32xbf16>
    %cst_13 = arith.constant dense<0.000000e+00> : vector<128x32xf32>
    %23 = tpu.matmul %21, %22, %cst_13 {dimension_numbers = #tpu.dot_dimension_numbers<[1], [0], [0], [1], [0, 0, 1, 1], [], []>} : vector<128x32xbf16>, vector<32x32xbf16>, vector<128x32xf32> -> vector<128x32xf32>
    %c0_14 = arith.constant 0 : index
    %c32_15 = arith.constant 32 : index
    %24 = vector.load %arg6[%c0_14, %c32_15] : memref<1x96xf32, #tpu.memory_space<vmem>>, vector<1x32xf32>
    %25 = vector.broadcast %24 : vector<1x32xf32> to vector<128x32xf32>
    %26 = arith.addf %23, %25 : vector<128x32xf32>
    %27 = vector.shape_cast %26 : vector<128x32xf32> to vector<8x16x32xf32>
    %28 = vector.shape_cast %18 : vector<8x32xf32> to vector<8x1x32xf32>
    %29 = vector.broadcast %28 : vector<8x1x32xf32> to vector<8x16x32xf32>
    %30 = arith.mulf %27, %29 : vector<8x16x32xf32>
    %31 = vector.shape_cast %30 : vector<8x16x32xf32> to vector<128x32xf32>
    %32 = arith.truncf %31 : vector<128x32xf32> to vector<128x32xbf16>
    %c0_16 = arith.constant 0 : index
    %c0_17 = arith.constant 0 : index
    %33 = vector.load %arg9[%c0_16, %c0_17] : memref<32x128xbf16, #tpu.memory_space<vmem>>, vector<32x128xbf16>
    %cst_18 = arith.constant dense<0.000000e+00> : vector<128x128xf32>
    %34 = tpu.matmul %32, %33, %cst_18 {dimension_numbers = #tpu.dot_dimension_numbers<[1], [0], [0], [1], [0, 0, 1, 1], [], []>} : vector<128x32xbf16>, vector<32x128xbf16>, vector<128x128xf32> -> vector<128x128xf32>
    %35 = vector.shape_cast %34 : vector<128x128xf32> to vector<8x16x128xf32>
    %c0_19 = arith.constant 0 : index
    %c0_20 = arith.constant 0 : index
    %36 = vector.load %arg4[%c0_19, %c0_20] : memref<16x128xf32, #tpu.memory_space<vmem>>, vector<16x128xf32>
    %37 = vector.shape_cast %36 : vector<16x128xf32> to vector<1x16x128xf32>
    %38 = vector.broadcast %37 : vector<1x16x128xf32> to vector<8x16x128xf32>
    %39 = arith.addf %35, %38 : vector<8x16x128xf32>
    %40 = arith.mulf %19, %18 : vector<8x32xf32>
    %41 = arith.truncf %40 : vector<8x32xf32> to vector<8x32xbf16>
    %c0_21 = arith.constant 0 : index
    %c0_22 = arith.constant 0 : index
    %42 = vector.load %arg9[%c0_21, %c0_22] : memref<32x128xbf16, #tpu.memory_space<vmem>>, vector<32x128xbf16>
    %cst_23 = arith.constant dense<0.000000e+00> : vector<8x128xf32>
    %43 = tpu.matmul %41, %42, %cst_23 {dimension_numbers = #tpu.dot_dimension_numbers<[1], [0], [0], [1], [0, 0, 1, 1], [], []>} : vector<8x32xbf16>, vector<32x128xbf16>, vector<8x128xf32> -> vector<8x128xf32>
    %cst_24 = arith.constant dense<0xFF800000> : vector<8x128xf32>
    %44 = vector.multi_reduction <maximumf>, %39, %cst_24 [1] : vector<8x16x128xf32> to vector<8x128xf32>
    %45 = arith.maximumf %43, %44 : vector<8x128xf32>
    %46 = arith.subf %43, %45 : vector<8x128xf32>
    %47 = math.exp %46 : vector<8x128xf32>
    %48 = vector.shape_cast %45 : vector<8x128xf32> to vector<8x1x128xf32>
    %49 = vector.broadcast %48 : vector<8x1x128xf32> to vector<8x16x128xf32>
    %50 = arith.subf %39, %49 : vector<8x16x128xf32>
    %51 = math.exp %50 : vector<8x16x128xf32>
    %cst_25 = arith.constant dense<0.000000e+00> : vector<8x128xf32>
    %52 = vector.multi_reduction <add>, %51, %cst_25 [1] : vector<8x16x128xf32> to vector<8x128xf32>
    %53 = arith.addf %47, %52 : vector<8x128xf32>
    %54 = tpu.reciprocal %53 {approx = true} : vector<8x128xf32> -> vector<8x128xf32>
    %55 = arith.mulf %47, %54 : vector<8x128xf32>
    %56 = vector.shape_cast %54 : vector<8x128xf32> to vector<8x1x128xf32>
    %57 = vector.broadcast %56 : vector<8x1x128xf32> to vector<8x16x128xf32>
    %58 = arith.mulf %51, %57 : vector<8x16x128xf32>
    %59 = arith.truncf %55 : vector<8x128xf32> to vector<8x128xbf16>
    %c0_26 = arith.constant 0 : index
    %c0_27 = arith.constant 0 : index
    %60 = vector.load %arg10[%c0_26, %c0_27] : memref<128x32xbf16, #tpu.memory_space<vmem>>, vector<128x32xbf16>
    %cst_28 = arith.constant dense<0.000000e+00> : vector<8x32xf32>
    %61 = tpu.matmul %59, %60, %cst_28 {dimension_numbers = #tpu.dot_dimension_numbers<[1], [0], [0], [1], [0, 0, 1, 1], [], []>} : vector<8x128xbf16>, vector<128x32xbf16>, vector<8x32xf32> -> vector<8x32xf32>
    %62 = vector.shape_cast %58 : vector<8x16x128xf32> to vector<128x128xf32>
    %63 = arith.truncf %62 : vector<128x128xf32> to vector<128x128xbf16>
    %c0_29 = arith.constant 0 : index
    %c0_30 = arith.constant 0 : index
    %64 = vector.load %arg10[%c0_29, %c0_30] : memref<128x32xbf16, #tpu.memory_space<vmem>>, vector<128x32xbf16>
    %cst_31 = arith.constant dense<0.000000e+00> : vector<128x32xf32>
    %65 = tpu.matmul %63, %64, %cst_31 {dimension_numbers = #tpu.dot_dimension_numbers<[1], [0], [0], [1], [0, 0, 1, 1], [], []>} : vector<128x128xbf16>, vector<128x32xbf16>, vector<128x32xf32> -> vector<128x32xf32>
    %c0_32 = arith.constant 0 : index
    %c64 = arith.constant 64 : index
    %66 = vector.load %arg5[%c0_32, %c64] : memref<32x96xbf16, #tpu.memory_space<vmem>>, vector<32x32xbf16>
    %cst_33 = arith.constant dense<0.000000e+00> : vector<128x32xf32>
    %67 = tpu.matmul %21, %66, %cst_33 {dimension_numbers = #tpu.dot_dimension_numbers<[1], [0], [0], [1], [0, 0, 1, 1], [], []>} : vector<128x32xbf16>, vector<32x32xbf16>, vector<128x32xf32> -> vector<128x32xf32>
    %c0_34 = arith.constant 0 : index
    %c64_35 = arith.constant 64 : index
    %68 = vector.load %arg6[%c0_34, %c64_35] : memref<1x96xf32, #tpu.memory_space<vmem>>, vector<1x32xf32>
    %69 = vector.broadcast %68 : vector<1x32xf32> to vector<128x32xf32>
    %70 = arith.addf %67, %69 : vector<128x32xf32>
    %71 = arith.mulf %61, %20 : vector<8x32xf32>
    %72 = arith.mulf %65, %70 : vector<128x32xf32>
    %73 = vector.shape_cast %72 : vector<128x32xf32> to vector<8x16x32xf32>
    %cst_36 = arith.constant dense<0.000000e+00> : vector<8x32xf32>
    %74 = vector.multi_reduction <add>, %73, %cst_36 [1] : vector<8x16x32xf32> to vector<8x32xf32>
    %75 = arith.addf %71, %74 : vector<8x32xf32>
    %76 = arith.truncf %75 : vector<8x32xf32> to vector<8x32xbf16>
    %c0_37 = arith.constant 0 : index
    %c0_38 = arith.constant 0 : index
    %77 = vector.load %arg7[%c0_37, %c0_38] : memref<32x16xbf16, #tpu.memory_space<vmem>>, vector<32x16xbf16>
    %cst_39 = arith.constant dense<0.000000e+00> : vector<8x16xf32>
    %78 = tpu.matmul %76, %77, %cst_39 {dimension_numbers = #tpu.dot_dimension_numbers<[1], [0], [0], [1], [0, 0, 1, 1], [], []>} : vector<8x32xbf16>, vector<32x16xbf16>, vector<8x16xf32> -> vector<8x16xf32>
    %c0_40 = arith.constant 0 : index
    %c0_41 = arith.constant 0 : index
    %79 = vector.load %arg8[%c0_40, %c0_41] : memref<1x16xf32, #tpu.memory_space<vmem>>, vector<1x16xf32>
    %80 = vector.broadcast %79 : vector<1x16xf32> to vector<8x16xf32>
    %81 = arith.addf %78, %80 : vector<8x16xf32>
    %c0_42 = arith.constant 0 : index
    %c0_43 = arith.constant 0 : index
    %82 = vector.load %arg11[%c0_42, %c0_43] : memref<8x16xf32, #tpu.memory_space<vmem>>, vector<8x16xf32>
    tpu.vector_store %arg11[%c0_42, %c0_43], %81 {strides = array<i32>} : memref<8x16xf32, #tpu.memory_space<vmem>>, vector<8x16xf32>,
    return
  }
  func.func @transform_0(%arg0: i32) -> (i32, i32, i32) {
    %c0_i32 = arith.constant 0 : i32
    %c0_i32_0 = arith.constant 0 : i32
    %c0_i32_1 = arith.constant 0 : i32
    return %arg0, %c0_i32, %c0_i32_0 : i32, i32, i32
  }
  func.func @transform_1(%arg0: i32) -> (i32, i32) {
    %c0_i32 = arith.constant 0 : i32
    %c0_i32_0 = arith.constant 0 : i32
    %c0_i32_1 = arith.constant 0 : i32
    return %c0_i32, %c0_i32_0 : i32, i32
  }
  func.func @transform_2(%arg0: i32) -> (i32, i32) {
    %c0_i32 = arith.constant 0 : i32
    %c0_i32_0 = arith.constant 0 : i32
    %c0_i32_1 = arith.constant 0 : i32
    return %c0_i32, %c0_i32_0 : i32, i32
  }
  func.func @transform_3(%arg0: i32) -> (i32, i32) {
    %c0_i32 = arith.constant 0 : i32
    %c0_i32_0 = arith.constant 0 : i32
    %c0_i32_1 = arith.constant 0 : i32
    return %c0_i32, %c0_i32_0 : i32, i32
  }
  func.func @transform_4(%arg0: i32) -> (i32, i32) {
    %c0_i32 = arith.constant 0 : i32
    %c0_i32_0 = arith.constant 0 : i32
    %c0_i32_1 = arith.constant 0 : i32
    return %c0_i32, %c0_i32_0 : i32, i32
  }
  func.func @transform_5(%arg0: i32) -> (i32, i32) {
    %c0_i32 = arith.constant 0 : i32
    %c0_i32_0 = arith.constant 0 : i32
    %c0_i32_1 = arith.constant 0 : i32
    return %c0_i32, %c0_i32_0 : i32, i32
  }
  func.func @transform_6(%arg0: i32) -> (i32, i32) {
    %c0_i32 = arith.constant 0 : i32
    %c0_i32_0 = arith.constant 0 : i32
    %c0_i32_1 = arith.constant 0 : i32
    return %c0_i32, %c0_i32_0 : i32, i32
  }
  func.func @transform_7(%arg0: i32) -> (i32, i32) {
    %c0_i32 = arith.constant 0 : i32
    %c0_i32_0 = arith.constant 0 : i32
    %c0_i32_1 = arith.constant 0 : i32
    return %c0_i32, %c0_i32_0 : i32, i32
  }
  func.func @transform_8(%arg0: i32) -> (i32, i32) {
    %c0_i32 = arith.constant 0 : i32
    %c0_i32_0 = arith.constant 0 : i32
    %c0_i32_1 = arith.constant 0 : i32
    return %c0_i32, %c0_i32_0 : i32, i32
  }
  func.func @transform_9(%arg0: i32) -> (i32, i32) {
    %c0_i32 = arith.constant 0 : i32
    %c0_i32_0 = arith.constant 0 : i32
    %c0_i32_1 = arith.constant 0 : i32
    return %c0_i32, %c0_i32_0 : i32, i32
  }
  func.func @transform_10(%arg0: i32) -> (i32, i32) {
    %c0_i32 = arith.constant 0 : i32
    %c0_i32_0 = arith.constant 0 : i32
    return %arg0, %c0_i32 : i32, i32
  }
}

module attributes {stable_mosaic.version = 11 : i64} {
  func.func @_attn_pool_kernel(%arg0: i32, %arg1: memref<8x16x32xf32, #tpu.memory_space<vmem>>, %arg2: memref<16x32xf32, #tpu.memory_space<vmem>>, %arg3: memref<1x32xf32, #tpu.memory_space<vmem>>, %arg4: memref<16x128xf32, #tpu.memory_space<vmem>>, %arg5: memref<32x96xbf16, #tpu.memory_space<vmem>>, %arg6: memref<1x96xf32, #tpu.memory_space<vmem>>, %arg7: memref<32x16xbf16, #tpu.memory_space<vmem>>, %arg8: memref<1x16xf32, #tpu.memory_space<vmem>>, %arg9: memref<32x128xbf16, #tpu.memory_space<vmem>>, %arg10: memref<128x32xbf16, #tpu.memory_space<vmem>>, %arg11: memref<8x16xf32, #tpu.memory_space<vmem>>) attributes {dimension_semantics = [#tpu.dimension_semantics<parallel>], iteration_bounds = array<i64: 2>, scalar_prefetch = 0 : i64, scratch_operands = 0 : i64, tpu.core_type = #tpu.core_type<tc>, window_params = [{transform_indices = @transform_0, window_bounds = array<i64: 8, 16, 32>}, {pipeline_mode = #tpu.pipeline_mode<synchronous>, transform_indices = @transform_1, window_bounds = array<i64: 16, 32>}, {pipeline_mode = #tpu.pipeline_mode<synchronous>, transform_indices = @transform_2, window_bounds = array<i64: 1, 32>}, {pipeline_mode = #tpu.pipeline_mode<synchronous>, transform_indices = @transform_3, window_bounds = array<i64: 16, 128>}, {pipeline_mode = #tpu.pipeline_mode<synchronous>, transform_indices = @transform_4, window_bounds = array<i64: 32, 96>}, {pipeline_mode = #tpu.pipeline_mode<synchronous>, transform_indices = @transform_5, window_bounds = array<i64: 1, 96>}, {pipeline_mode = #tpu.pipeline_mode<synchronous>, transform_indices = @transform_6, window_bounds = array<i64: 32, 16>}, {pipeline_mode = #tpu.pipeline_mode<synchronous>, transform_indices = @transform_7, window_bounds = array<i64: 1, 16>}, {pipeline_mode = #tpu.pipeline_mode<synchronous>, transform_indices = @transform_8, window_bounds = array<i64: 32, 128>}, {pipeline_mode = #tpu.pipeline_mode<synchronous>, transform_indices = @transform_9, window_bounds = array<i64: 128, 32>}, {transform_indices = @transform_10, window_bounds = array<i64: 8, 16>}]} {
    %c0 = arith.constant 0 : index
    %c0_0 = arith.constant 0 : index
    %c0_1 = arith.constant 0 : index
    %0 = vector.load %arg1[%c0, %c0_0, %c0_1] : memref<8x16x32xf32, #tpu.memory_space<vmem>>, vector<8x16x32xf32>
    %cst = arith.constant dense<0.000000e+00> : vector<8x32xf32>
    %1 = vector.multi_reduction <add>, %0, %cst [1] : vector<8x16x32xf32> to vector<8x32xf32>
    %cst_2 = arith.constant 6.250000e-02 : f32
    %2 = vector.broadcast %cst_2 : f32 to vector<8x32xf32>
    %3 = arith.mulf %1, %2 : vector<8x32xf32>
    %c0_3 = arith.constant 0 : index
    %c0_4 = arith.constant 0 : index
    %4 = vector.load %arg3[%c0_3, %c0_4] : memref<1x32xf32, #tpu.memory_space<vmem>>, vector<1x32xf32>
    %5 = vector.broadcast %4 : vector<1x32xf32> to vector<8x32xf32>
    %6 = arith.addf %3, %5 : vector<8x32xf32>
    %c0_5 = arith.constant 0 : index
    %c0_6 = arith.constant 0 : index
    %7 = vector.load %arg2[%c0_5, %c0_6] : memref<16x32xf32, #tpu.memory_space<vmem>>, vector<16x32xf32>
    %8 = vector.shape_cast %7 : vector<16x32xf32> to vector<1x16x32xf32>
    %9 = vector.broadcast %8 : vector<1x16x32xf32> to vector<8x16x32xf32>
    %10 = arith.addf %0, %9 : vector<8x16x32xf32>
    %11 = vector.shape_cast %10 : vector<8x16x32xf32> to vector<128x32xf32>
    %12 = arith.truncf %6 : vector<8x32xf32> to vector<8x32xbf16>
    %c0_7 = arith.constant 0 : index
    %c0_8 = arith.constant 0 : index
    %13 = vector.load %arg5[%c0_7, %c0_8] : memref<32x96xbf16, #tpu.memory_space<vmem>>, vector<32x96xbf16>
    %cst_9 = arith.constant dense<0.000000e+00> : vector<8x96xf32>
    %14 = tpu.matmul %12, %13, %cst_9 {dimension_numbers = #tpu.dot_dimension_numbers<[1], [0], [0], [1], [0, 0, 1, 1], [], []>} : vector<8x32xbf16>, vector<32x96xbf16>, vector<8x96xf32> -> vector<8x96xf32>
    %c0_10 = arith.constant 0 : index
    %c0_11 = arith.constant 0 : index
    %15 = vector.load %arg6[%c0_10, %c0_11] : memref<1x96xf32, #tpu.memory_space<vmem>>, vector<1x96xf32>
    %16 = vector.broadcast %15 : vector<1x96xf32> to vector<8x96xf32>
    %17 = arith.addf %14, %16 : vector<8x96xf32>
    %18 = vector.extract_strided_slice %17 {offsets = [0, 0], sizes = [8, 32], strides = [1, 1]} : vector<8x96xf32> to vector<8x32xf32>
    %19 = vector.extract_strided_slice %17 {offsets = [0, 32], sizes = [8, 32], strides = [1, 1]} : vector<8x96xf32> to vector<8x32xf32>
    %20 = vector.extract_strided_slice %17 {offsets = [0, 64], sizes = [8, 32], strides = [1, 1]} : vector<8x96xf32> to vector<8x32xf32>
    %21 = arith.truncf %11 : vector<128x32xf32> to vector<128x32xbf16>
    %c0_12 = arith.constant 0 : index
    %c32 = arith.constant 32 : index
    %22 = vector.load %arg5[%c0_12, %c32] : memref<32x96xbf16, #tpu.memory_space<vmem>>, vector<32x32xbf16>
    %cst_13 = arith.constant dense<0.000000e+00> : vector<128x32xf32>
    %23 = tpu.matmul %21, %22, %cst_13 {dimension_numbers = #tpu.dot_dimension_numbers<[1], [0], [0], [1], [0, 0, 1, 1], [], []>} : vector<128x32xbf16>, vector<32x32xbf16>, vector<128x32xf32> -> vector<128x32xf32>
    %c0_14 = arith.constant 0 : index
    %c32_15 = arith.constant 32 : index
    %24 = vector.load %arg6[%c0_14, %c32_15] : memref<1x96xf32, #tpu.memory_space<vmem>>, vector<1x32xf32>
    %25 = vector.broadcast %24 : vector<1x32xf32> to vector<128x32xf32>
    %26 = arith.addf %23, %25 : vector<128x32xf32>
    %27 = vector.shape_cast %26 : vector<128x32xf32> to vector<8x16x32xf32>
    %28 = vector.shape_cast %18 : vector<8x32xf32> to vector<8x1x32xf32>
    %29 = vector.broadcast %28 : vector<8x1x32xf32> to vector<8x16x32xf32>
    %30 = arith.mulf %27, %29 : vector<8x16x32xf32>
    %31 = vector.shape_cast %30 : vector<8x16x32xf32> to vector<128x32xf32>
    %32 = arith.truncf %31 : vector<128x32xf32> to vector<128x32xbf16>
    %c0_16 = arith.constant 0 : index
    %c0_17 = arith.constant 0 : index
    %33 = vector.load %arg9[%c0_16, %c0_17] : memref<32x128xbf16, #tpu.memory_space<vmem>>, vector<32x128xbf16>
    %cst_18 = arith.constant dense<0.000000e+00> : vector<128x128xf32>
    %34 = tpu.matmul %32, %33, %cst_18 {dimension_numbers = #tpu.dot_dimension_numbers<[1], [0], [0], [1], [0, 0, 1, 1], [], []>} : vector<128x32xbf16>, vector<32x128xbf16>, vector<128x128xf32> -> vector<128x128xf32>
    %35 = vector.shape_cast %34 : vector<128x128xf32> to vector<8x16x128xf32>
    %c0_19 = arith.constant 0 : index
    %c0_20 = arith.constant 0 : index
    %36 = vector.load %arg4[%c0_19, %c0_20] : memref<16x128xf32, #tpu.memory_space<vmem>>, vector<16x128xf32>
    %37 = vector.shape_cast %36 : vector<16x128xf32> to vector<1x16x128xf32>
    %38 = vector.broadcast %37 : vector<1x16x128xf32> to vector<8x16x128xf32>
    %39 = arith.addf %35, %38 : vector<8x16x128xf32>
    %40 = arith.mulf %19, %18 : vector<8x32xf32>
    %41 = arith.truncf %40 : vector<8x32xf32> to vector<8x32xbf16>
    %c0_21 = arith.constant 0 : index
    %c0_22 = arith.constant 0 : index
    %42 = vector.load %arg9[%c0_21, %c0_22] : memref<32x128xbf16, #tpu.memory_space<vmem>>, vector<32x128xbf16>
    %cst_23 = arith.constant dense<0.000000e+00> : vector<8x128xf32>
    %43 = tpu.matmul %41, %42, %cst_23 {dimension_numbers = #tpu.dot_dimension_numbers<[1], [0], [0], [1], [0, 0, 1, 1], [], []>} : vector<8x32xbf16>, vector<32x128xbf16>, vector<8x128xf32> -> vector<8x128xf32>
    %cst_24 = arith.constant dense<0xFF800000> : vector<8x128xf32>
    %44 = vector.multi_reduction <maximumf>, %39, %cst_24 [1] : vector<8x16x128xf32> to vector<8x128xf32>
    %45 = arith.maximumf %43, %44 : vector<8x128xf32>
    %46 = arith.subf %43, %45 : vector<8x128xf32>
    %47 = math.exp %46 : vector<8x128xf32>
    %48 = vector.shape_cast %45 : vector<8x128xf32> to vector<8x1x128xf32>
    %49 = vector.broadcast %48 : vector<8x1x128xf32> to vector<8x16x128xf32>
    %50 = arith.subf %39, %49 : vector<8x16x128xf32>
    %51 = math.exp %50 : vector<8x16x128xf32>
    %cst_25 = arith.constant dense<0.000000e+00> : vector<8x128xf32>
    %52 = vector.multi_reduction <add>, %51, %cst_25 [1] : vector<8x16x128xf32> to vector<8x128xf32>
    %53 = arith.addf %47, %52 : vector<8x128xf32>
    %54 = tpu.reciprocal %53 {approx = true} : vector<8x128xf32> -> vector<8x128xf32>
    %55 = arith.mulf %47, %54 : vector<8x128xf32>
    %56 = vector.shape_cast %54 : vector<8x128xf32> to vector<8x1x128xf32>
    %57 = vector.broadcast %56 : vector<8x1x128xf32> to vector<8x16x128xf32>
    %58 = arith.mulf %51, %57 : vector<8x16x128xf32>
    %59 = arith.truncf %55 : vector<8x128xf32> to vector<8x128xbf16>
    %c0_26 = arith.constant 0 : index
    %c0_27 = arith.constant 0 : index
    %60 = vector.load %arg10[%c0_26, %c0_27] : memref<128x32xbf16, #tpu.memory_space<vmem>>, vector<128x32xbf16>
    %cst_28 = arith.constant dense<0.000000e+00> : vector<8x32xf32>
    %61 = tpu.matmul %59, %60, %cst_28 {dimension_numbers = #tpu.dot_dimension_numbers<[1], [0], [0], [1], [0, 0, 1, 1], [], []>} : vector<8x128xbf16>, vector<128x32xbf16>, vector<8x32xf32> -> vector<8x32xf32>
    %62 = vector.shape_cast %58 : vector<8x16x128xf32> to vector<128x128xf32>
    %63 = arith.truncf %62 : vector<128x128xf32> to vector<128x128xbf16>
    %c0_29 = arith.constant 0 : index
    %c0_30 = arith.constant 0 : index
    %64 = vector.load %arg10[%c0_29, %c0_30] : memref<128x32xbf16, #tpu.memory_space<vmem>>, vector<128x32xbf16>
    %cst_31 = arith.constant dense<0.000000e+00> : vector<128x32xf32>
    %65 = tpu.matmul %63, %64, %cst_31 {dimension_numbers = #tpu.dot_dimension_numbers<[1], [0], [0], [1], [0, 0, 1, 1], [], []>} : vector<128x128xbf16>, vector<128x32xbf16>, vector<128x32xf32> -> vector<128x32xf32>
    %c0_32 = arith.constant 0 : index
    %c64 = arith.constant 64 : index
    %66 = vector.load %arg5[%c0_32, %c64] : memref<32x96xbf16, #tpu.memory_space<vmem>>, vector<32x32xbf16>
    %cst_33 = arith.constant dense<0.000000e+00> : vector<128x32xf32>
    %67 = tpu.matmul %21, %66, %cst_33 {dimension_numbers = #tpu.dot_dimension_numbers<[1], [0], [0], [1], [0, 0, 1, 1], [], []>} : vector<128x32xbf16>, vector<32x32xbf16>, vector<128x32xf32> -> vector<128x32xf32>
    %c0_34 = arith.constant 0 : index
    %c64_35 = arith.constant 64 : index
    %68 = vector.load %arg6[%c0_34, %c64_35] : memref<1x96xf32, #tpu.memory_space<vmem>>, vector<1x32xf32>
    %69 = vector.broadcast %68 : vector<1x32xf32> to vector<128x32xf32>
    %70 = arith.addf %67, %69 : vector<128x32xf32>
    %71 = arith.mulf %61, %20 : vector<8x32xf32>
    %72 = arith.mulf %65, %70 : vector<128x32xf32>
    %73 = vector.shape_cast %72 : vector<128x32xf32> to vector<8x16x32xf32>
    %cst_36 = arith.constant dense<0.000000e+00> : vector<8x32xf32>
    %74 = vector.multi_reduction <add>, %73, %cst_36 [1] : vector<8x16x32xf32> to vector<8x32xf32>
    %75 = arith.addf %71, %74 : vector<8x32xf32>
    %76 = arith.truncf %75 : vector<8x32xf32> to vector<8x32xbf16>
    %c0_37 = arith.constant 0 : index
    %c0_38 = arith.constant 0 : index
    %77 = vector.load %arg7[%c0_37, %c0_38] : memref<32x16xbf16, #tpu.memory_space<vmem>>, vector<32x16xbf16>
    %cst_39 = arith.constant dense<0.000000e+00> : vector<8x16xf32>
    %78 = tpu.matmul %76, %77, %cst_39 {dimension_numbers = #tpu.dot_dimension_numbers<[1], [0], [0], [1], [0, 0, 1, 1], [], []>} : vector<8x32xbf16>, vector<32x16xbf16>, vector<8x16xf32> -> vector<8x16xf32>
    %c0_40 = arith.constant 0 : index
    %c0_41 = arith.constant 0 : index
    %79 = vector.load %arg8[%c0_40, %c0_41] : memref<1x16xf32, #tpu.memory_space<vmem>>, vector<1x16xf32>
    %80 = vector.broadcast %79 : vector<1x16xf32> to vector<8x16xf32>
    %81 = arith.addf %78, %80 : vector<8x16xf32>
    %c0_42 = arith.constant 0 : index
    %c0_43 = arith.constant 0 : index
    %82 = vector.load %arg11[%c0_42, %c0_43] : memref<8x16xf32, #tpu.memory_space<vmem>>, vector<8x16xf32>
    tpu.vector_store %arg11[%c0_42, %c0_43], %81 {strides = array<i32>} : memref<8x16xf32, #tpu.memory_space<vmem>>, vector<8x16xf32>,
    return
  }
  func.func @transform_0(%arg0: i32) -> (i32, i32, i32) {
    %c0_i32 = arith.constant 0 : i32
    %c0_i32_0 = arith.constant 0 : i32
    %c0_i32_1 = arith.constant 0 : i32
    return %arg0, %c0_i32, %c0_i32_0 : i32, i32, i32
  }
  func.func @transform_1(%arg0: i32) -> (i32, i32) {
    %c0_i32 = arith.constant 0 : i32
    %c0_i32_0 = arith.constant 0 : i32
    %c0_i32_1 = arith.constant 0 : i32
    return %c0_i32, %c0_i32_0 : i32, i32
  }
  func.func @transform_2(%arg0: i32) -> (i32, i32) {
    %c0_i32 = arith.constant 0 : i32
    %c0_i32_0 = arith.constant 0 : i32
    %c0_i32_1 = arith.constant 0 : i32
    return %c0_i32, %c0_i32_0 : i32, i32
  }
  func.func @transform_3(%arg0: i32) -> (i32, i32) {
    %c0_i32 = arith.constant 0 : i32
    %c0_i32_0 = arith.constant 0 : i32
    %c0_i32_1 = arith.constant 0 : i32
    return %c0_i32, %c0_i32_0 : i32, i32
  }
  func.func @transform_4(%arg0: i32) -> (i32, i32) {
    %c0_i32 = arith.constant 0 : i32
    %c0_i32_0 = arith.constant 0 : i32
    %c0_i32_1 = arith.constant 0 : i32
    return %c0_i32, %c0_i32_0 : i32, i32
  }
  func.func @transform_5(%arg0: i32) -> (i32, i32) {
    %c0_i32 = arith.constant 0 : i32
    %c0_i32_0 = arith.constant 0 : i32
    %c0_i32_1 = arith.constant 0 : i32
    return %c0_i32, %c0_i32_0 : i32, i32
  }
  func.func @transform_6(%arg0: i32) -> (i32, i32) {
    %c0_i32 = arith.constant 0 : i32
    %c0_i32_0 = arith.constant 0 : i32
    %c0_i32_1 = arith.constant 0 : i32
    return %c0_i32, %c0_i32_0 : i32, i32
  }
  func.func @transform_7(%arg0: i32) -> (i32, i32) {
    %c0_i32 = arith.constant 0 : i32
    %c0_i32_0 = arith.constant 0 : i32
    %c0_i32_1 = arith.constant 0 : i32
    return %c0_i32, %c0_i32_0 : i32, i32
  }
  func.func @transform_8(%arg0: i32) -> (i32, i32) {
    %c0_i32 = arith.constant 0 : i32
    %c0_i32_0 = arith.constant 0 : i32
    %c0_i32_1 = arith.constant 0 : i32
    return %c0_i32, %c0_i32_0 : i32, i32
  }
  func.func @transform_9(%arg0: i32) -> (i32, i32) {
    %c0_i32 = arith.constant 0 : i32
    %c0_i32_0 = arith.constant 0 : i32
    %c0_i32_1 = arith.constant 0 : i32
    return %c0_i32, %c0_i32_0 : i32, i32
  }
  func.func @transform_10(%arg0: i32) -> (i32, i32) {
    %c0_i32 = arith.constant 0 : i32
    %c0_i32_0 = arith.constant 0 : i32
    return %arg0, %c0_i32 : i32, i32
  }
}

</mosaic_0001>

<llo_original>
// kernel: tpu_custom_call.1
$region0: #{tpu_custom_call.1}
  #allocation0 [shape = 'u32[]', space=smem, size = 0x4, offset = 0x4, fixed_abs, tag = 'smem constant byte address 0x4 - core index']
  #allocation1 [shape = 'u32[144,128]{1,0:T(1,128)}', space=vmem, size = 0x12000, scoped, tag = 'internal scratch']
  %s0 = inlined_call_operand.hbm [shape: f32[16,16,32], index: 0, kind: input, shape index: {}]
  %s1 = inlined_call_operand.hbm [shape: f32[16,32], index: 1, kind: input, shape index: {}]
  %s2 = inlined_call_operand.hbm [shape: f32[1,32], index: 2, kind: input, shape index: {}]
  %s3 = inlined_call_operand.hbm [shape: f32[16,128], index: 3, kind: input, shape index: {}]
  %s4 = inlined_call_operand.hbm [shape: bf16[32,96], index: 4, kind: input, shape index: {}]
  %s5 = inlined_call_operand.hbm [shape: f32[1,96], index: 5, kind: input, shape index: {}]
  %s6 = inlined_call_operand.hbm [shape: bf16[32,16], index: 6, kind: input, shape index: {}]
  %s7 = inlined_call_operand.hbm [shape: f32[1,16], index: 7, kind: input, shape index: {}]
  %s8 = inlined_call_operand.hbm [shape: bf16[32,128], index: 8, kind: input, shape index: {}]
  %s9 = inlined_call_operand.hbm [shape: bf16[128,32], index: 9, kind: input, shape index: {}]
  %s10 = inlined_call_operand.hbm [shape: f32[16,16], index: 10, kind: output, shape index: {}]
  %s11 = sld [smem:[#allocation0]]
  $region113: #{tpu_custom_call.1} parent=0
    _
  %s13 = ssub.s32 1, %s11
  %s14 = scalar_select 0, %s13, %s11
  $region1: #{tpu_custom_call.1} parent=0
    #allocation2 [shape = 'u8[131072]{0}', space=vmem, size = 0x20000, scoped, tag = 'input window, operand 0']
    #allocation3 [shape = 's32[2]{0}', space=sflag, size = 0x8, scoped, tag = 'scoped memory for tpu_custom_call.1']
    #allocation4 [shape = 's32[2]{0}', space=sflag, size = 0x8, scoped, tag = 'scoped memory for tpu_custom_call.1']
    #allocation5 [shape = 'u8[8192]{0}', space=vmem, size = 0x2000, scoped, tag = 'input window, operand 1, single buffered']
    #allocation6 [shape = 's32[1]{0}', space=sflag, size = 0x4, scoped, tag = 'scoped memory for tpu_custom_call.1']
    #allocation7 [shape = 'u8[512]{0}', space=vmem, size = 0x400, scoped, tag = 'input window, operand 2, single buffered']
    #allocation8 [shape = 'u8[8192]{0}', space=vmem, size = 0x2000, scoped, tag = 'input window, operand 3, single buffered']
    #allocation9 [shape = 's32[1]{0}', space=sflag, size = 0x4, scoped, tag = 'scoped memory for tpu_custom_call.1']
    #allocation10 [shape = 'u8[8192]{0}', space=vmem, size = 0x2000, scoped, tag = 'input window, operand 4, single buffered']
    #allocation11 [shape = 'u8[512]{0}', space=vmem, size = 0x400, scoped, tag = 'input window, operand 5, single buffered']
    #allocation12 [shape = 's32[1]{0}', space=sflag, size = 0x4, scoped, tag = 'scoped memory for tpu_custom_call.1']
    #allocation13 [shape = 'u8[8192]{0}', space=vmem, size = 0x2000, scoped, tag = 'input window, operand 6, single buffered']
    #allocation14 [shape = 'u8[512]{0}', space=vmem, size = 0x400, scoped, tag = 'input window, operand 7, single buffered']
    #allocation15 [shape = 's32[1]{0}', space=sflag, size = 0x4, scoped, tag = 'scoped memory for tpu_custom_call.1']
    #allocation16 [shape = 'u8[8192]{0}', space=vmem, size = 0x2000, scoped, tag = 'input window, operand 8, single buffered']
    #allocation17 [shape = 'u8[32768]{0}', space=vmem, size = 0x8000, scoped, tag = 'input window, operand 9, single buffered']
    #allocation18 [shape = 's32[1]{0}', space=sflag, size = 0x4, scoped, tag = 'scoped memory for tpu_custom_call.1']
    #allocation19 [shape = 'u8[8192]{0}', space=vmem, size = 0x2000, scoped, tag = 'output window, operand 0']
    %15 = vsyncpa [#allocation3], 0
    %s16 = scalar_lea.sflag [#allocation3], 1
    %17 = vsyncpa %s16, 0
    %18 = vsyncpa [#allocation6], 0
    %19 = vsyncpa [#allocation9], 0
    %20 = vsyncpa [#allocation12], 0
    %21 = vsyncpa [#allocation15], 0
    %22 = vsyncpa [#allocation18], 0
    %23 = vsyncpa [#allocation4], 0
    %s24 = scalar_lea.sflag [#allocation4], 1
    %25 = vsyncpa %s24, 0
    loop: start=0, step=1, limit=4
    $region2: #{tpu_custom_call.1} parent=1 // loop_pre_header
      _
    $region3: #{tpu_custom_call.1} parent=1 // loop_header
      %s27 = sphi 0, %s31
      %p28 = scmp.ge.s32.totalorder %s27, 4
      %s37 = sphi 0, %s39
      %s40 = sphi 0, %s37
      %s41 = sphi 0, %s40
      %s57 = sphi 0, %s41
      %s61 = sphi 0, %s61
      %s63 = sphi 0, %s61
      %s64 = sphi 0, %s63
      %s78 = sphi 0, %s64
      %s82 = sphi 0, %s82
      %s84 = sphi 0, %s82
      %s85 = sphi 0, %s84
      %s99 = sphi 0, %s85
      %s103 = sphi 0, %s103
      %s105 = sphi 0, %s103
      %s106 = sphi 0, %s105
      %s120 = sphi 0, %s106
      %s124 = sphi 0, %s124
      %s126 = sphi 0, %s124
      %s127 = sphi 0, %s126
      %s141 = sphi 0, %s127
      %s145 = sphi 0, %s145
      %s147 = sphi 0, %s145
      %s148 = sphi 0, %s147
      %s162 = sphi 0, %s148
      %s166 = sphi 0, %s166
      %s168 = sphi 0, %s166
      %s169 = sphi 0, %s168
      %s183 = sphi 0, %s169
      %s187 = sphi 0, %s187
      %s189 = sphi 0, %s187
      %s190 = sphi 0, %s189
      %s204 = sphi 0, %s190
      %s208 = sphi 0, %s208
      %s210 = sphi 0, %s208
      %s211 = sphi 0, %s210
      %s225 = sphi 0, %s211
      %s229 = sphi 0, %s229
      %s231 = sphi 0, %s229
      %s232 = sphi 0, %s231
      %s246 = sphi 0, %s232
      %s252 = sphi 0, %s254
      %s255 = sphi 0, %s252
      %s256 = sphi 0, %s255
      %s272 = sphi 0, %s256
    $region4: #{tpu_custom_call.1} parent=1 // loop_header_branch
      %30 = sbr.rel (%p28) target = $region8
    $region5: #{tpu_custom_call.1} parent=1 // loop_body
      %s32 = ssub.s32 %s27, 1
      %s33 = ssub.s32 %s27, 2
      %s34 = sadd.s32 %s27, 1
      %s35 = ssub.s32 %s27, %s34
      %p36 = scmp.eq.s32.totalorder %s35, 0
      %s38 = sadd.s32 %s37, 1
      %s39 = scalar_select %p36, %s37, %s38
      %p42 = pneg %p36
      %p43 = scmp.eq.s32.totalorder %s27, 1
      %p44 = por %p42, %p43
      %p45 = scmp.ne.s32.totalorder %s37, %s40
      %p46 = scmp.eq.s32.totalorder %s27, 0
      %p47 = por %p45, %p46
      %p48 = scmp.ne.s32.totalorder %s37, %s40
      %p49 = scmp.eq.s32.totalorder %s32, 1
      %p50 = por %p48, %p49
      %p51 = scmp.ne.s32.totalorder %s40, %s41
      %p52 = scmp.eq.s32.totalorder %s32, 0
      %p53 = por %p51, %p52
      %p54 = scmp.ne.s32.totalorder %s40, %s41
      %p55 = scmp.eq.s32.totalorder %s33, 1
      %p56 = por %p54, %p55
      %p58 = scmp.ne.s32.totalorder %s41, %s57
      %p59 = scmp.eq.s32.totalorder %s33, 0
      %p60 = por %p58, %p59
      %s62 = sadd.s32 %s61, 1
      %p65 = scmp.eq.s32.totalorder %s27, 1
      %p66 = scmp.ne.s32.totalorder %s61, %s63
      %p67 = scmp.eq.s32.totalorder %s27, 0
      %p68 = por %p66, %p67
      %p69 = scmp.ne.s32.totalorder %s61, %s63
      %p70 = scmp.eq.s32.totalorder %s32, 1
      %p71 = por %p69, %p70
      %p72 = scmp.ne.s32.totalorder %s63, %s64
      %p73 = scmp.eq.s32.totalorder %s32, 0
      %p74 = por %p72, %p73
      %p75 = scmp.ne.s32.totalorder %s63, %s64
      %p76 = scmp.eq.s32.totalorder %s33, 1
      %p77 = por %p75, %p76
      %p79 = scmp.ne.s32.totalorder %s64, %s78
      %p80 = scmp.eq.s32.totalorder %s33, 0
      %p81 = por %p79, %p80
      %s83 = sadd.s32 %s82, 1
      %p86 = scmp.eq.s32.totalorder %s27, 1
      %p87 = scmp.ne.s32.totalorder %s82, %s84
      %p88 = scmp.eq.s32.totalorder %s27, 0
      %p89 = por %p87, %p88
      %p90 = scmp.ne.s32.totalorder %s82, %s84
      %p91 = scmp.eq.s32.totalorder %s32, 1
      %p92 = por %p90, %p91
      %p93 = scmp.ne.s32.totalorder %s84, %s85
      %p94 = scmp.eq.s32.totalorder %s32, 0
      %p95 = por %p93, %p94
      %p96 = scmp.ne.s32.totalorder %s84, %s85
      %p97 = scmp.eq.s32.totalorder %s33, 1
      %p98 = por %p96, %p97
      %p100 = scmp.ne.s32.totalorder %s85, %s99
      %p101 = scmp.eq.s32.totalorder %s33, 0
      %p102 = por %p100, %p101
      %s104 = sadd.s32 %s103, 1
      %p107 = scmp.eq.s32.totalorder %s27, 1
      %p108 = scmp.ne.s32.totalorder %s103, %s105
      %p109 = scmp.eq.s32.totalorder %s27, 0
      %p110 = por %p108, %p109
      %p111 = scmp.ne.s32.totalorder %s103, %s105
      %p112 = scmp.eq.s32.totalorder %s32, 1
      %p113 = por %p111, %p112
      %p114 = scmp.ne.s32.totalorder %s105, %s106
      %p115 = scmp.eq.s32.totalorder %s32, 0
      %p116 = por %p114, %p115
      %p117 = scmp.ne.s32.totalorder %s105, %s106
      %p118 = scmp.eq.s32.totalorder %s33, 1
      %p119 = por %p117, %p118
      %p121 = scmp.ne.s32.totalorder %s106, %s120
      %p122 = scmp.eq.s32.totalorder %s33, 0
      %p123 = por %p121, %p122
      %s125 = sadd.s32 %s124, 1
      %p128 = scmp.eq.s32.totalorder %s27, 1
      %p129 = scmp.ne.s32.totalorder %s124, %s126
      %p130 = scmp.eq.s32.totalorder %s27, 0
      %p131 = por %p129, %p130
      %p132 = scmp.ne.s32.totalorder %s124, %s126
      %p133 = scmp.eq.s32.totalorder %s32, 1
      %p134 = por %p132, %p133
      %p135 = scmp.ne.s32.totalorder %s126, %s127
      %p136 = scmp.eq.s32.totalorder %s32, 0
      %p137 = por %p135, %p136
      %p138 = scmp.ne.s32.totalorder %s126, %s127
      %p139 = scmp.eq.s32.totalorder %s33, 1
      %p140 = por %p138, %p139
      %p142 = scmp.ne.s32.totalorder %s127, %s141
      %p143 = scmp.eq.s32.totalorder %s33, 0
      %p144 = por %p142, %p143
      %s146 = sadd.s32 %s145, 1
      %p149 = scmp.eq.s32.totalorder %s27, 1
      %p150 = scmp.ne.s32.totalorder %s145, %s147
      %p151 = scmp.eq.s32.totalorder %s27, 0
      %p152 = por %p150, %p151
      %p153 = scmp.ne.s32.totalorder %s145, %s147
      %p154 = scmp.eq.s32.totalorder %s32, 1
      %p155 = por %p153, %p154
      %p156 = scmp.ne.s32.totalorder %s147, %s148
      %p157 = scmp.eq.s32.totalorder %s32, 0
      %p158 = por %p156, %p157
      %p159 = scmp.ne.s32.totalorder %s147, %s148
      %p160 = scmp.eq.s32.totalorder %s33, 1
      %p161 = por %p159, %p160
      %p163 = scmp.ne.s32.totalorder %s148, %s162
      %p164 = scmp.eq.s32.totalorder %s33, 0
      %p165 = por %p163, %p164
      %s167 = sadd.s32 %s166, 1
      %p170 = scmp.eq.s32.totalorder %s27, 1
      %p171 = scmp.ne.s32.totalorder %s166, %s168
      %p172 = scmp.eq.s32.totalorder %s27, 0
      %p173 = por %p171, %p172
      %p174 = scmp.ne.s32.totalorder %s166, %s168
      %p175 = scmp.eq.s32.totalorder %s32, 1
      %p176 = por %p174, %p175
      %p177 = scmp.ne.s32.totalorder %s168, %s169
      %p178 = scmp.eq.s32.totalorder %s32, 0
      %p179 = por %p177, %p178
      %p180 = scmp.ne.s32.totalorder %s168, %s169
      %p181 = scmp.eq.s32.totalorder %s33, 1
      %p182 = por %p180, %p181
      %p184 = scmp.ne.s32.totalorder %s169, %s183
      %p185 = scmp.eq.s32.totalorder %s33, 0
      %p186 = por %p184, %p185
      %s188 = sadd.s32 %s187, 1
      %p191 = scmp.eq.s32.totalorder %s27, 1
      %p192 = scmp.ne.s32.totalorder %s187, %s189
      %p193 = scmp.eq.s32.totalorder %s27, 0
      %p194 = por %p192, %p193
      %p195 = scmp.ne.s32.totalorder %s187, %s189
      %p196 = scmp.eq.s32.totalorder %s32, 1
      %p197 = por %p195, %p196
      %p198 = scmp.ne.s32.totalorder %s189, %s190
      %p199 = scmp.eq.s32.totalorder %s32, 0
      %p200 = por %p198, %p199
      %p201 = scmp.ne.s32.totalorder %s189, %s190
      %p202 = scmp.eq.s32.totalorder %s33, 1
      %p203 = por %p201, %p202
      %p205 = scmp.ne.s32.totalorder %s190, %s204
      %p206 = scmp.eq.s32.totalorder %s33, 0
      %p207 = por %p205, %p206
      %s209 = sadd.s32 %s208, 1
      %p212 = scmp.eq.s32.totalorder %s27, 1
      %p213 = scmp.ne.s32.totalorder %s208, %s210
      %p214 = scmp.eq.s32.totalorder %s27, 0
      %p215 = por %p213, %p214
      %p216 = scmp.ne.s32.totalorder %s208, %s210
      %p217 = scmp.eq.s32.totalorder %s32, 1
      %p218 = por %p216, %p217
      %p219 = scmp.ne.s32.totalorder %s210, %s211
      %p220 = scmp.eq.s32.totalorder %s32, 0
      %p221 = por %p219, %p220
      %p222 = scmp.ne.s32.totalorder %s210, %s211
      %p223 = scmp.eq.s32.totalorder %s33, 1
      %p224 = por %p222, %p223
      %p226 = scmp.ne.s32.totalorder %s211, %s225
      %p227 = scmp.eq.s32.totalorder %s33, 0
      %p228 = por %p226, %p227
      %s230 = sadd.s32 %s229, 1
      %p233 = scmp.eq.s32.totalorder %s27, 1
      %p234 = scmp.ne.s32.totalorder %s229, %s231
      %p235 = scmp.eq.s32.totalorder %s27, 0
      %p236 = por %p234, %p235
      %p237 = scmp.ne.s32.totalorder %s229, %s231
      %p238 = scmp.eq.s32.totalorder %s32, 1
      %p239 = por %p237, %p238
      %p240 = scmp.ne.s32.totalorder %s231, %s232
      %p241 = scmp.eq.s32.totalorder %s32, 0
      %p242 = por %p240, %p241
      %p243 = scmp.ne.s32.totalorder %s231, %s232
      %p244 = scmp.eq.s32.totalorder %s33, 1
      %p245 = por %p243, %p244
      %p247 = scmp.ne.s32.totalorder %s232, %s246
      %p248 = scmp.eq.s32.totalorder %s33, 0
      %p249 = por %p247, %p248
      %s250 = ssub.s32 %s27, %s34
      %p251 = scmp.eq.s32.totalorder %s250, 0
      %s253 = sadd.s32 %s252, 1
      %s254 = scalar_select %p251, %s252, %s253
      %p257 = pneg %p251
      %p258 = scmp.eq.s32.totalorder %s27, 1
      %p259 = por %p257, %p258
      %p260 = scmp.ne.s32.totalorder %s252, %s255
      %p261 = scmp.eq.s32.totalorder %s27, 0
      %p262 = por %p260, %p261
      %p263 = scmp.ne.s32.totalorder %s252, %s255
      %p264 = scmp.eq.s32.totalorder %s32, 1
      %p265 = por %p263, %p264
      %p266 = scmp.ne.s32.totalorder %s255, %s256
      %p267 = scmp.eq.s32.totalorder %s32, 0
      %p268 = por %p266, %p267
      %p269 = scmp.ne.s32.totalorder %s255, %s256
      %p270 = scmp.eq.s32.totalorder %s33, 1
      %p271 = por %p269, %p270
      %p273 = scmp.ne.s32.totalorder %s256, %s272
      %p274 = scmp.eq.s32.totalorder %s33, 0
      %p275 = por %p273, %p274
      %p276 = scmp.le.s32.totalorder 1, %s27
      %p277 = scmp.lt.s32.totalorder %s27, 3
      %p278 = pnand %p276, %p277
      %p279 = pneg %p278
      // Predicated region
      $region9: #{tpu_custom_call.1} parent=5 // pred_check
        _
      $region10: #{tpu_custom_call.1} parent=5 // pred_check_branch
        %281 = sbr.rel (%p278) target = $region12
      $region11: #{tpu_custom_call.1} parent=5 // pred_region
        %s282 = ssub.s32 %s27, 1
        // Predicated region
        $region13: #{tpu_custom_call.1} parent=11 // pred_check
          %p283 = pneg %p74
        $region14: #{tpu_custom_call.1} parent=11 // pred_check_branch
          %285 = sbr.rel (%p283) target = $region16
        $region15: #{tpu_custom_call.1} parent=11 // pred_region
          %s287 = ssub.s32 256, 256
          %288 = vsyncadd [#allocation6], %s287
          %s289 = sshll.u32 [#allocation5], 4
          %s290 = int_to_ptr.vmem [resolvable:$true] %s289
          %295 = dma.hbm_to_vmem [thread:$0]  %s1, 256, %s290, [#allocation6], 128, 128, 8
        $region16: #{tpu_custom_call.1} parent=11 // pred_fallthru
          _
        // Predicated region
        $region17: #{tpu_custom_call.1} parent=11 // pred_check
          %p296 = pneg %p95
        $region18: #{tpu_custom_call.1} parent=11 // pred_check_branch
          %298 = sbr.rel (%p296) target = $region20
        $region19: #{tpu_custom_call.1} parent=11 // pred_region
          %s300 = ssub.s32 16, 16
          %301 = vsyncadd [#allocation6], %s300
          %s303 = sshll.u32 [#allocation7], 4
          %s304 = int_to_ptr.vmem [resolvable:$true] %s303
          %306 = dma.hbm_to_vmem [thread:$0]  %s2, 16, %s304, [#allocation6]
        $region20: #{tpu_custom_call.1} parent=11 // pred_fallthru
          _
        // Predicated region
        $region21: #{tpu_custom_call.1} parent=11 // pred_check
          %p307 = pneg %p116
        $region22: #{tpu_custom_call.1} parent=11 // pred_check_branch
          %309 = sbr.rel (%p307) target = $region24
        $region23: #{tpu_custom_call.1} parent=11 // pred_region
          %s311 = ssub.s32 256, 256
          %312 = vsyncadd [#allocation9], %s311
          %s313 = sshll.u32 [#allocation8], 4
          %s314 = int_to_ptr.vmem [resolvable:$true] %s313
          %319 = dma.hbm_to_vmem [thread:$0]  %s3, 256, %s314, [#allocation9], 128, 128, 8
        $region24: #{tpu_custom_call.1} parent=11 // pred_fallthru
          _
        // Predicated region
        $region25: #{tpu_custom_call.1} parent=11 // pred_check
          %p320 = pneg %p137
        $region26: #{tpu_custom_call.1} parent=11 // pred_check_branch
          %322 = sbr.rel (%p320) target = $region28
        $region27: #{tpu_custom_call.1} parent=11 // pred_region
          %s324 = ssub.s32 256, 256
          %325 = vsyncadd [#allocation9], %s324
          %s326 = sshll.u32 [#allocation10], 4
          %s327 = int_to_ptr.vmem [resolvable:$true] %s326
          %332 = dma.hbm_to_vmem [thread:$0]  %s4, 256, %s327, [#allocation9], 64, 64, 4
        $region28: #{tpu_custom_call.1} parent=11 // pred_fallthru
          _
        // Predicated region
        $region29: #{tpu_custom_call.1} parent=11 // pred_check
          %p333 = pneg %p158
        $region30: #{tpu_custom_call.1} parent=11 // pred_check_branch
          %335 = sbr.rel (%p333) target = $region32
        $region31: #{tpu_custom_call.1} parent=11 // pred_region
          %s337 = ssub.s32 16, 16
          %338 = vsyncadd [#allocation12], %s337
          %s340 = sshll.u32 [#allocation11], 4
          %s341 = int_to_ptr.vmem [resolvable:$true] %s340
          %343 = dma.hbm_to_vmem [thread:$0]  %s5, 16, %s341, [#allocation12]
        $region32: #{tpu_custom_call.1} parent=11 // pred_fallthru
          _
        // Predicated region
        $region33: #{tpu_custom_call.1} parent=11 // pred_check
          %p344 = pneg %p179
        $region34: #{tpu_custom_call.1} parent=11 // pred_check_branch
          %346 = sbr.rel (%p344) target = $region36
        $region35: #{tpu_custom_call.1} parent=11 // pred_region
          %s348 = ssub.s32 256, 256
          %349 = vsyncadd [#allocation12], %s348
          %s350 = sshll.u32 [#allocation13], 4
          %s351 = int_to_ptr.vmem [resolvable:$true] %s350
          %356 = dma.hbm_to_vmem [thread:$0]  %s6, 256, %s351, [#allocation12], 64, 64, 4
        $region36: #{tpu_custom_call.1} parent=11 // pred_fallthru
          _
        // Predicated region
        $region37: #{tpu_custom_call.1} parent=11 // pred_check
          %p357 = pneg %p200
        $region38: #{tpu_custom_call.1} parent=11 // pred_check_branch
          %359 = sbr.rel (%p357) target = $region40
        $region39: #{tpu_custom_call.1} parent=11 // pred_region
          %s361 = ssub.s32 16, 16
          %362 = vsyncadd [#allocation15], %s361
          %s364 = sshll.u32 [#allocation14], 4
          %s365 = int_to_ptr.vmem [resolvable:$true] %s364
          %367 = dma.hbm_to_vmem [thread:$0]  %s7, 16, %s365, [#allocation15]
        $region40: #{tpu_custom_call.1} parent=11 // pred_fallthru
          _
        // Predicated region
        $region41: #{tpu_custom_call.1} parent=11 // pred_check
          %p368 = pneg %p221
        $region42: #{tpu_custom_call.1} parent=11 // pred_check_branch
          %370 = sbr.rel (%p368) target = $region44
        $region43: #{tpu_custom_call.1} parent=11 // pred_region
          %s372 = ssub.s32 256, 256
          %373 = vsyncadd [#allocation15], %s372
          %s374 = sshll.u32 [#allocation16], 4
          %s375 = int_to_ptr.vmem [resolvable:$true] %s374
          %380 = dma.hbm_to_vmem [thread:$0]  %s8, 256, %s375, [#allocation15], 64, 64, 4
        $region44: #{tpu_custom_call.1} parent=11 // pred_fallthru
          _
        // Predicated region
        $region45: #{tpu_custom_call.1} parent=11 // pred_check
          %p381 = pneg %p242
        $region46: #{tpu_custom_call.1} parent=11 // pred_check_branch
          %383 = sbr.rel (%p381) target = $region48
        $region47: #{tpu_custom_call.1} parent=11 // pred_region
          %s385 = ssub.s32 1024, 1024
          %386 = vsyncadd [#allocation18], %s385
          %s387 = sshll.u32 [#allocation17], 4
          %s388 = int_to_ptr.vmem [resolvable:$true] %s387
          %393 = dma.hbm_to_vmem [thread:$0]  %s9, 1024, %s388, [#allocation18], 64, 64, 4
        $region48: #{tpu_custom_call.1} parent=11 // pred_fallthru
          _
      $region12: #{tpu_custom_call.1} parent=5 // pred_fallthru
        _
      %p394 = scmp.lt.s32.totalorder %s27, 2
      // Predicated region
      $region49: #{tpu_custom_call.1} parent=5 // pred_check
        %p395 = pneg %p394
      $region50: #{tpu_custom_call.1} parent=5 // pred_check_branch
        %397 = sbr.rel (%p395) target = $region52
      $region51: #{tpu_custom_call.1} parent=5 // pred_region
        // Predicated region
        $region53: #{tpu_custom_call.1} parent=51 // pred_check
          %p398 = pneg %p47
        $region54: #{tpu_custom_call.1} parent=51 // pred_check_branch
          %400 = sbr.rel (%p398) target = $region56
        $region55: #{tpu_custom_call.1} parent=51 // pred_region
          %s401 = sand.u32 %s37, 1
          %s402 = scalar_lea.sflag [#allocation3], %s401
          %s403 = sand.u32 %s37, 1
          %s404 = smul.addr %s403, 128
          %s405 = scalar_lea.vmem [#allocation2], %s404
          %s406 = smul.u32 8, %s27
          %s408 = ssub.s32 2048, 2048
          %409 = vsyncadd %s402, %s408
          %s410 = smul.addr %s406, 2
          %s411 = smul.addr %s410, 128
          %s412 = scalar_lea.hbm %s0, %s411
          %s413 = sshll.u32 %s405, 4
          %s414 = int_to_ptr.vmem [resolvable:$true] %s413
          %419 = dma.hbm_to_vmem [thread:$0]  %s412, 2048, %s414, %s402, 128, 128, 8
        $region56: #{tpu_custom_call.1} parent=51 // pred_fallthru
          _
      $region52: #{tpu_custom_call.1} parent=5 // pred_fallthru
        _
      %p420 = scmp.le.s32.totalorder 1, %s27
      %p421 = scmp.lt.s32.totalorder %s27, 3
      %p422 = pnand %p420, %p421
      %p423 = pneg %p422
      // Predicated region
      $region57: #{tpu_custom_call.1} parent=5 // pred_check
        _
      $region58: #{tpu_custom_call.1} parent=5 // pred_check_branch
        %425 = sbr.rel (%p422) target = $region60
      $region59: #{tpu_custom_call.1} parent=5 // pred_region
        %s426 = ssub.s32 %s27, 1
        %s427 = sand.u32 %s40, 1
        %s428 = scalar_lea.sflag [#allocation3], %s427
        %s429 = sand.u32 %s40, 1
        %s430 = smul.addr %s429, 128
        %s431 = scalar_lea.vmem [#allocation2], %s430
        // Predicated region
        $region61: #{tpu_custom_call.1} parent=59 // pred_check
          %p432 = pneg %p53
        $region62: #{tpu_custom_call.1} parent=59 // pred_check_branch
          %434 = sbr.rel (%p432) target = $region64
        $region63: #{tpu_custom_call.1} parent=59 // pred_region
          %435 = dma.done %s428, 2048
        $region64: #{tpu_custom_call.1} parent=59 // pred_fallthru
          _
        // Predicated region
        $region65: #{tpu_custom_call.1} parent=59 // pred_check
          %p436 = pneg %p74
        $region66: #{tpu_custom_call.1} parent=59 // pred_check_branch
          %438 = sbr.rel (%p436) target = $region68
        $region67: #{tpu_custom_call.1} parent=59 // pred_region
          %439 = dma.done [#allocation6], 256
        $region68: #{tpu_custom_call.1} parent=59 // pred_fallthru
          _
        // Predicated region
        $region69: #{tpu_custom_call.1} parent=59 // pred_check
          %p440 = pneg %p95
        $region70: #{tpu_custom_call.1} parent=59 // pred_check_branch
          %442 = sbr.rel (%p440) target = $region72
        $region71: #{tpu_custom_call.1} parent=59 // pred_region
          %443 = dma.done [#allocation6], 16
        $region72: #{tpu_custom_call.1} parent=59 // pred_fallthru
          _
        // Predicated region
        $region73: #{tpu_custom_call.1} parent=59 // pred_check
          %p444 = pneg %p116
        $region74: #{tpu_custom_call.1} parent=59 // pred_check_branch
          %446 = sbr.rel (%p444) target = $region76
        $region75: #{tpu_custom_call.1} parent=59 // pred_region
          %447 = dma.done [#allocation9], 256
        $region76: #{tpu_custom_call.1} parent=59 // pred_fallthru
          _
        // Predicated region
        $region77: #{tpu_custom_call.1} parent=59 // pred_check
          %p448 = pneg %p137
        $region78: #{tpu_custom_call.1} parent=59 // pred_check_branch
          %450 = sbr.rel (%p448) target = $region80
        $region79: #{tpu_custom_call.1} parent=59 // pred_region
          %451 = dma.done [#allocation9], 256
        $region80: #{tpu_custom_call.1} parent=59 // pred_fallthru
          _
        // Predicated region
        $region81: #{tpu_custom_call.1} parent=59 // pred_check
          %p452 = pneg %p158
        $region82: #{tpu_custom_call.1} parent=59 // pred_check_branch
          %454 = sbr.rel (%p452) target = $region84
        $region83: #{tpu_custom_call.1} parent=59 // pred_region
          %455 = dma.done [#allocation12], 16
        $region84: #{tpu_custom_call.1} parent=59 // pred_fallthru
          _
        // Predicated region
        $region85: #{tpu_custom_call.1} parent=59 // pred_check
          %p456 = pneg %p179
        $region86: #{tpu_custom_call.1} parent=59 // pred_check_branch
          %458 = sbr.rel (%p456) target = $region88
        $region87: #{tpu_custom_call.1} parent=59 // pred_region
          %459 = dma.done [#allocation12], 256
        $region88: #{tpu_custom_call.1} parent=59 // pred_fallthru
          _
        // Predicated region
        $region89: #{tpu_custom_call.1} parent=59 // pred_check
          %p460 = pneg %p200
        $region90: #{tpu_custom_call.1} parent=59 // pred_check_branch
          %462 = sbr.rel (%p460) target = $region92
        $region91: #{tpu_custom_call.1} parent=59 // pred_region
          %463 = dma.done [#allocation15], 16
        $region92: #{tpu_custom_call.1} parent=59 // pred_fallthru
          _
        // Predicated region
        $region93: #{tpu_custom_call.1} parent=59 // pred_check
          %p464 = pneg %p221
        $region94: #{tpu_custom_call.1} parent=59 // pred_check_branch
          %466 = sbr.rel (%p464) target = $region96
        $region95: #{tpu_custom_call.1} parent=59 // pred_region
          %467 = dma.done [#allocation15], 256
        $region96: #{tpu_custom_call.1} parent=59 // pred_fallthru
          _
        // Predicated region
        $region97: #{tpu_custom_call.1} parent=59 // pred_check
          %p468 = pneg %p242
        $region98: #{tpu_custom_call.1} parent=59 // pred_check_branch
          %470 = sbr.rel (%p468) target = $region100
        $region99: #{tpu_custom_call.1} parent=59 // pred_region
          %471 = dma.done [#allocation18], 1024
        $region100: #{tpu_custom_call.1} parent=59 // pred_fallthru
          _
        %s472 = sand.u32 %s40, 1
        %s473 = scalar_lea.sflag [#allocation3], %s472
        %s474 = sand.u32 %s40, 1
        %s475 = smul.addr %s474, 128
        %s476 = scalar_lea.vmem [#allocation2], %s475
        %p477 = pneg %p53
        %p478 = pneg %p50
        %p479 = pneg %p74
        %p480 = pneg %p71
        %p481 = pneg %p95
        %p482 = pneg %p92
        %p483 = pneg %p116
        %p484 = pneg %p113
        %p485 = pneg %p137
        %p486 = pneg %p134
        %p487 = pneg %p158
        %p488 = pneg %p155
        %p489 = pneg %p179
        %p490 = pneg %p176
        %p491 = pneg %p200
        %p492 = pneg %p197
        %p493 = pneg %p221
        %p494 = pneg %p218
        %p495 = pneg %p242
        %p496 = pneg %p239
        %p497 = pneg %p268
        %p498 = pneg %p265
        %s499 = sand.u32 %s255, 1
        %s500 = scalar_lea.sflag [#allocation4], %s499
        %s501 = sand.u32 %s255, 1
        %s502 = smul.addr %s501, 8
        %s503 = scalar_lea.vmem [#allocation19], %s502
        %s504 = smul.u32 8, %s32
        %v506 = vld [vmem:[%s431] sm:$0xff]
        %v507 = vld [vmem:[%s431 + $0x8] sm:$0xff]
        %v508 = vld [vmem:[%s431 + $0x10] sm:$0xff]
        %v509 = vld [vmem:[%s431 + $0x18] sm:$0xff]
        %v510 = vld [vmem:[%s431 + $0x20] sm:$0xff]
        %v511 = vld [vmem:[%s431 + $0x28] sm:$0xff]
        %v512 = vld [vmem:[%s431 + $0x30] sm:$0xff]
        %v513 = vld [vmem:[%s431 + $0x38] sm:$0xff]
        %v514 = vld [vmem:[%s431 + $0x40] sm:$0xff]
        %v515 = vld [vmem:[%s431 + $0x48] sm:$0xff]
        %v516 = vld [vmem:[%s431 + $0x50] sm:$0xff]
        %v517 = vld [vmem:[%s431 + $0x58] sm:$0xff]
        %v518 = vld [vmem:[%s431 + $0x60] sm:$0xff]
        %v519 = vld [vmem:[%s431 + $0x68] sm:$0xff]
        %v520 = vld [vmem:[%s431 + $0x70] sm:$0xff]
        %v521 = vld [vmem:[%s431 + $0x78] sm:$0xff]
        %vm522 = vcmask 261120
        %v523 = vsel %vm522, %v506, 0.0
        %v524 = vsel %vm522, %v507, 0.0
        %v525 = vadd.f32 %v523, %v524
        %v526 = vrot.slane %v525, 4
        %v527 = vadd.f32 %v525, %v526
        %v528 = vrot.slane %v527, 2
        %v529 = vadd.f32 %v527, %v528
        %v530 = vrot.slane %v529, 1
        %v531 = vadd.f32 %v529, %v530
        %v532 = vsel %vm522, %v508, 0.0
        %v533 = vsel %vm522, %v509, 0.0
        %v534 = vadd.f32 %v532, %v533
        %v535 = vrot.slane %v534, 4
        %v536 = vadd.f32 %v534, %v535
        %v537 = vrot.slane %v536, 2
        %v538 = vadd.f32 %v536, %v537
        %v539 = vrot.slane %v538, 1
        %v540 = vadd.f32 %v538, %v539
        %v541 = vsel %vm522, %v510, 0.0
        %v542 = vsel %vm522, %v511, 0.0
        %v543 = vadd.f32 %v541, %v542
        %v544 = vrot.slane %v543, 4
        %v545 = vadd.f32 %v543, %v544
        %v546 = vrot.slane %v545, 2
        %v547 = vadd.f32 %v545, %v546
        %v548 = vrot.slane %v547, 1
        %v549 = vadd.f32 %v547, %v548
        %v550 = vsel %vm522, %v512, 0.0
        %v551 = vsel %vm522, %v513, 0.0
        %v552 = vadd.f32 %v550, %v551
        %v553 = vrot.slane %v552, 4
        %v554 = vadd.f32 %v552, %v553
        %v555 = vrot.slane %v554, 2
        %v556 = vadd.f32 %v554, %v555
        %v557 = vrot.slane %v556, 1
        %v558 = vadd.f32 %v556, %v557
        %v559 = vsel %vm522, %v514, 0.0
        %v560 = vsel %vm522, %v515, 0.0
        %v561 = vadd.f32 %v559, %v560
        %v562 = vrot.slane %v561, 4
        %v563 = vadd.f32 %v561, %v562
        %v564 = vrot.slane %v563, 2
        %v565 = vadd.f32 %v563, %v564
        %v566 = vrot.slane %v565, 1
        %v567 = vadd.f32 %v565, %v566
        %v568 = vsel %vm522, %v516, 0.0
        %v569 = vsel %vm522, %v517, 0.0
        %v570 = vadd.f32 %v568, %v569
        %v571 = vrot.slane %v570, 4
        %v572 = vadd.f32 %v570, %v571
        %v573 = vrot.slane %v572, 2
        %v574 = vadd.f32 %v572, %v573
        %v575 = vrot.slane %v574, 1
        %v576 = vadd.f32 %v574, %v575
        %v577 = vsel %vm522, %v518, 0.0
        %v578 = vsel %vm522, %v519, 0.0
        %v579 = vadd.f32 %v577, %v578
        %v580 = vrot.slane %v579, 4
        %v581 = vadd.f32 %v579, %v580
        %v582 = vrot.slane %v581, 2
        %v583 = vadd.f32 %v581, %v582
        %v584 = vrot.slane %v583, 1
        %v585 = vadd.f32 %v583, %v584
        %v586 = vsel %vm522, %v520, 0.0
        %v587 = vsel %vm522, %v521, 0.0
        %v588 = vadd.f32 %v586, %v587
        %v589 = vrot.slane %v588, 4
        %v590 = vadd.f32 %v588, %v589
        %v591 = vrot.slane %v590, 2
        %v592 = vadd.f32 %v590, %v591
        %v593 = vrot.slane %v592, 1
        %v594 = vadd.f32 %v592, %v593
        %v595 = vmul.f32 %v531, 0.0625
        %v596 = vmul.f32 %v540, 0.0625
        %v597 = vmul.f32 %v549, 0.0625
        %v598 = vmul.f32 %v558, 0.0625
        %v599 = vmul.f32 %v567, 0.0625
        %v600 = vmul.f32 %v576, 0.0625
        %v601 = vmul.f32 %v585, 0.0625
        %v602 = vmul.f32 %v594, 0.0625
        %v603 = vld [vmem:[#allocation7] sm:$0x1]
        %v605 = vlaneseq
        %v606 = vshrl.u32 %v605, 7
        %v607 = vsub.s32 0, %v606
        %v608 = vrot.slane %v603, %v607
        %v610 = vadd.f32 %v595, %v608
        %v611 = vadd.f32 %v596, %v608
        %v612 = vadd.f32 %v597, %v608
        %v613 = vadd.f32 %v598, %v608
        %v614 = vadd.f32 %v599, %v608
        %v615 = vadd.f32 %v600, %v608
        %v616 = vadd.f32 %v601, %v608
        %v617 = vadd.f32 %v602, %v608
        %v618 = vld [vmem:[#allocation5] sm:$0xff]
        %v619 = vld [vmem:[#allocation5 + $0x8] sm:$0xff]
        %v620 = vadd.f32 %v506, %v618
        %v621 = vadd.f32 %v507, %v619
        %v622 = vadd.f32 %v508, %v618
        %v623 = vadd.f32 %v509, %v619
        %v624 = vadd.f32 %v510, %v618
        %v625 = vadd.f32 %v511, %v619
        %v626 = vadd.f32 %v512, %v618
        %v627 = vadd.f32 %v513, %v619
        %v628 = vadd.f32 %v514, %v618
        %v629 = vadd.f32 %v515, %v619
        %v630 = vadd.f32 %v516, %v618
        %v631 = vadd.f32 %v517, %v619
        %v632 = vadd.f32 %v518, %v618
        %v633 = vadd.f32 %v519, %v619
        %v634 = vadd.f32 %v520, %v618
        %v635 = vadd.f32 %v521, %v619
        %v636 = vpack.c.bf16 %v610, %v610
        %v637 = vpack.c.bf16 %v611, %v611
        %v638 = vpack.c.bf16 %v612, %v612
        %v639 = vpack.c.bf16 %v613, %v613
        %v640 = vpack.c.bf16 %v614, %v614
        %v641 = vpack.c.bf16 %v615, %v615
        %v642 = vpack.c.bf16 %v616, %v616
        %v643 = vpack.c.bf16 %v617, %v617
        %v644 = vld [vmem:[#allocation10] sm:$0xf]
        %v645 = vld [vmem:[#allocation10 + $0x4] sm:$0xf]
        %v646 = vld [vmem:[#allocation10 + $0x8] sm:$0xf]
        %v647 = vld [vmem:[#allocation10 + $0xc] sm:$0xf]
        %v648 = vld [vmem:[#allocation11] sm:$0x1]
        %v650 = vlaneseq
        %v651 = vshrl.u32 %v650, 7
        %v652 = vsub.s32 0, %v651
        %v653 = vrot.slane %v648, %v652
        %v663 = vunpack.c.l.b16 %v636
        %v664 = vunpack.c.l.b16 %v637
        %v665 = vunpack.c.l.b16 %v638
        %v666 = vunpack.c.l.b16 %v639
        %v667 = vunpack.c.l.b16 %v640
        %v668 = vunpack.c.l.b16 %v641
        %v669 = vunpack.c.l.b16 %v642
        %v670 = vunpack.c.l.b16 %v643
        %v671 = vrot.slane %v664, 7
        %vm672 = vcmask 1041409
        %v673 = vsel %vm672, %v671, %v663
        %v674 = vrot.slane %v665, 6
        %vm675 = vcmask 1042434
        %v676 = vsel %vm675, %v674, %v673
        %v677 = vrot.slane %v666, 5
        %vm678 = vcmask 1043459
        %v679 = vsel %vm678, %v677, %v676
        %v680 = vrot.slane %v667, 4
        %vm681 = vcmask 1044484
        %v682 = vsel %vm681, %v680, %v679
        %v683 = vrot.slane %v668, 3
        %vm684 = vcmask 1045509
        %v685 = vsel %vm684, %v683, %v682
        %v686 = vrot.slane %v669, 2
        %vm687 = vcmask 1046534
        %v688 = vsel %vm687, %v686, %v685
        %v689 = vrot.slane %v670, 1
        %vm690 = vcmask 1047559
        %v691 = vsel %vm690, %v689, %v688
        %v692 = vpack.c.b16 %v691, %v691
        %v697 = vunpack.c.l.b16 %v644
        %v698 = vunpack.c.l.b16 %v645
        %v699 = vunpack.c.l.b16 %v646
        %v700 = vunpack.c.l.b16 %v647
        %v701 = vpack.c.b16 %v698, %v697
        %v702 = vpack.c.b16 %v700, %v699
        %v706 = vsel %vm522, %v692, 0
        %708 = vmatprep.subr.bf16.mxu0 0
        %709 = vmatpush1.bf16.msra.mxu0 %v701
        %710 = vmatprep.subr.bf16.mxu0 0
        %711 = vmatpush1.bf16.msra.mxu0 %v702
        %712 = vmatprep.subr.bf16.mxu0 0
        %713 = vmatpush1.bf16.msra.mxu0 0
        %714 = vmatprep.subr.bf16.mxu0 0
        %715 = vmatpush1.bf16.msra.mxu0 0
        %716 = vmatprep.subr.bf16.mxu0 0
        %717 = vmatpush1.bf16.msra.mxu0 0
        %718 = vmatprep.subr.bf16.mxu0 0
        %719 = vmatpush1.bf16.msra.mxu0 0
        %720 = vmatprep.subr.bf16.mxu0 0
        %721 = vmatpush1.bf16.msra.mxu0 0
        %722 = vmatprep.subr.bf16.mxu0 0
        %723 = vmatpush1.bf16.msra.mxu0 0
        %724 = vmatprep.subr.bf16.mxu0 0
        %725 = vmatpush1.bf16.msra.mxu0 0
        %726 = vmatprep.subr.bf16.mxu0 0
        %727 = vmatpush1.bf16.msra.mxu0 0
        %728 = vmatprep.subr.bf16.mxu0 0
        %729 = vmatpush1.bf16.msra.mxu0 0
        %730 = vmatprep.subr.bf16.mxu0 0
        %731 = vmatpush1.bf16.msra.mxu0 0
        %732 = vmatprep.subr.bf16.mxu0 0
        %733 = vmatpush1.bf16.msra.mxu0 0
        %734 = vmatprep.subr.bf16.mxu0 0
        %735 = vmatpush1.bf16.msra.mxu0 0
        %736 = vmatprep.subr.bf16.mxu0 0
        %737 = vmatpush1.bf16.msra.mxu0 0
        %738 = vmatprep.subr.bf16.mxu0 0
        %739 = vmatpush1.bf16.msra.mxu0 0
        %740 = vmatprep.mubr.bf16.mxu0 0
        %741 = vmatmul.mubr.bf16.gmra.mrb[0].mxu0 %v706
        %v742 = vpop.f32.mrb[0].mxu0
        %v743 = vadd.f32 %v653, %v742
        %v744 = vpop.f32.mrb[0].mxu0
        %v745 = vpop.f32.mrb[0].mxu0
        %v746 = vpop.f32.mrb[0].mxu0
        %747 = vdwg.mxu0
        %v748 = vpack.c.bf16 %v621, %v620
        %v749 = vpack.c.bf16 %v623, %v622
        %v750 = vpack.c.bf16 %v625, %v624
        %v751 = vpack.c.bf16 %v627, %v626
        %v752 = vpack.c.bf16 %v629, %v628
        %v753 = vpack.c.bf16 %v631, %v630
        %v754 = vpack.c.bf16 %v633, %v632
        %v755 = vpack.c.bf16 %v635, %v634
        %756 = vrot.lane.b32.xlu0 %v701, 96
        %v757 = vpop.permute.xlu0 %756
        %758 = vrot.lane.b32.xlu0 %v702, 96
        %v759 = vpop.permute.xlu0 %758
        %762 = vrot.lane.b32.xlu0 %v653, 96
        %v763 = vpop.permute.xlu0 %762
        %v766 = vsel %vm522, %v748, 0
        %v769 = vsel %vm522, %v749, 0
        %v772 = vsel %vm522, %v750, 0
        %v775 = vsel %vm522, %v751, 0
        %v778 = vsel %vm522, %v752, 0
        %v781 = vsel %vm522, %v753, 0
        %v784 = vsel %vm522, %v754, 0
        %v787 = vsel %vm522, %v755, 0
        %789 = vmatprep.subr.bf16.mxu0 0
        %790 = vmatpush1.bf16.msra.mxu0 %v757
        %791 = vmatprep.subr.bf16.mxu0 0
        %792 = vmatpush1.bf16.msra.mxu0 %v759
        %793 = vmatprep.subr.bf16.mxu0 0
        %794 = vmatpush1.bf16.msra.mxu0 0
        %795 = vmatprep.subr.bf16.mxu0 0
        %796 = vmatpush1.bf16.msra.mxu0 0
        %797 = vmatprep.subr.bf16.mxu0 0
        %798 = vmatpush1.bf16.msra.mxu0 0
        %799 = vmatprep.subr.bf16.mxu0 0
        %800 = vmatpush1.bf16.msra.mxu0 0
        %801 = vmatprep.subr.bf16.mxu0 0
        %802 = vmatpush1.bf16.msra.mxu0 0
        %803 = vmatprep.subr.bf16.mxu0 0
        %804 = vmatpush1.bf16.msra.mxu0 0
        %805 = vmatprep.subr.bf16.mxu0 0
        %806 = vmatpush1.bf16.msra.mxu0 0
        %807 = vmatprep.subr.bf16.mxu0 0
        %808 = vmatpush1.bf16.msra.mxu0 0
        %809 = vmatprep.subr.bf16.mxu0 0
        %810 = vmatpush1.bf16.msra.mxu0 0
        %811 = vmatprep.subr.bf16.mxu0 0
        %812 = vmatpush1.bf16.msra.mxu0 0
        %813 = vmatprep.subr.bf16.mxu0 0
        %814 = vmatpush1.bf16.msra.mxu0 0
        %815 = vmatprep.subr.bf16.mxu0 0
        %816 = vmatpush1.bf16.msra.mxu0 0
        %817 = vmatprep.subr.bf16.mxu0 0
        %818 = vmatpush1.bf16.msra.mxu0 0
        %819 = vmatprep.subr.bf16.mxu0 0
        %820 = vmatpush1.bf16.msra.mxu0 0
        %821 = vmatprep.mubr.bf16.mxu0 0
        %822 = vmatmul.mubr.bf16.gmra.mrb[0].mxu0 %v766
        %v823 = vpop.f32.mrb[0].mxu0
        %v824 = vadd.f32 %v763, %v823
        %v825 = vpop.f32.mrb[0].mxu0
        %v826 = vpop.f32.mrb[0].mxu0
        %v827 = vadd.f32 %v763, %v826
        %v828 = vpop.f32.mrb[0].mxu0
        %829 = vmatprep.mubr.bf16.mxu0 0
        %830 = vmatmul.mubr.bf16.gmra.mrb[0].mxu0 %v769
        %v831 = vpop.f32.mrb[0].mxu0
        %v832 = vadd.f32 %v763, %v831
        %v833 = vpop.f32.mrb[0].mxu0
        %v834 = vpop.f32.mrb[0].mxu0
        %v835 = vadd.f32 %v763, %v834
        %v836 = vpop.f32.mrb[0].mxu0
        %837 = vmatprep.mubr.bf16.mxu0 0
        %838 = vmatmul.mubr.bf16.gmra.mrb[0].mxu0 %v772
        %v839 = vpop.f32.mrb[0].mxu0
        %v840 = vadd.f32 %v763, %v839
        %v841 = vpop.f32.mrb[0].mxu0
        %v842 = vpop.f32.mrb[0].mxu0
        %v843 = vadd.f32 %v763, %v842
        %v844 = vpop.f32.mrb[0].mxu0
        %845 = vmatprep.mubr.bf16.mxu0 0
        %846 = vmatmul.mubr.bf16.gmra.mrb[0].mxu0 %v775
        %v847 = vpop.f32.mrb[0].mxu0
        %v848 = vadd.f32 %v763, %v847
        %v849 = vpop.f32.mrb[0].mxu0
        %v850 = vpop.f32.mrb[0].mxu0
        %v851 = vadd.f32 %v763, %v850
        %v852 = vpop.f32.mrb[0].mxu0
        %853 = vmatprep.mubr.bf16.mxu0 0
        %854 = vmatmul.mubr.bf16.gmra.mrb[0].mxu0 %v778
        %v855 = vpop.f32.mrb[0].mxu0
        %v856 = vadd.f32 %v763, %v855
        %v857 = vpop.f32.mrb[0].mxu0
        %v858 = vpop.f32.mrb[0].mxu0
        %v859 = vadd.f32 %v763, %v858
        %v860 = vpop.f32.mrb[0].mxu0
        %861 = vmatprep.mubr.bf16.mxu0 0
        %862 = vmatmul.mubr.bf16.gmra.mrb[0].mxu0 %v781
        %v863 = vpop.f32.mrb[0].mxu0
        %v864 = vadd.f32 %v763, %v863
        %v865 = vpop.f32.mrb[0].mxu0
        %v866 = vpop.f32.mrb[0].mxu0
        %v867 = vadd.f32 %v763, %v866
        %v868 = vpop.f32.mrb[0].mxu0
        %869 = vmatprep.mubr.bf16.mxu0 0
        %870 = vmatmul.mubr.bf16.gmra.mrb[0].mxu0 %v784
        %v871 = vpop.f32.mrb[0].mxu0
        %v872 = vadd.f32 %v763, %v871
        %v873 = vpop.f32.mrb[0].mxu0
        %v874 = vpop.f32.mrb[0].mxu0
        %v875 = vadd.f32 %v763, %v874
        %v876 = vpop.f32.mrb[0].mxu0
        %877 = vmatprep.mubr.bf16.mxu0 0
        %878 = vmatmul.mubr.bf16.gmra.mrb[0].mxu0 %v787
        %v879 = vpop.f32.mrb[0].mxu0
        %v880 = vadd.f32 %v763, %v879
        %v881 = vpop.f32.mrb[0].mxu0
        %v882 = vpop.f32.mrb[0].mxu0
        %v883 = vadd.f32 %v763, %v882
        %v884 = vpop.f32.mrb[0].mxu0
        %885 = vdwg.mxu0
        %v887 = vcombine.high %v743, %v743
        %v889 = vunpack.c.l.s4 1966171168
        %v890 = vunpack.c.0.s8 %v889
        %v891 = vlaneseq
        %v892 = vshrl.u32 %v891, 7
        %v893 = vsub.s32 %v890, %v892
        %v894 = vrot.slane %v743, %v893
        %v896 = vunpack.c.l.s4 1966171168
        %v897 = vunpack.c.0.s8 %v896
        %v898 = vlaneseq
        %v899 = vshrl.u32 %v898, 7
        %v900 = vsub.s32 %v897, %v899
        %v901 = vrot.slane %v887, %v900
        %v902 = vcombine.high %v894, %v894
        %v903 = vcombine.high %v901, %v901
        %v905 = vunpack.c.l.s4 1966171168
        %v906 = vunpack.c.0.s8 %v905
        %v907 = vlaneseq
        %v908 = vshrl.u32 %v907, 7
        %v909 = vsub.s32 %v906, %v908
        %v910 = vrot.slane %v894, %v909
        %v912 = vunpack.c.l.s4 1966171168
        %v913 = vunpack.c.0.s8 %v912
        %v914 = vlaneseq
        %v915 = vshrl.u32 %v914, 7
        %v916 = vsub.s32 %v913, %v915
        %v917 = vrot.slane %v901, %v916
        %v919 = vunpack.c.l.s4 1966171168
        %v920 = vunpack.c.0.s8 %v919
        %v921 = vlaneseq
        %v922 = vshrl.u32 %v921, 7
        %v923 = vsub.s32 %v920, %v922
        %v924 = vrot.slane %v902, %v923
        %v926 = vunpack.c.l.s4 1966171168
        %v927 = vunpack.c.0.s8 %v926
        %v928 = vlaneseq
        %v929 = vshrl.u32 %v928, 7
        %v930 = vsub.s32 %v927, %v929
        %v931 = vrot.slane %v903, %v930
        %v932 = vcombine.high %v910, %v910
        %v933 = vcombine.high %v917, %v917
        %v934 = vcombine.high %v924, %v924
        %v935 = vcombine.high %v931, %v931
        %v936 = vlaneseq
        %v937 = vshrl.u32 %v936, 7
        %v938 = vsub.s32 0, %v937
        %v939 = vrot.slane %v910, %v938
        %v940 = vlaneseq
        %v941 = vshrl.u32 %v940, 7
        %v942 = vsub.s32 0, %v941
        %v943 = vrot.slane %v924, %v942
        %v944 = vlaneseq
        %v945 = vshrl.u32 %v944, 7
        %v946 = vsub.s32 0, %v945
        %v947 = vrot.slane %v932, %v946
        %v948 = vlaneseq
        %v949 = vshrl.u32 %v948, 7
        %v950 = vsub.s32 0, %v949
        %v951 = vrot.slane %v934, %v950
        %v952 = vlaneseq
        %v953 = vshrl.u32 %v952, 7
        %v954 = vsub.s32 0, %v953
        %v955 = vrot.slane %v917, %v954
        %v956 = vlaneseq
        %v957 = vshrl.u32 %v956, 7
        %v958 = vsub.s32 0, %v957
        %v959 = vrot.slane %v931, %v958
        %v960 = vlaneseq
        %v961 = vshrl.u32 %v960, 7
        %v962 = vsub.s32 0, %v961
        %v963 = vrot.slane %v933, %v962
        %v964 = vlaneseq
        %v965 = vshrl.u32 %v964, 7
        %v966 = vsub.s32 0, %v965
        %v967 = vrot.slane %v935, %v966
        %v976 = vmul.f32 %v824, %v939
        %v977 = vmul.f32 %v827, %v939
        %v978 = vmul.f32 %v832, %v943
        %v979 = vmul.f32 %v835, %v943
        %v980 = vmul.f32 %v840, %v947
        %v981 = vmul.f32 %v843, %v947
        %v982 = vmul.f32 %v848, %v951
        %v983 = vmul.f32 %v851, %v951
        %v984 = vmul.f32 %v856, %v955
        %v985 = vmul.f32 %v859, %v955
        %v986 = vmul.f32 %v864, %v959
        %v987 = vmul.f32 %v867, %v959
        %v988 = vmul.f32 %v872, %v963
        %v989 = vmul.f32 %v875, %v963
        %v990 = vmul.f32 %v880, %v967
        %v991 = vmul.f32 %v883, %v967
        %v992 = vpack.c.bf16 %v977, %v976
        %v993 = vpack.c.bf16 %v979, %v978
        %v994 = vpack.c.bf16 %v981, %v980
        %v995 = vpack.c.bf16 %v983, %v982
        %v996 = vpack.c.bf16 %v985, %v984
        %v997 = vpack.c.bf16 %v987, %v986
        %v998 = vpack.c.bf16 %v989, %v988
        %v999 = vpack.c.bf16 %v991, %v990
        %v1000 = vld [vmem:[#allocation16] sm:$0xf]
        %v1001 = vld [vmem:[#allocation16 + $0x4] sm:$0xf]
        %v1002 = vld [vmem:[#allocation16 + $0x8] sm:$0xf]
        %v1003 = vld [vmem:[#allocation16 + $0xc] sm:$0xf]
        %v1008 = vunpack.c.l.b16 %v1000
        %v1009 = vunpack.c.l.b16 %v1001
        %v1010 = vunpack.c.l.b16 %v1002
        %v1011 = vunpack.c.l.b16 %v1003
        %v1012 = vpack.c.b16 %v1009, %v1008
        %v1013 = vpack.c.b16 %v1011, %v1010
        %v1017 = vsel %vm522, %v992, 0
        %v1020 = vsel %vm522, %v993, 0
        %v1023 = vsel %vm522, %v994, 0
        %v1026 = vsel %vm522, %v995, 0
        %v1029 = vsel %vm522, %v996, 0
        %v1032 = vsel %vm522, %v997, 0
        %v1035 = vsel %vm522, %v998, 0
        %v1038 = vsel %vm522, %v999, 0
        %1040 = vmatprep.subr.bf16.mxu0 0
        %1041 = vmatpush1.bf16.msra.mxu0 %v1012
        %1042 = vmatprep.subr.bf16.mxu0 0
        %1043 = vmatpush1.bf16.msra.mxu0 %v1013
        %1044 = vmatprep.subr.bf16.mxu0 0
        %1045 = vmatpush1.bf16.msra.mxu0 0
        %1046 = vmatprep.subr.bf16.mxu0 0
        %1047 = vmatpush1.bf16.msra.mxu0 0
        %1048 = vmatprep.subr.bf16.mxu0 0
        %1049 = vmatpush1.bf16.msra.mxu0 0
        %1050 = vmatprep.subr.bf16.mxu0 0
        %1051 = vmatpush1.bf16.msra.mxu0 0
        %1052 = vmatprep.subr.bf16.mxu0 0
        %1053 = vmatpush1.bf16.msra.mxu0 0
        %1054 = vmatprep.subr.bf16.mxu0 0
        %1055 = vmatpush1.bf16.msra.mxu0 0
        %1056 = vmatprep.subr.bf16.mxu0 0
        %1057 = vmatpush1.bf16.msra.mxu0 0
        %1058 = vmatprep.subr.bf16.mxu0 0
        %1059 = vmatpush1.bf16.msra.mxu0 0
        %1060 = vmatprep.subr.bf16.mxu0 0
        %1061 = vmatpush1.bf16.msra.mxu0 0
        %1062 = vmatprep.subr.bf16.mxu0 0
        %1063 = vmatpush1.bf16.msra.mxu0 0
        %1064 = vmatprep.subr.bf16.mxu0 0
        %1065 = vmatpush1.bf16.msra.mxu0 0
        %1066 = vmatprep.subr.bf16.mxu0 0
        %1067 = vmatpush1.bf16.msra.mxu0 0
        %1068 = vmatprep.subr.bf16.mxu0 0
        %1069 = vmatpush1.bf16.msra.mxu0 0
        %1070 = vmatprep.subr.bf16.mxu0 0
        %1071 = vmatpush1.bf16.msra.mxu0 0
        %1072 = vmatprep.mubr.bf16.mxu0 0
        %1073 = vmatmul.mubr.bf16.gmra.mrb[0].mxu0 %v1017
        %v1074 = vpop.f32.mrb[0].mxu0
        %v1075 = vadd.f32 0.0, %v1074
        %v1076 = vpop.f32.mrb[0].mxu0
        %v1077 = vpop.f32.mrb[0].mxu0
        %v1078 = vadd.f32 0.0, %v1077
        %v1079 = vpop.f32.mrb[0].mxu0
        %1080 = vmatprep.mubr.bf16.mxu0 0
        %1081 = vmatmul.mubr.bf16.gmra.mrb[0].mxu0 %v1020
        %v1082 = vpop.f32.mrb[0].mxu0
        %v1083 = vadd.f32 0.0, %v1082
        %v1084 = vpop.f32.mrb[0].mxu0
        %v1085 = vpop.f32.mrb[0].mxu0
        %v1086 = vadd.f32 0.0, %v1085
        %v1087 = vpop.f32.mrb[0].mxu0
        %1088 = vmatprep.mubr.bf16.mxu0 0
        %1089 = vmatmul.mubr.bf16.gmra.mrb[0].mxu0 %v1023
        %v1090 = vpop.f32.mrb[0].mxu0
        %v1091 = vadd.f32 0.0, %v1090
        %v1092 = vpop.f32.mrb[0].mxu0
        %v1093 = vpop.f32.mrb[0].mxu0
        %v1094 = vadd.f32 0.0, %v1093
        %v1095 = vpop.f32.mrb[0].mxu0
        %1096 = vmatprep.mubr.bf16.mxu0 0
        %1097 = vmatmul.mubr.bf16.gmra.mrb[0].mxu0 %v1026
        %v1098 = vpop.f32.mrb[0].mxu0
        %v1099 = vadd.f32 0.0, %v1098
        %v1100 = vpop.f32.mrb[0].mxu0
        %v1101 = vpop.f32.mrb[0].mxu0
        %v1102 = vadd.f32 0.0, %v1101
        %v1103 = vpop.f32.mrb[0].mxu0
        %1104 = vmatprep.mubr.bf16.mxu0 0
        %1105 = vmatmul.mubr.bf16.gmra.mrb[0].mxu0 %v1029
        %v1106 = vpop.f32.mrb[0].mxu0
        %v1107 = vadd.f32 0.0, %v1106
        %v1108 = vpop.f32.mrb[0].mxu0
        %v1109 = vpop.f32.mrb[0].mxu0
        %v1110 = vadd.f32 0.0, %v1109
        %v1111 = vpop.f32.mrb[0].mxu0
        %1112 = vmatprep.mubr.bf16.mxu0 0
        %1113 = vmatmul.mubr.bf16.gmra.mrb[0].mxu0 %v1032
        %v1114 = vpop.f32.mrb[0].mxu0
        %v1115 = vadd.f32 0.0, %v1114
        %v1116 = vpop.f32.mrb[0].mxu0
        %v1117 = vpop.f32.mrb[0].mxu0
        %v1118 = vadd.f32 0.0, %v1117
        %v1119 = vpop.f32.mrb[0].mxu0
        %1120 = vmatprep.mubr.bf16.mxu0 0
        %1121 = vmatmul.mubr.bf16.gmra.mrb[0].mxu0 %v1035
        %v1122 = vpop.f32.mrb[0].mxu0
        %v1123 = vadd.f32 0.0, %v1122
        %v1124 = vpop.f32.mrb[0].mxu0
        %v1125 = vpop.f32.mrb[0].mxu0
        %v1126 = vadd.f32 0.0, %v1125
        %v1127 = vpop.f32.mrb[0].mxu0
        %1128 = vmatprep.mubr.bf16.mxu0 0
        %1129 = vmatmul.mubr.bf16.gmra.mrb[0].mxu0 %v1038
        %v1130 = vpop.f32.mrb[0].mxu0
        %v1131 = vadd.f32 0.0, %v1130
        %v1132 = vpop.f32.mrb[0].mxu0
        %v1133 = vpop.f32.mrb[0].mxu0
        %v1134 = vadd.f32 0.0, %v1133
        %v1135 = vpop.f32.mrb[0].mxu0
        %1136 = vdwg.mxu0
        %v1137 = vld [vmem:[#allocation8] sm:$0xff]
        %v1138 = vld [vmem:[#allocation8 + $0x8] sm:$0xff]
        %v1139 = vadd.f32 %v1075, %v1137
        %v1140 = vadd.f32 %v1078, %v1138
        %v1141 = vadd.f32 %v1083, %v1137
        %v1142 = vadd.f32 %v1086, %v1138
        %v1143 = vadd.f32 %v1091, %v1137
        %v1144 = vadd.f32 %v1094, %v1138
        %v1145 = vadd.f32 %v1099, %v1137
        %v1146 = vadd.f32 %v1102, %v1138
        %v1147 = vadd.f32 %v1107, %v1137
        %v1148 = vadd.f32 %v1110, %v1138
        %v1149 = vadd.f32 %v1115, %v1137
        %v1150 = vadd.f32 %v1118, %v1138
        %v1151 = vadd.f32 %v1123, %v1137
        %v1152 = vadd.f32 %v1126, %v1138
        %v1153 = vadd.f32 %v1131, %v1137
        %v1154 = vadd.f32 %v1134, %v1138
        %1155 = vrot.lane.b32.xlu0 %v743, 32
        %v1156 = vpop.permute.xlu0 %1155
        %v1158 = vmul.f32 %v743, %v1156
        %v1159 = vpack.c.bf16 %v1158, %v1158
        %1161 = vrot.lane.b32.xlu0 %v1159, 96
        %v1162 = vpop.permute.xlu0 %1161
        %v1164 = vsel %vm522, %v1162, 0
        %1166 = vmatprep.subr.bf16.mxu0 0
        %1167 = vmatpush1.bf16.msra.mxu0 %v1012
        %1168 = vmatprep.subr.bf16.mxu0 0
        %1169 = vmatpush1.bf16.msra.mxu0 %v1013
        %1170 = vmatprep.subr.bf16.mxu0 0
        %1171 = vmatpush1.bf16.msra.mxu0 0
        %1172 = vmatprep.subr.bf16.mxu0 0
        %1173 = vmatpush1.bf16.msra.mxu0 0
        %1174 = vmatprep.subr.bf16.mxu0 0
        %1175 = vmatpush1.bf16.msra.mxu0 0
        %1176 = vmatprep.subr.bf16.mxu0 0
        %1177 = vmatpush1.bf16.msra.mxu0 0
        %1178 = vmatprep.subr.bf16.mxu0 0
        %1179 = vmatpush1.bf16.msra.mxu0 0
        %1180 = vmatprep.subr.bf16.mxu0 0
        %1181 = vmatpush1.bf16.msra.mxu0 0
        %1182 = vmatprep.subr.bf16.mxu0 0
        %1183 = vmatpush1.bf16.msra.mxu0 0
        %1184 = vmatprep.subr.bf16.mxu0 0
        %1185 = vmatpush1.bf16.msra.mxu0 0
        %1186 = vmatprep.subr.bf16.mxu0 0
        %1187 = vmatpush1.bf16.msra.mxu0 0
        %1188 = vmatprep.subr.bf16.mxu0 0
        %1189 = vmatpush1.bf16.msra.mxu0 0
        %1190 = vmatprep.subr.bf16.mxu0 0
        %1191 = vmatpush1.bf16.msra.mxu0 0
        %1192 = vmatprep.subr.bf16.mxu0 0
        %1193 = vmatpush1.bf16.msra.mxu0 0
        %1194 = vmatprep.subr.bf16.mxu0 0
        %1195 = vmatpush1.bf16.msra.mxu0 0
        %1196 = vmatprep.subr.bf16.mxu0 0
        %1197 = vmatpush1.bf16.msra.mxu0 0
        %1198 = vmatprep.mubr.bf16.mxu0 0
        %1199 = vmatmul.mubr.bf16.gmra.mrb[0].mxu0 %v1164
        %v1200 = vpop.f32.mrb[0].mxu0
        %v1201 = vadd.f32 0.0, %v1200
        %v1202 = vpop.f32.mrb[0].mxu0
        %v1203 = vpop.f32.mrb[0].mxu0
        %v1204 = vpop.f32.mrb[0].mxu0
        %1205 = vdwg.mxu0
        %v1206 = vmax.f32 %v1139, %v1140
        %v1207 = vrot.slane %v1206, 4
        %v1208 = vmax.f32 %v1206, %v1207
        %v1209 = vrot.slane %v1208, 2
        %v1210 = vmax.f32 %v1208, %v1209
        %v1211 = vrot.slane %v1210, 1
        %v1212 = vmax.f32 %v1210, %v1211
        %v1213 = vmax.f32 %v1141, %v1142
        %v1214 = vrot.slane %v1213, 4
        %v1215 = vmax.f32 %v1213, %v1214
        %v1216 = vrot.slane %v1215, 2
        %v1217 = vmax.f32 %v1215, %v1216
        %v1218 = vrot.slane %v1217, 1
        %v1219 = vmax.f32 %v1217, %v1218
        %v1220 = vmax.f32 %v1143, %v1144
        %v1221 = vrot.slane %v1220, 4
        %v1222 = vmax.f32 %v1220, %v1221
        %v1223 = vrot.slane %v1222, 2
        %v1224 = vmax.f32 %v1222, %v1223
        %v1225 = vrot.slane %v1224, 1
        %v1226 = vmax.f32 %v1224, %v1225
        %v1227 = vmax.f32 %v1145, %v1146
        %v1228 = vrot.slane %v1227, 4
        %v1229 = vmax.f32 %v1227, %v1228
        %v1230 = vrot.slane %v1229, 2
        %v1231 = vmax.f32 %v1229, %v1230
        %v1232 = vrot.slane %v1231, 1
        %v1233 = vmax.f32 %v1231, %v1232
        %v1234 = vmax.f32 %v1147, %v1148
        %v1235 = vrot.slane %v1234, 4
        %v1236 = vmax.f32 %v1234, %v1235
        %v1237 = vrot.slane %v1236, 2
        %v1238 = vmax.f32 %v1236, %v1237
        %v1239 = vrot.slane %v1238, 1
        %v1240 = vmax.f32 %v1238, %v1239
        %v1241 = vmax.f32 %v1149, %v1150
        %v1242 = vrot.slane %v1241, 4
        %v1243 = vmax.f32 %v1241, %v1242
        %v1244 = vrot.slane %v1243, 2
        %v1245 = vmax.f32 %v1243, %v1244
        %v1246 = vrot.slane %v1245, 1
        %v1247 = vmax.f32 %v1245, %v1246
        %v1248 = vmax.f32 %v1151, %v1152
        %v1249 = vrot.slane %v1248, 4
        %v1250 = vmax.f32 %v1248, %v1249
        %v1251 = vrot.slane %v1250, 2
        %v1252 = vmax.f32 %v1250, %v1251
        %v1253 = vrot.slane %v1252, 1
        %v1254 = vmax.f32 %v1252, %v1253
        %v1255 = vmax.f32 %v1153, %v1154
        %v1256 = vrot.slane %v1255, 4
        %v1257 = vmax.f32 %v1255, %v1256
        %v1258 = vrot.slane %v1257, 2
        %v1259 = vmax.f32 %v1257, %v1258
        %v1260 = vrot.slane %v1259, 1
        %v1261 = vmax.f32 %v1259, %v1260
        %v1270 = vsel %vm672, %v1219, %v1212
        %v1271 = vsel %vm675, %v1226, %v1270
        %v1272 = vsel %vm678, %v1233, %v1271
        %v1273 = vsel %vm681, %v1240, %v1272
        %v1274 = vsel %vm684, %v1247, %v1273
        %v1275 = vsel %vm687, %v1254, %v1274
        %v1276 = vsel %vm690, %v1261, %v1275
        %v1278 = vmax.f32 %v1201, %v1276
        %v1279 = vsub.f32 %v1201, %v1278
        %v1280 = vmul.f32 %v1279, 1.442695
        %v1281 = vpow.pop %v1280
        %v1283 = vcombine.high %v1278, %v1278
        %v1285 = vunpack.c.l.s4 1966171168
        %v1286 = vunpack.c.0.s8 %v1285
        %v1287 = vlaneseq
        %v1288 = vshrl.u32 %v1287, 7
        %v1289 = vsub.s32 %v1286, %v1288
        %v1290 = vrot.slane %v1278, %v1289
        %v1292 = vunpack.c.l.s4 1966171168
        %v1293 = vunpack.c.0.s8 %v1292
        %v1294 = vlaneseq
        %v1295 = vshrl.u32 %v1294, 7
        %v1296 = vsub.s32 %v1293, %v1295
        %v1297 = vrot.slane %v1283, %v1296
        %v1298 = vcombine.high %v1290, %v1290
        %v1299 = vcombine.high %v1297, %v1297
        %v1301 = vunpack.c.l.s4 1966171168
        %v1302 = vunpack.c.0.s8 %v1301
        %v1303 = vlaneseq
        %v1304 = vshrl.u32 %v1303, 7
        %v1305 = vsub.s32 %v1302, %v1304
        %v1306 = vrot.slane %v1290, %v1305
        %v1308 = vunpack.c.l.s4 1966171168
        %v1309 = vunpack.c.0.s8 %v1308
        %v1310 = vlaneseq
        %v1311 = vshrl.u32 %v1310, 7
        %v1312 = vsub.s32 %v1309, %v1311
        %v1313 = vrot.slane %v1297, %v1312
        %v1315 = vunpack.c.l.s4 1966171168
        %v1316 = vunpack.c.0.s8 %v1315
        %v1317 = vlaneseq
        %v1318 = vshrl.u32 %v1317, 7
        %v1319 = vsub.s32 %v1316, %v1318
        %v1320 = vrot.slane %v1298, %v1319
        %v1322 = vunpack.c.l.s4 1966171168
        %v1323 = vunpack.c.0.s8 %v1322
        %v1324 = vlaneseq
        %v1325 = vshrl.u32 %v1324, 7
        %v1326 = vsub.s32 %v1323, %v1325
        %v1327 = vrot.slane %v1299, %v1326
        %v1328 = vcombine.high %v1306, %v1306
        %v1329 = vcombine.high %v1313, %v1313
        %v1330 = vcombine.high %v1320, %v1320
        %v1331 = vcombine.high %v1327, %v1327
        %v1332 = vlaneseq
        %v1333 = vshrl.u32 %v1332, 7
        %v1334 = vsub.s32 0, %v1333
        %v1335 = vrot.slane %v1306, %v1334
        %v1336 = vlaneseq
        %v1337 = vshrl.u32 %v1336, 7
        %v1338 = vsub.s32 0, %v1337
        %v1339 = vrot.slane %v1320, %v1338
        %v1340 = vlaneseq
        %v1341 = vshrl.u32 %v1340, 7
        %v1342 = vsub.s32 0, %v1341
        %v1343 = vrot.slane %v1328, %v1342
        %v1344 = vlaneseq
        %v1345 = vshrl.u32 %v1344, 7
        %v1346 = vsub.s32 0, %v1345
        %v1347 = vrot.slane %v1330, %v1346
        %v1348 = vlaneseq
        %v1349 = vshrl.u32 %v1348, 7
        %v1350 = vsub.s32 0, %v1349
        %v1351 = vrot.slane %v1313, %v1350
        %v1352 = vlaneseq
        %v1353 = vshrl.u32 %v1352, 7
        %v1354 = vsub.s32 0, %v1353
        %v1355 = vrot.slane %v1327, %v1354
        %v1356 = vlaneseq
        %v1357 = vshrl.u32 %v1356, 7
        %v1358 = vsub.s32 0, %v1357
        %v1359 = vrot.slane %v1329, %v1358
        %v1360 = vlaneseq
        %v1361 = vshrl.u32 %v1360, 7
        %v1362 = vsub.s32 0, %v1361
        %v1363 = vrot.slane %v1331, %v1362
        %v1372 = vsub.f32 %v1139, %v1335
        %v1373 = vsub.f32 %v1140, %v1335
        %v1374 = vsub.f32 %v1141, %v1339
        %v1375 = vsub.f32 %v1142, %v1339
        %v1376 = vsub.f32 %v1143, %v1343
        %v1377 = vsub.f32 %v1144, %v1343
        %v1378 = vsub.f32 %v1145, %v1347
        %v1379 = vsub.f32 %v1146, %v1347
        %v1380 = vsub.f32 %v1147, %v1351
        %v1381 = vsub.f32 %v1148, %v1351
        %v1382 = vsub.f32 %v1149, %v1355
        %v1383 = vsub.f32 %v1150, %v1355
        %v1384 = vsub.f32 %v1151, %v1359
        %v1385 = vsub.f32 %v1152, %v1359
        %v1386 = vsub.f32 %v1153, %v1363
        %v1387 = vsub.f32 %v1154, %v1363
        %v1388 = vmul.f32 %v1372, 1.442695
        %v1389 = vpow.pop %v1388
        %v1390 = vmul.f32 %v1373, 1.442695
        %v1391 = vpow.pop %v1390
        %v1392 = vmul.f32 %v1374, 1.442695
        %v1393 = vpow.pop %v1392
        %v1394 = vmul.f32 %v1375, 1.442695
        %v1395 = vpow.pop %v1394
        %v1396 = vmul.f32 %v1376, 1.442695
        %v1397 = vpow.pop %v1396
        %v1398 = vmul.f32 %v1377, 1.442695
        %v1399 = vpow.pop %v1398
        %v1400 = vmul.f32 %v1378, 1.442695
        %v1401 = vpow.pop %v1400
        %v1402 = vmul.f32 %v1379, 1.442695
        %v1403 = vpow.pop %v1402
        %v1404 = vmul.f32 %v1380, 1.442695
        %v1405 = vpow.pop %v1404
        %v1406 = vmul.f32 %v1381, 1.442695
        %v1407 = vpow.pop %v1406
        %v1408 = vmul.f32 %v1382, 1.442695
        %v1409 = vpow.pop %v1408
        %v1410 = vmul.f32 %v1383, 1.442695
        %v1411 = vpow.pop %v1410
        %v1412 = vmul.f32 %v1384, 1.442695
        %v1413 = vpow.pop %v1412
        %v1414 = vmul.f32 %v1385, 1.442695
        %v1415 = vpow.pop %v1414
        %v1416 = vmul.f32 %v1386, 1.442695
        %v1417 = vpow.pop %v1416
        %v1418 = vmul.f32 %v1387, 1.442695
        %v1419 = vpow.pop %v1418
        %v1420 = vadd.f32 %v1389, %v1391
        %v1421 = vrot.slane %v1420, 4
        %v1422 = vadd.f32 %v1420, %v1421
        %v1423 = vrot.slane %v1422, 2
        %v1424 = vadd.f32 %v1422, %v1423
        %v1425 = vrot.slane %v1424, 1
        %v1426 = vadd.f32 %v1424, %v1425
        %v1427 = vadd.f32 %v1393, %v1395
        %v1428 = vrot.slane %v1427, 4
        %v1429 = vadd.f32 %v1427, %v1428
        %v1430 = vrot.slane %v1429, 2
        %v1431 = vadd.f32 %v1429, %v1430
        %v1432 = vrot.slane %v1431, 1
        %v1433 = vadd.f32 %v1431, %v1432
        %v1434 = vadd.f32 %v1397, %v1399
        %v1435 = vrot.slane %v1434, 4
        %v1436 = vadd.f32 %v1434, %v1435
        %v1437 = vrot.slane %v1436, 2
        %v1438 = vadd.f32 %v1436, %v1437
        %v1439 = vrot.slane %v1438, 1
        %v1440 = vadd.f32 %v1438, %v1439
        %v1441 = vadd.f32 %v1401, %v1403
        %v1442 = vrot.slane %v1441, 4
        %v1443 = vadd.f32 %v1441, %v1442
        %v1444 = vrot.slane %v1443, 2
        %v1445 = vadd.f32 %v1443, %v1444
        %v1446 = vrot.slane %v1445, 1
        %v1447 = vadd.f32 %v1445, %v1446
        %v1448 = vadd.f32 %v1405, %v1407
        %v1449 = vrot.slane %v1448, 4
        %v1450 = vadd.f32 %v1448, %v1449
        %v1451 = vrot.slane %v1450, 2
        %v1452 = vadd.f32 %v1450, %v1451
        %v1453 = vrot.slane %v1452, 1
        %v1454 = vadd.f32 %v1452, %v1453
        %v1455 = vadd.f32 %v1409, %v1411
        %v1456 = vrot.slane %v1455, 4
        %v1457 = vadd.f32 %v1455, %v1456
        %v1458 = vrot.slane %v1457, 2
        %v1459 = vadd.f32 %v1457, %v1458
        %v1460 = vrot.slane %v1459, 1
        %v1461 = vadd.f32 %v1459, %v1460
        %v1462 = vadd.f32 %v1413, %v1415
        %v1463 = vrot.slane %v1462, 4
        %v1464 = vadd.f32 %v1462, %v1463
        %v1465 = vrot.slane %v1464, 2
        %v1466 = vadd.f32 %v1464, %v1465
        %v1467 = vrot.slane %v1466, 1
        %v1468 = vadd.f32 %v1466, %v1467
        %v1469 = vadd.f32 %v1417, %v1419
        %v1470 = vrot.slane %v1469, 4
        %v1471 = vadd.f32 %v1469, %v1470
        %v1472 = vrot.slane %v1471, 2
        %v1473 = vadd.f32 %v1471, %v1472
        %v1474 = vrot.slane %v1473, 1
        %v1475 = vadd.f32 %v1473, %v1474
        %v1484 = vsel %vm672, %v1433, %v1426
        %v1485 = vsel %vm675, %v1440, %v1484
        %v1486 = vsel %vm678, %v1447, %v1485
        %v1487 = vsel %vm681, %v1454, %v1486
        %v1488 = vsel %vm684, %v1461, %v1487
        %v1489 = vsel %vm687, %v1468, %v1488
        %v1490 = vsel %vm690, %v1475, %v1489
        %v1492 = vadd.f32 %v1281, %v1490
        %v1493 = vrcp.pop %v1492
        %v1494 = vmul.f32 %v1281, %v1493
        %v1496 = vcombine.high %v1493, %v1493
        %v1498 = vunpack.c.l.s4 1966171168
        %v1499 = vunpack.c.0.s8 %v1498
        %v1500 = vlaneseq
        %v1501 = vshrl.u32 %v1500, 7
        %v1502 = vsub.s32 %v1499, %v1501
        %v1503 = vrot.slane %v1493, %v1502
        %v1505 = vunpack.c.l.s4 1966171168
        %v1506 = vunpack.c.0.s8 %v1505
        %v1507 = vlaneseq
        %v1508 = vshrl.u32 %v1507, 7
        %v1509 = vsub.s32 %v1506, %v1508
        %v1510 = vrot.slane %v1496, %v1509
        %v1511 = vcombine.high %v1503, %v1503
        %v1512 = vcombine.high %v1510, %v1510
        %v1514 = vunpack.c.l.s4 1966171168
        %v1515 = vunpack.c.0.s8 %v1514
        %v1516 = vlaneseq
        %v1517 = vshrl.u32 %v1516, 7
        %v1518 = vsub.s32 %v1515, %v1517
        %v1519 = vrot.slane %v1503, %v1518
        %v1521 = vunpack.c.l.s4 1966171168
        %v1522 = vunpack.c.0.s8 %v1521
        %v1523 = vlaneseq
        %v1524 = vshrl.u32 %v1523, 7
        %v1525 = vsub.s32 %v1522, %v1524
        %v1526 = vrot.slane %v1510, %v1525
        %v1528 = vunpack.c.l.s4 1966171168
        %v1529 = vunpack.c.0.s8 %v1528
        %v1530 = vlaneseq
        %v1531 = vshrl.u32 %v1530, 7
        %v1532 = vsub.s32 %v1529, %v1531
        %v1533 = vrot.slane %v1511, %v1532
        %v1535 = vunpack.c.l.s4 1966171168
        %v1536 = vunpack.c.0.s8 %v1535
        %v1537 = vlaneseq
        %v1538 = vshrl.u32 %v1537, 7
        %v1539 = vsub.s32 %v1536, %v1538
        %v1540 = vrot.slane %v1512, %v1539
        %v1541 = vcombine.high %v1519, %v1519
        %v1542 = vcombine.high %v1526, %v1526
        %v1543 = vcombine.high %v1533, %v1533
        %v1544 = vcombine.high %v1540, %v1540
        %v1545 = vlaneseq
        %v1546 = vshrl.u32 %v1545, 7
        %v1547 = vsub.s32 0, %v1546
        %v1548 = vrot.slane %v1519, %v1547
        %v1549 = vlaneseq
        %v1550 = vshrl.u32 %v1549, 7
        %v1551 = vsub.s32 0, %v1550
        %v1552 = vrot.slane %v1533, %v1551
        %v1553 = vlaneseq
        %v1554 = vshrl.u32 %v1553, 7
        %v1555 = vsub.s32 0, %v1554
        %v1556 = vrot.slane %v1541, %v1555
        %v1557 = vlaneseq
        %v1558 = vshrl.u32 %v1557, 7
        %v1559 = vsub.s32 0, %v1558
        %v1560 = vrot.slane %v1543, %v1559
        %v1561 = vlaneseq
        %v1562 = vshrl.u32 %v1561, 7
        %v1563 = vsub.s32 0, %v1562
        %v1564 = vrot.slane %v1526, %v1563
        %v1565 = vlaneseq
        %v1566 = vshrl.u32 %v1565, 7
        %v1567 = vsub.s32 0, %v1566
        %v1568 = vrot.slane %v1540, %v1567
        %v1569 = vlaneseq
        %v1570 = vshrl.u32 %v1569, 7
        %v1571 = vsub.s32 0, %v1570
        %v1572 = vrot.slane %v1542, %v1571
        %v1573 = vlaneseq
        %v1574 = vshrl.u32 %v1573, 7
        %v1575 = vsub.s32 0, %v1574
        %v1576 = vrot.slane %v1544, %v1575
        %v1585 = vmul.f32 %v1389, %v1548
        %v1586 = vmul.f32 %v1391, %v1548
        %v1587 = vmul.f32 %v1393, %v1552
        %v1588 = vmul.f32 %v1395, %v1552
        %v1589 = vmul.f32 %v1397, %v1556
        %v1590 = vmul.f32 %v1399, %v1556
        %v1591 = vmul.f32 %v1401, %v1560
        %v1592 = vmul.f32 %v1403, %v1560
        %v1593 = vmul.f32 %v1405, %v1564
        %v1594 = vmul.f32 %v1407, %v1564
        %v1595 = vmul.f32 %v1409, %v1568
        %v1596 = vmul.f32 %v1411, %v1568
        %v1597 = vmul.f32 %v1413, %v1572
        %v1598 = vmul.f32 %v1415, %v1572
        %v1599 = vmul.f32 %v1417, %v1576
        %v1600 = vmul.f32 %v1419, %v1576
        %v1601 = vpack.c.bf16 %v1494, %v1494
        %v1602 = vld [vmem:[#allocation17] sm:$0xf]
        %v1603 = vld [vmem:[#allocation17 + $0x4] sm:$0xf]
        %v1604 = vld [vmem:[#allocation17 + $0x8] sm:$0xf]
        %v1605 = vld [vmem:[#allocation17 + $0xc] sm:$0xf]
        %v1606 = vld [vmem:[#allocation17 + $0x10] sm:$0xf]
        %v1607 = vld [vmem:[#allocation17 + $0x14] sm:$0xf]
        %v1608 = vld [vmem:[#allocation17 + $0x18] sm:$0xf]
        %v1609 = vld [vmem:[#allocation17 + $0x1c] sm:$0xf]
        %v1610 = vld [vmem:[#allocation17 + $0x20] sm:$0xf]
        %v1611 = vld [vmem:[#allocation17 + $0x24] sm:$0xf]
        %v1612 = vld [vmem:[#allocation17 + $0x28] sm:$0xf]
        %v1613 = vld [vmem:[#allocation17 + $0x2c] sm:$0xf]
        %v1614 = vld [vmem:[#allocation17 + $0x30] sm:$0xf]
        %v1615 = vld [vmem:[#allocation17 + $0x34] sm:$0xf]
        %v1616 = vld [vmem:[#allocation17 + $0x38] sm:$0xf]
        %v1617 = vld [vmem:[#allocation17 + $0x3c] sm:$0xf]
        %v1634 = vunpack.c.l.b16 %v1602
        %v1635 = vunpack.c.l.b16 %v1603
        %v1636 = vunpack.c.l.b16 %v1604
        %v1637 = vunpack.c.l.b16 %v1605
        %v1638 = vunpack.c.l.b16 %v1606
        %v1639 = vunpack.c.l.b16 %v1607
        %v1640 = vunpack.c.l.b16 %v1608
        %v1641 = vunpack.c.l.b16 %v1609
        %v1642 = vunpack.c.l.b16 %v1610
        %v1643 = vunpack.c.l.b16 %v1611
        %v1644 = vunpack.c.l.b16 %v1612
        %v1645 = vunpack.c.l.b16 %v1613
        %v1646 = vunpack.c.l.b16 %v1614
        %v1647 = vunpack.c.l.b16 %v1615
        %v1648 = vunpack.c.l.b16 %v1616
        %v1649 = vunpack.c.l.b16 %v1617
        %v1650 = vpack.c.b16 %v1635, %v1634
        %v1651 = vpack.c.b16 %v1637, %v1636
        %v1652 = vpack.c.b16 %v1639, %v1638
        %v1653 = vpack.c.b16 %v1641, %v1640
        %v1654 = vpack.c.b16 %v1643, %v1642
        %v1655 = vpack.c.b16 %v1645, %v1644
        %v1656 = vpack.c.b16 %v1647, %v1646
        %v1657 = vpack.c.b16 %v1649, %v1648
        %1666 = vmatprep.subr.bf16.mxu0 0
        %1667 = vmatpush1.bf16.msra.mxu0 %v1650
        %1668 = vmatprep.subr.bf16.mxu0 0
        %1669 = vmatpush1.bf16.msra.mxu0 %v1651
        %1670 = vmatprep.subr.bf16.mxu0 0
        %1671 = vmatpush1.bf16.msra.mxu0 %v1652
        %1672 = vmatprep.subr.bf16.mxu0 0
        %1673 = vmatpush1.bf16.msra.mxu0 %v1653
        %1674 = vmatprep.subr.bf16.mxu0 0
        %1675 = vmatpush1.bf16.msra.mxu0 %v1654
        %1676 = vmatprep.subr.bf16.mxu0 0
        %1677 = vmatpush1.bf16.msra.mxu0 %v1655
        %1678 = vmatprep.subr.bf16.mxu0 0
        %1679 = vmatpush1.bf16.msra.mxu0 %v1656
        %1680 = vmatprep.subr.bf16.mxu0 0
        %1681 = vmatpush1.bf16.msra.mxu0 %v1657
        %1682 = vmatprep.subr.bf16.mxu0 0
        %1683 = vmatpush1.bf16.msra.mxu0 0
        %1684 = vmatprep.subr.bf16.mxu0 0
        %1685 = vmatpush1.bf16.msra.mxu0 0
        %1686 = vmatprep.subr.bf16.mxu0 0
        %1687 = vmatpush1.bf16.msra.mxu0 0
        %1688 = vmatprep.subr.bf16.mxu0 0
        %1689 = vmatpush1.bf16.msra.mxu0 0
        %1690 = vmatprep.subr.bf16.mxu0 0
        %1691 = vmatpush1.bf16.msra.mxu0 0
        %1692 = vmatprep.subr.bf16.mxu0 0
        %1693 = vmatpush1.bf16.msra.mxu0 0
        %1694 = vmatprep.subr.bf16.mxu0 0
        %1695 = vmatpush1.bf16.msra.mxu0 0
        %1696 = vmatprep.subr.bf16.mxu0 0
        %1697 = vmatpush1.bf16.msra.mxu0 0
        %1698 = vmatprep.mubr.bf16.mxu0 0
        %1699 = vmatmul.mubr.bf16.gmra.mrb[0].mxu0 %v1601
        %v1700 = vpop.f32.mrb[0].mxu0
        %v1701 = vadd.f32 0.0, %v1700
        %v1702 = vpop.f32.mrb[0].mxu0
        %v1703 = vpop.f32.mrb[0].mxu0
        %v1704 = vpop.f32.mrb[0].mxu0
        %1705 = vdwg.mxu0
        %v1706 = vpack.c.bf16 %v1586, %v1585
        %v1707 = vpack.c.bf16 %v1588, %v1587
        %v1708 = vpack.c.bf16 %v1590, %v1589
        %v1709 = vpack.c.bf16 %v1592, %v1591
        %v1710 = vpack.c.bf16 %v1594, %v1593
        %v1711 = vpack.c.bf16 %v1596, %v1595
        %v1712 = vpack.c.bf16 %v1598, %v1597
        %v1713 = vpack.c.bf16 %v1600, %v1599
        %1714 = vmatprep.subr.bf16.mxu0 0
        %1715 = vmatpush1.bf16.msra.mxu0 %v1650
        %1716 = vmatprep.subr.bf16.mxu0 0
        %1717 = vmatpush1.bf16.msra.mxu0 %v1651
        %1718 = vmatprep.subr.bf16.mxu0 0
        %1719 = vmatpush1.bf16.msra.mxu0 %v1652
        %1720 = vmatprep.subr.bf16.mxu0 0
        %1721 = vmatpush1.bf16.msra.mxu0 %v1653
        %1722 = vmatprep.subr.bf16.mxu0 0
        %1723 = vmatpush1.bf16.msra.mxu0 %v1654
        %1724 = vmatprep.subr.bf16.mxu0 0
        %1725 = vmatpush1.bf16.msra.mxu0 %v1655
        %1726 = vmatprep.subr.bf16.mxu0 0
        %1727 = vmatpush1.bf16.msra.mxu0 %v1656
        %1728 = vmatprep.subr.bf16.mxu0 0
        %1729 = vmatpush1.bf16.msra.mxu0 %v1657
        %1730 = vmatprep.subr.bf16.mxu0 0
        %1731 = vmatpush1.bf16.msra.mxu0 0
        %1732 = vmatprep.subr.bf16.mxu0 0
        %1733 = vmatpush1.bf16.msra.mxu0 0
        %1734 = vmatprep.subr.bf16.mxu0 0
        %1735 = vmatpush1.bf16.msra.mxu0 0
        %1736 = vmatprep.subr.bf16.mxu0 0
        %1737 = vmatpush1.bf16.msra.mxu0 0
        %1738 = vmatprep.subr.bf16.mxu0 0
        %1739 = vmatpush1.bf16.msra.mxu0 0
        %1740 = vmatprep.subr.bf16.mxu0 0
        %1741 = vmatpush1.bf16.msra.mxu0 0
        %1742 = vmatprep.subr.bf16.mxu0 0
        %1743 = vmatpush1.bf16.msra.mxu0 0
        %1744 = vmatprep.subr.bf16.mxu0 0
        %1745 = vmatpush1.bf16.msra.mxu0 0
        %1746 = vmatprep.mubr.bf16.mxu0 0
        %1747 = vmatmul.mubr.bf16.gmra.mrb[0].mxu0 %v1706
        %v1748 = vpop.f32.mrb[0].mxu0
        %v1749 = vadd.f32 0.0, %v1748
        %v1750 = vpop.f32.mrb[0].mxu0
        %v1751 = vpop.f32.mrb[0].mxu0
        %v1752 = vadd.f32 0.0, %v1751
        %v1753 = vpop.f32.mrb[0].mxu0
        %1754 = vmatprep.mubr.bf16.mxu0 0
        %1755 = vmatmul.mubr.bf16.gmra.mrb[0].mxu0 %v1707
        %v1756 = vpop.f32.mrb[0].mxu0
        %v1757 = vadd.f32 0.0, %v1756
        %v1758 = vpop.f32.mrb[0].mxu0
        %v1759 = vpop.f32.mrb[0].mxu0
        %v1760 = vadd.f32 0.0, %v1759
        %v1761 = vpop.f32.mrb[0].mxu0
        %1762 = vmatprep.mubr.bf16.mxu0 0
        %1763 = vmatmul.mubr.bf16.gmra.mrb[0].mxu0 %v1708
        %v1764 = vpop.f32.mrb[0].mxu0
        %v1765 = vadd.f32 0.0, %v1764
        %v1766 = vpop.f32.mrb[0].mxu0
        %v1767 = vpop.f32.mrb[0].mxu0
        %v1768 = vadd.f32 0.0, %v1767
        %v1769 = vpop.f32.mrb[0].mxu0
        %1770 = vmatprep.mubr.bf16.mxu0 0
        %1771 = vmatmul.mubr.bf16.gmra.mrb[0].mxu0 %v1709
        %v1772 = vpop.f32.mrb[0].mxu0
        %v1773 = vadd.f32 0.0, %v1772
        %v1774 = vpop.f32.mrb[0].mxu0
        %v1775 = vpop.f32.mrb[0].mxu0
        %v1776 = vadd.f32 0.0, %v1775
        %v1777 = vpop.f32.mrb[0].mxu0
        %1778 = vmatprep.mubr.bf16.mxu0 0
        %1779 = vmatmul.mubr.bf16.gmra.mrb[0].mxu0 %v1710
        %v1780 = vpop.f32.mrb[0].mxu0
        %v1781 = vadd.f32 0.0, %v1780
        %v1782 = vpop.f32.mrb[0].mxu0
        %v1783 = vpop.f32.mrb[0].mxu0
        %v1784 = vadd.f32 0.0, %v1783
        %v1785 = vpop.f32.mrb[0].mxu0
        %1786 = vmatprep.mubr.bf16.mxu0 0
        %1787 = vmatmul.mubr.bf16.gmra.mrb[0].mxu0 %v1711
        %v1788 = vpop.f32.mrb[0].mxu0
        %v1789 = vadd.f32 0.0, %v1788
        %v1790 = vpop.f32.mrb[0].mxu0
        %v1791 = vpop.f32.mrb[0].mxu0
        %v1792 = vadd.f32 0.0, %v1791
        %v1793 = vpop.f32.mrb[0].mxu0
        %1794 = vmatprep.mubr.bf16.mxu0 0
        %1795 = vmatmul.mubr.bf16.gmra.mrb[0].mxu0 %v1712
        %v1796 = vpop.f32.mrb[0].mxu0
        %v1797 = vadd.f32 0.0, %v1796
        %v1798 = vpop.f32.mrb[0].mxu0
        %v1799 = vpop.f32.mrb[0].mxu0
        %v1800 = vadd.f32 0.0, %v1799
        %v1801 = vpop.f32.mrb[0].mxu0
        %1802 = vmatprep.mubr.bf16.mxu0 0
        %1803 = vmatmul.mubr.bf16.gmra.mrb[0].mxu0 %v1713
        %v1804 = vpop.f32.mrb[0].mxu0
        %v1805 = vadd.f32 0.0, %v1804
        %v1806 = vpop.f32.mrb[0].mxu0
        %v1807 = vpop.f32.mrb[0].mxu0
        %v1808 = vadd.f32 0.0, %v1807
        %v1809 = vpop.f32.mrb[0].mxu0
        %1810 = vdwg.mxu0
        %v1811 = vld [vmem:[#allocation10] sm:$0xf]
        %v1812 = vld [vmem:[#allocation10 + $0x4] sm:$0xf]
        %v1813 = vld [vmem:[#allocation10 + $0x8] sm:$0xf]
        %v1814 = vld [vmem:[#allocation10 + $0xc] sm:$0xf]
        %v1815 = vld [vmem:[#allocation11] sm:$0x1]
        %v1817 = vlaneseq
        %v1818 = vshrl.u32 %v1817, 7
        %v1819 = vsub.s32 0, %v1818
        %v1820 = vrot.slane %v1815, %v1819
        %v1825 = vunpack.c.l.b16 %v1811
        %v1826 = vunpack.c.l.b16 %v1812
        %v1827 = vunpack.c.l.b16 %v1813
        %v1828 = vunpack.c.l.b16 %v1814
        %v1829 = vpack.c.b16 %v1826, %v1825
        %v1830 = vpack.c.b16 %v1828, %v1827
        %1831 = vrot.lane.b32.xlu0 %v1829, 64
        %v1832 = vpop.permute.xlu0 %1831
        %1833 = vrot.lane.b32.xlu0 %v1830, 64
        %v1834 = vpop.permute.xlu0 %1833
        %1837 = vrot.lane.b32.xlu0 %v1820, 64
        %v1838 = vpop.permute.xlu0 %1837
        %1840 = vmatprep.subr.bf16.mxu0 0
        %1841 = vmatpush1.bf16.msra.mxu0 %v1832
        %1842 = vmatprep.subr.bf16.mxu0 0
        %1843 = vmatpush1.bf16.msra.mxu0 %v1834
        %1844 = vmatprep.subr.bf16.mxu0 0
        %1845 = vmatpush1.bf16.msra.mxu0 0
        %1846 = vmatprep.subr.bf16.mxu0 0
        %1847 = vmatpush1.bf16.msra.mxu0 0
        %1848 = vmatprep.subr.bf16.mxu0 0
        %1849 = vmatpush1.bf16.msra.mxu0 0
        %1850 = vmatprep.subr.bf16.mxu0 0
        %1851 = vmatpush1.bf16.msra.mxu0 0
        %1852 = vmatprep.subr.bf16.mxu0 0
        %1853 = vmatpush1.bf16.msra.mxu0 0
        %1854 = vmatprep.subr.bf16.mxu0 0
        %1855 = vmatpush1.bf16.msra.mxu0 0
        %1856 = vmatprep.subr.bf16.mxu0 0
        %1857 = vmatpush1.bf16.msra.mxu0 0
        %1858 = vmatprep.subr.bf16.mxu0 0
        %1859 = vmatpush1.bf16.msra.mxu0 0
        %1860 = vmatprep.subr.bf16.mxu0 0
        %1861 = vmatpush1.bf16.msra.mxu0 0
        %1862 = vmatprep.subr.bf16.mxu0 0
        %1863 = vmatpush1.bf16.msra.mxu0 0
        %1864 = vmatprep.subr.bf16.mxu0 0
        %1865 = vmatpush1.bf16.msra.mxu0 0
        %1866 = vmatprep.subr.bf16.mxu0 0
        %1867 = vmatpush1.bf16.msra.mxu0 0
        %1868 = vmatprep.subr.bf16.mxu0 0
        %1869 = vmatpush1.bf16.msra.mxu0 0
        %1870 = vmatprep.subr.bf16.mxu0 0
        %1871 = vmatpush1.bf16.msra.mxu0 0
        %1872 = vmatprep.mubr.bf16.mxu0 0
        %1873 = vmatmul.mubr.bf16.gmra.mrb[0].mxu0 %v766
        %v1874 = vpop.f32.mrb[0].mxu0
        %v1875 = vadd.f32 %v1838, %v1874
        %v1876 = vpop.f32.mrb[0].mxu0
        %v1877 = vpop.f32.mrb[0].mxu0
        %v1878 = vadd.f32 %v1838, %v1877
        %v1879 = vpop.f32.mrb[0].mxu0
        %1880 = vmatprep.mubr.bf16.mxu0 0
        %1881 = vmatmul.mubr.bf16.gmra.mrb[0].mxu0 %v769
        %v1882 = vpop.f32.mrb[0].mxu0
        %v1883 = vadd.f32 %v1838, %v1882
        %v1884 = vpop.f32.mrb[0].mxu0
        %v1885 = vpop.f32.mrb[0].mxu0
        %v1886 = vadd.f32 %v1838, %v1885
        %v1887 = vpop.f32.mrb[0].mxu0
        %1888 = vmatprep.mubr.bf16.mxu0 0
        %1889 = vmatmul.mubr.bf16.gmra.mrb[0].mxu0 %v772
        %v1890 = vpop.f32.mrb[0].mxu0
        %v1891 = vadd.f32 %v1838, %v1890
        %v1892 = vpop.f32.mrb[0].mxu0
        %v1893 = vpop.f32.mrb[0].mxu0
        %v1894 = vadd.f32 %v1838, %v1893
        %v1895 = vpop.f32.mrb[0].mxu0
        %1896 = vmatprep.mubr.bf16.mxu0 0
        %1897 = vmatmul.mubr.bf16.gmra.mrb[0].mxu0 %v775
        %v1898 = vpop.f32.mrb[0].mxu0
        %v1899 = vadd.f32 %v1838, %v1898
        %v1900 = vpop.f32.mrb[0].mxu0
        %v1901 = vpop.f32.mrb[0].mxu0
        %v1902 = vadd.f32 %v1838, %v1901
        %v1903 = vpop.f32.mrb[0].mxu0
        %1904 = vmatprep.mubr.bf16.mxu0 0
        %1905 = vmatmul.mubr.bf16.gmra.mrb[0].mxu0 %v778
        %v1906 = vpop.f32.mrb[0].mxu0
        %v1907 = vadd.f32 %v1838, %v1906
        %v1908 = vpop.f32.mrb[0].mxu0
        %v1909 = vpop.f32.mrb[0].mxu0
        %v1910 = vadd.f32 %v1838, %v1909
        %v1911 = vpop.f32.mrb[0].mxu0
        %1912 = vmatprep.mubr.bf16.mxu0 0
        %1913 = vmatmul.mubr.bf16.gmra.mrb[0].mxu0 %v781
        %v1914 = vpop.f32.mrb[0].mxu0
        %v1915 = vadd.f32 %v1838, %v1914
        %v1916 = vpop.f32.mrb[0].mxu0
        %v1917 = vpop.f32.mrb[0].mxu0
        %v1918 = vadd.f32 %v1838, %v1917
        %v1919 = vpop.f32.mrb[0].mxu0
        %1920 = vmatprep.mubr.bf16.mxu0 0
        %1921 = vmatmul.mubr.bf16.gmra.mrb[0].mxu0 %v784
        %v1922 = vpop.f32.mrb[0].mxu0
        %v1923 = vadd.f32 %v1838, %v1922
        %v1924 = vpop.f32.mrb[0].mxu0
        %v1925 = vpop.f32.mrb[0].mxu0
        %v1926 = vadd.f32 %v1838, %v1925
        %v1927 = vpop.f32.mrb[0].mxu0
        %1928 = vmatprep.mubr.bf16.mxu0 0
        %1929 = vmatmul.mubr.bf16.gmra.mrb[0].mxu0 %v787
        %v1930 = vpop.f32.mrb[0].mxu0
        %v1931 = vadd.f32 %v1838, %v1930
        %v1932 = vpop.f32.mrb[0].mxu0
        %v1933 = vpop.f32.mrb[0].mxu0
        %v1934 = vadd.f32 %v1838, %v1933
        %v1935 = vpop.f32.mrb[0].mxu0
        %1936 = vdwg.mxu0
        %1937 = vrot.lane.b32.xlu0 %v743, 64
        %v1938 = vpop.permute.xlu0 %1937
        %v1940 = vmul.f32 %v1701, %v1938
        %v1941 = vmul.f32 %v1749, %v1875
        %v1942 = vmul.f32 %v1752, %v1878
        %v1943 = vmul.f32 %v1757, %v1883
        %v1944 = vmul.f32 %v1760, %v1886
        %v1945 = vmul.f32 %v1765, %v1891
        %v1946 = vmul.f32 %v1768, %v1894
        %v1947 = vmul.f32 %v1773, %v1899
        %v1948 = vmul.f32 %v1776, %v1902
        %v1949 = vmul.f32 %v1781, %v1907
        %v1950 = vmul.f32 %v1784, %v1910
        %v1951 = vmul.f32 %v1789, %v1915
        %v1952 = vmul.f32 %v1792, %v1918
        %v1953 = vmul.f32 %v1797, %v1923
        %v1954 = vmul.f32 %v1800, %v1926
        %v1955 = vmul.f32 %v1805, %v1931
        %v1956 = vmul.f32 %v1808, %v1934
        %v1957 = vsel %vm522, %v1941, 0.0
        %v1958 = vsel %vm522, %v1942, 0.0
        %v1959 = vadd.f32 %v1957, %v1958
        %v1960 = vrot.slane %v1959, 4
        %v1961 = vadd.f32 %v1959, %v1960
        %v1962 = vrot.slane %v1961, 2
        %v1963 = vadd.f32 %v1961, %v1962
        %v1964 = vrot.slane %v1963, 1
        %v1965 = vadd.f32 %v1963, %v1964
        %v1966 = vsel %vm522, %v1943, 0.0
        %v1967 = vsel %vm522, %v1944, 0.0
        %v1968 = vadd.f32 %v1966, %v1967
        %v1969 = vrot.slane %v1968, 4
        %v1970 = vadd.f32 %v1968, %v1969
        %v1971 = vrot.slane %v1970, 2
        %v1972 = vadd.f32 %v1970, %v1971
        %v1973 = vrot.slane %v1972, 1
        %v1974 = vadd.f32 %v1972, %v1973
        %v1975 = vsel %vm522, %v1945, 0.0
        %v1976 = vsel %vm522, %v1946, 0.0
        %v1977 = vadd.f32 %v1975, %v1976
        %v1978 = vrot.slane %v1977, 4
        %v1979 = vadd.f32 %v1977, %v1978
        %v1980 = vrot.slane %v1979, 2
        %v1981 = vadd.f32 %v1979, %v1980
        %v1982 = vrot.slane %v1981, 1
        %v1983 = vadd.f32 %v1981, %v1982
        %v1984 = vsel %vm522, %v1947, 0.0
        %v1985 = vsel %vm522, %v1948, 0.0
        %v1986 = vadd.f32 %v1984, %v1985
        %v1987 = vrot.slane %v1986, 4
        %v1988 = vadd.f32 %v1986, %v1987
        %v1989 = vrot.slane %v1988, 2
        %v1990 = vadd.f32 %v1988, %v1989
        %v1991 = vrot.slane %v1990, 1
        %v1992 = vadd.f32 %v1990, %v1991
        %v1993 = vsel %vm522, %v1949, 0.0
        %v1994 = vsel %vm522, %v1950, 0.0
        %v1995 = vadd.f32 %v1993, %v1994
        %v1996 = vrot.slane %v1995, 4
        %v1997 = vadd.f32 %v1995, %v1996
        %v1998 = vrot.slane %v1997, 2
        %v1999 = vadd.f32 %v1997, %v1998
        %v2000 = vrot.slane %v1999, 1
        %v2001 = vadd.f32 %v1999, %v2000
        %v2002 = vsel %vm522, %v1951, 0.0
        %v2003 = vsel %vm522, %v1952, 0.0
        %v2004 = vadd.f32 %v2002, %v2003
        %v2005 = vrot.slane %v2004, 4
        %v2006 = vadd.f32 %v2004, %v2005
        %v2007 = vrot.slane %v2006, 2
        %v2008 = vadd.f32 %v2006, %v2007
        %v2009 = vrot.slane %v2008, 1
        %v2010 = vadd.f32 %v2008, %v2009
        %v2011 = vsel %vm522, %v1953, 0.0
        %v2012 = vsel %vm522, %v1954, 0.0
        %v2013 = vadd.f32 %v2011, %v2012
        %v2014 = vrot.slane %v2013, 4
        %v2015 = vadd.f32 %v2013, %v2014
        %v2016 = vrot.slane %v2015, 2
        %v2017 = vadd.f32 %v2015, %v2016
        %v2018 = vrot.slane %v2017, 1
        %v2019 = vadd.f32 %v2017, %v2018
        %v2020 = vsel %vm522, %v1955, 0.0
        %v2021 = vsel %vm522, %v1956, 0.0
        %v2022 = vadd.f32 %v2020, %v2021
        %v2023 = vrot.slane %v2022, 4
        %v2024 = vadd.f32 %v2022, %v2023
        %v2025 = vrot.slane %v2024, 2
        %v2026 = vadd.f32 %v2024, %v2025
        %v2027 = vrot.slane %v2026, 1
        %v2028 = vadd.f32 %v2026, %v2027
        %v2037 = vsel %vm672, %v1974, %v1965
        %v2038 = vsel %vm675, %v1983, %v2037
        %v2039 = vsel %vm678, %v1992, %v2038
        %v2040 = vsel %vm681, %v2001, %v2039
        %v2041 = vsel %vm684, %v2010, %v2040
        %v2042 = vsel %vm687, %v2019, %v2041
        %v2043 = vsel %vm690, %v2028, %v2042
        %v2045 = vadd.f32 %v1940, %v2043
        %v2046 = vpack.c.bf16 %v2045, %v2045
        %v2047 = vld [vmem:[#allocation13] sm:$0xf]
        %v2048 = vld [vmem:[#allocation13 + $0x4] sm:$0xf]
        %v2049 = vld [vmem:[#allocation13 + $0x8] sm:$0xf]
        %v2050 = vld [vmem:[#allocation13 + $0xc] sm:$0xf]
        %v2051 = vld [vmem:[#allocation14] sm:$0x1]
        %v2053 = vlaneseq
        %v2054 = vshrl.u32 %v2053, 7
        %v2055 = vsub.s32 0, %v2054
        %v2056 = vrot.slane %v2051, %v2055
        %v2062 = vunpack.c.l.b16 %v2047
        %v2063 = vunpack.c.l.b16 %v2048
        %v2064 = vunpack.c.l.b16 %v2049
        %v2065 = vunpack.c.l.b16 %v2050
        %v2066 = vpack.c.b16 %v2063, %v2062
        %v2067 = vpack.c.b16 %v2065, %v2064
        %v2071 = vsel %vm522, %v2046, 0
        %2073 = vmatprep.subr.bf16.mxu0 0
        %2074 = vmatpush1.bf16.msra.mxu0 %v2066
        %2075 = vmatprep.subr.bf16.mxu0 0
        %2076 = vmatpush1.bf16.msra.mxu0 %v2067
        %2077 = vmatprep.subr.bf16.mxu0 0
        %2078 = vmatpush1.bf16.msra.mxu0 0
        %2079 = vmatprep.subr.bf16.mxu0 0
        %2080 = vmatpush1.bf16.msra.mxu0 0
        %2081 = vmatprep.subr.bf16.mxu0 0
        %2082 = vmatpush1.bf16.msra.mxu0 0
        %2083 = vmatprep.subr.bf16.mxu0 0
        %2084 = vmatpush1.bf16.msra.mxu0 0
        %2085 = vmatprep.subr.bf16.mxu0 0
        %2086 = vmatpush1.bf16.msra.mxu0 0
        %2087 = vmatprep.subr.bf16.mxu0 0
        %2088 = vmatpush1.bf16.msra.mxu0 0
        %2089 = vmatprep.subr.bf16.mxu0 0
        %2090 = vmatpush1.bf16.msra.mxu0 0
        %2091 = vmatprep.subr.bf16.mxu0 0
        %2092 = vmatpush1.bf16.msra.mxu0 0
        %2093 = vmatprep.subr.bf16.mxu0 0
        %2094 = vmatpush1.bf16.msra.mxu0 0
        %2095 = vmatprep.subr.bf16.mxu0 0
        %2096 = vmatpush1.bf16.msra.mxu0 0
        %2097 = vmatprep.subr.bf16.mxu0 0
        %2098 = vmatpush1.bf16.msra.mxu0 0
        %2099 = vmatprep.subr.bf16.mxu0 0
        %2100 = vmatpush1.bf16.msra.mxu0 0
        %2101 = vmatprep.subr.bf16.mxu0 0
        %2102 = vmatpush1.bf16.msra.mxu0 0
        %2103 = vmatprep.subr.bf16.mxu0 0
        %2104 = vmatpush1.bf16.msra.mxu0 0
        %2105 = vmatprep.mubr.bf16.mxu0 0
        %2106 = vmatmul.mubr.bf16.gmra.mrb[0].mxu0 %v2071
        %v2107 = vpop.f32.mrb[0].mxu0
        %v2108 = vadd.f32 %v2056, %v2107
        %v2109 = vpop.f32.mrb[0].mxu0
        %v2110 = vpop.f32.mrb[0].mxu0
        %v2111 = vpop.f32.mrb[0].mxu0
        %2112 = vdwg.mxu0
        %vm2113 = vcmask 130048
        %2114 = vst.msk [vmem:[%s503] sm:$0xff] %vm2113, %v2108
        %s2115 = sand.u32 %s255, 1
        %s2116 = scalar_lea.sflag [#allocation4], %s2115
        %s2117 = sand.u32 %s255, 1
        %s2118 = smul.addr %s2117, 8
        %s2119 = scalar_lea.vmem [#allocation19], %s2118
        // Predicated region
        $region101: #{tpu_custom_call.1} parent=59 // pred_check
          %p2120 = pneg %p265
        $region102: #{tpu_custom_call.1} parent=59 // pred_check_branch
          %2122 = sbr.rel (%p2120) target = $region104
        $region103: #{tpu_custom_call.1} parent=59 // pred_region
          %s2124 = ssub.s32 128, 128
          %2125 = vsyncadd %s2116, %s2124
          %s2126 = smul.addr %s32, 128
          %s2127 = scalar_lea.hbm %s10, %s2126
          %s2129 = sshll.u32 %s2119, 4
          %s2130 = int_to_ptr.vmem [resolvable:$true] %s2129
          %2132 = dma.vmem_to_hbm [thread:$0]  %s2130, 128, %s2127, %s2116
        $region104: #{tpu_custom_call.1} parent=59 // pred_fallthru
          _
      $region60: #{tpu_custom_call.1} parent=5 // pred_fallthru
        _
      %p2133 = scmp.le.s32.totalorder 2, %s27
      // Predicated region
      $region105: #{tpu_custom_call.1} parent=5 // pred_check
        %p2134 = pneg %p2133
      $region106: #{tpu_custom_call.1} parent=5 // pred_check_branch
        %2136 = sbr.rel (%p2134) target = $region108
      $region107: #{tpu_custom_call.1} parent=5 // pred_region
        %s2137 = ssub.s32 %s27, 2
        // Predicated region
        $region109: #{tpu_custom_call.1} parent=107 // pred_check
          %p2138 = pneg %p271
        $region110: #{tpu_custom_call.1} parent=107 // pred_check_branch
          %2140 = sbr.rel (%p2138) target = $region112
        $region111: #{tpu_custom_call.1} parent=107 // pred_region
          %s2141 = sand.u32 %s256, 1
          %s2142 = scalar_lea.sflag [#allocation4], %s2141
          %s2143 = sand.u32 %s256, 1
          %s2144 = smul.addr %s2143, 8
          %s2145 = scalar_lea.vmem [#allocation19], %s2144
          %2146 = dma.done %s2142, 128
        $region112: #{tpu_custom_call.1} parent=107 // pred_fallthru
          _
      $region108: #{tpu_custom_call.1} parent=5 // pred_fallthru
        _
    $region6: #{tpu_custom_call.1} parent=1 // loop_footer
      %s31 = sadd.s32 1, %s27
    $region7: #{tpu_custom_call.1} parent=1 // loop_footer_branch
      %26 = sbr.rel target = $region3
    $region8: #{tpu_custom_call.1} parent=1 // loop_exit
      _
    %2147 = vsyncpa [#allocation3], 1
    %s2148 = scalar_lea.sflag [#allocation3], 1
    %2149 = vsyncpa %s2148, 1
    %2150 = vsyncpa [#allocation6], 1
    %2151 = vsyncpa [#allocation9], 1
    %2152 = vsyncpa [#allocation12], 1
    %2153 = vsyncpa [#allocation15], 1
    %2154 = vsyncpa [#allocation18], 1
    %2155 = vsyncpa [#allocation4], 1
    %s2156 = scalar_lea.sflag [#allocation4], 1
    %2157 = vsyncpa %s2156, 1

// kernel: tpu_custom_call.1
$region0: #{tpu_custom_call.1}
  #allocation0 [shape = 'u32[]', space=smem, size = 0x4, offset = 0x4, fixed_abs, tag = 'smem constant byte address 0x4 - core index']
  #allocation1 [shape = 'u32[144,128]{1,0:T(1,128)}', space=vmem, size = 0x12000, scoped, tag = 'internal scratch']
  %s0 = inlined_call_operand.hbm [shape: f32[16,16,32], index: 0, kind: input, shape index: {}]
  %s1 = inlined_call_operand.hbm [shape: f32[16,32], index: 1, kind: input, shape index: {}]
  %s2 = inlined_call_operand.hbm [shape: f32[1,32], index: 2, kind: input, shape index: {}]
  %s3 = inlined_call_operand.hbm [shape: f32[16,128], index: 3, kind: input, shape index: {}]
  %s4 = inlined_call_operand.hbm [shape: bf16[32,96], index: 4, kind: input, shape index: {}]
  %s5 = inlined_call_operand.hbm [shape: f32[1,96], index: 5, kind: input, shape index: {}]
  %s6 = inlined_call_operand.hbm [shape: bf16[32,16], index: 6, kind: input, shape index: {}]
  %s7 = inlined_call_operand.hbm [shape: f32[1,16], index: 7, kind: input, shape index: {}]
  %s8 = inlined_call_operand.hbm [shape: bf16[32,128], index: 8, kind: input, shape index: {}]
  %s9 = inlined_call_operand.hbm [shape: bf16[128,32], index: 9, kind: input, shape index: {}]
  %s10 = inlined_call_operand.hbm [shape: f32[16,16], index: 10, kind: output, shape index: {}]
  %s11 = sld [smem:[#allocation0]]
  $region113: #{tpu_custom_call.1} parent=0
    _
  %s13 = ssub.s32 1, %s11
  %s14 = scalar_select 0, %s13, %s11
  $region1: #{tpu_custom_call.1} parent=0
    #allocation2 [shape = 'u8[131072]{0}', space=vmem, size = 0x20000, scoped, tag = 'input window, operand 0']
    #allocation3 [shape = 's32[2]{0}', space=sflag, size = 0x8, scoped, tag = 'scoped memory for tpu_custom_call.1']
    #allocation4 [shape = 's32[2]{0}', space=sflag, size = 0x8, scoped, tag = 'scoped memory for tpu_custom_call.1']
    #allocation5 [shape = 'u8[8192]{0}', space=vmem, size = 0x2000, scoped, tag = 'input window, operand 1, single buffered']
    #allocation6 [shape = 's32[1]{0}', space=sflag, size = 0x4, scoped, tag = 'scoped memory for tpu_custom_call.1']
    #allocation7 [shape = 'u8[512]{0}', space=vmem, size = 0x400, scoped, tag = 'input window, operand 2, single buffered']
    #allocation8 [shape = 'u8[8192]{0}', space=vmem, size = 0x2000, scoped, tag = 'input window, operand 3, single buffered']
    #allocation9 [shape = 's32[1]{0}', space=sflag, size = 0x4, scoped, tag = 'scoped memory for tpu_custom_call.1']
    #allocation10 [shape = 'u8[8192]{0}', space=vmem, size = 0x2000, scoped, tag = 'input window, operand 4, single buffered']
    #allocation11 [shape = 'u8[512]{0}', space=vmem, size = 0x400, scoped, tag = 'input window, operand 5, single buffered']
    #allocation12 [shape = 's32[1]{0}', space=sflag, size = 0x4, scoped, tag = 'scoped memory for tpu_custom_call.1']
    #allocation13 [shape = 'u8[8192]{0}', space=vmem, size = 0x2000, scoped, tag = 'input window, operand 6, single buffered']
    #allocation14 [shape = 'u8[512]{0}', space=vmem, size = 0x400, scoped, tag = 'input window, operand 7, single buffered']
    #allocation15 [shape = 's32[1]{0}', space=sflag, size = 0x4, scoped, tag = 'scoped memory for tpu_custom_call.1']
    #allocation16 [shape = 'u8[8192]{0}', space=vmem, size = 0x2000, scoped, tag = 'input window, operand 8, single buffered']
    #allocation17 [shape = 'u8[32768]{0}', space=vmem, size = 0x8000, scoped, tag = 'input window, operand 9, single buffered']
    #allocation18 [shape = 's32[1]{0}', space=sflag, size = 0x4, scoped, tag = 'scoped memory for tpu_custom_call.1']
    #allocation19 [shape = 'u8[8192]{0}', space=vmem, size = 0x2000, scoped, tag = 'output window, operand 0']
    %15 = vsyncpa [#allocation3], 0
    %s16 = scalar_lea.sflag [#allocation3], 1
    %17 = vsyncpa %s16, 0
    %18 = vsyncpa [#allocation6], 0
    %19 = vsyncpa [#allocation9], 0
    %20 = vsyncpa [#allocation12], 0
    %21 = vsyncpa [#allocation15], 0
    %22 = vsyncpa [#allocation18], 0
    %23 = vsyncpa [#allocation4], 0
    %s24 = scalar_lea.sflag [#allocation4], 1
    %25 = vsyncpa %s24, 0
    loop: start=0, step=1, limit=4
    $region2: #{tpu_custom_call.1} parent=1 // loop_pre_header
      _
    $region3: #{tpu_custom_call.1} parent=1 // loop_header
      %s27 = sphi 0, %s31
      %p28 = scmp.ge.s32.totalorder %s27, 4
      %s37 = sphi 0, %s39
      %s40 = sphi 0, %s37
      %s41 = sphi 0, %s40
      %s57 = sphi 0, %s41
      %s61 = sphi 0, %s61
      %s63 = sphi 0, %s61
      %s64 = sphi 0, %s63
      %s78 = sphi 0, %s64
      %s82 = sphi 0, %s82
      %s84 = sphi 0, %s82
      %s85 = sphi 0, %s84
      %s99 = sphi 0, %s85
      %s103 = sphi 0, %s103
      %s105 = sphi 0, %s103
      %s106 = sphi 0, %s105
      %s120 = sphi 0, %s106
      %s124 = sphi 0, %s124
      %s126 = sphi 0, %s124
      %s127 = sphi 0, %s126
      %s141 = sphi 0, %s127
      %s145 = sphi 0, %s145
      %s147 = sphi 0, %s145
      %s148 = sphi 0, %s147
      %s162 = sphi 0, %s148
      %s166 = sphi 0, %s166
      %s168 = sphi 0, %s166
      %s169 = sphi 0, %s168
      %s183 = sphi 0, %s169
      %s187 = sphi 0, %s187
      %s189 = sphi 0, %s187
      %s190 = sphi 0, %s189
      %s204 = sphi 0, %s190
      %s208 = sphi 0, %s208
      %s210 = sphi 0, %s208
      %s211 = sphi 0, %s210
      %s225 = sphi 0, %s211
      %s229 = sphi 0, %s229
      %s231 = sphi 0, %s229
      %s232 = sphi 0, %s231
      %s246 = sphi 0, %s232
      %s252 = sphi 0, %s254
      %s255 = sphi 0, %s252
      %s256 = sphi 0, %s255
      %s272 = sphi 0, %s256
    $region4: #{tpu_custom_call.1} parent=1 // loop_header_branch
      %30 = sbr.rel (%p28) target = $region8
    $region5: #{tpu_custom_call.1} parent=1 // loop_body
      %s32 = ssub.s32 %s27, 1
      %s33 = ssub.s32 %s27, 2
      %s34 = sadd.s32 %s27, 1
      %s35 = ssub.s32 %s27, %s34
      %p36 = scmp.eq.s32.totalorder %s35, 0
      %s38 = sadd.s32 %s37, 1
      %s39 = scalar_select %p36, %s37, %s38
      %p42 = pneg %p36
      %p43 = scmp.eq.s32.totalorder %s27, 1
      %p44 = por %p42, %p43
      %p45 = scmp.ne.s32.totalorder %s37, %s40
      %p46 = scmp.eq.s32.totalorder %s27, 0
      %p47 = por %p45, %p46
      %p48 = scmp.ne.s32.totalorder %s37, %s40
      %p49 = scmp.eq.s32.totalorder %s32, 1
      %p50 = por %p48, %p49
      %p51 = scmp.ne.s32.totalorder %s40, %s41
      %p52 = scmp.eq.s32.totalorder %s32, 0
      %p53 = por %p51, %p52
      %p54 = scmp.ne.s32.totalorder %s40, %s41
      %p55 = scmp.eq.s32.totalorder %s33, 1
      %p56 = por %p54, %p55
      %p58 = scmp.ne.s32.totalorder %s41, %s57
      %p59 = scmp.eq.s32.totalorder %s33, 0
      %p60 = por %p58, %p59
      %s62 = sadd.s32 %s61, 1
      %p65 = scmp.eq.s32.totalorder %s27, 1
      %p66 = scmp.ne.s32.totalorder %s61, %s63
      %p67 = scmp.eq.s32.totalorder %s27, 0
      %p68 = por %p66, %p67
      %p69 = scmp.ne.s32.totalorder %s61, %s63
      %p70 = scmp.eq.s32.totalorder %s32, 1
      %p71 = por %p69, %p70
      %p72 = scmp.ne.s32.totalorder %s63, %s64
      %p73 = scmp.eq.s32.totalorder %s32, 0
      %p74 = por %p72, %p73
      %p75 = scmp.ne.s32.totalorder %s63, %s64
      %p76 = scmp.eq.s32.totalorder %s33, 1
      %p77 = por %p75, %p76
      %p79 = scmp.ne.s32.totalorder %s64, %s78
      %p80 = scmp.eq.s32.totalorder %s33, 0
      %p81 = por %p79, %p80
      %s83 = sadd.s32 %s82, 1
      %p86 = scmp.eq.s32.totalorder %s27, 1
      %p87 = scmp.ne.s32.totalorder %s82, %s84
      %p88 = scmp.eq.s32.totalorder %s27, 0
      %p89 = por %p87, %p88
      %p90 = scmp.ne.s32.totalorder %s82, %s84
      %p91 = scmp.eq.s32.totalorder %s32, 1
      %p92 = por %p90, %p91
      %p93 = scmp.ne.s32.totalorder %s84, %s85
      %p94 = scmp.eq.s32.totalorder %s32, 0
      %p95 = por %p93, %p94
      %p96 = scmp.ne.s32.totalorder %s84, %s85
      %p97 = scmp.eq.s32.totalorder %s33, 1
      %p98 = por %p96, %p97
      %p100 = scmp.ne.s32.totalorder %s85, %s99
      %p101 = scmp.eq.s32.totalorder %s33, 0
      %p102 = por %p100, %p101
      %s104 = sadd.s32 %s103, 1
      %p107 = scmp.eq.s32.totalorder %s27, 1
      %p108 = scmp.ne.s32.totalorder %s103, %s105
      %p109 = scmp.eq.s32.totalorder %s27, 0
      %p110 = por %p108, %p109
      %p111 = scmp.ne.s32.totalorder %s103, %s105
      %p112 = scmp.eq.s32.totalorder %s32, 1
      %p113 = por %p111, %p112
      %p114 = scmp.ne.s32.totalorder %s105, %s106
      %p115 = scmp.eq.s32.totalorder %s32, 0
      %p116 = por %p114, %p115
      %p117 = scmp.ne.s32.totalorder %s105, %s106
      %p118 = scmp.eq.s32.totalorder %s33, 1
      %p119 = por %p117, %p118
      %p121 = scmp.ne.s32.totalorder %s106, %s120
      %p122 = scmp.eq.s32.totalorder %s33, 0
      %p123 = por %p121, %p122
      %s125 = sadd.s32 %s124, 1
      %p128 = scmp.eq.s32.totalorder %s27, 1
      %p129 = scmp.ne.s32.totalorder %s124, %s126
      %p130 = scmp.eq.s32.totalorder %s27, 0
      %p131 = por %p129, %p130
      %p132 = scmp.ne.s32.totalorder %s124, %s126
      %p133 = scmp.eq.s32.totalorder %s32, 1
      %p134 = por %p132, %p133
      %p135 = scmp.ne.s32.totalorder %s126, %s127
      %p136 = scmp.eq.s32.totalorder %s32, 0
      %p137 = por %p135, %p136
      %p138 = scmp.ne.s32.totalorder %s126, %s127
      %p139 = scmp.eq.s32.totalorder %s33, 1
      %p140 = por %p138, %p139
      %p142 = scmp.ne.s32.totalorder %s127, %s141
      %p143 = scmp.eq.s32.totalorder %s33, 0
      %p144 = por %p142, %p143
      %s146 = sadd.s32 %s145, 1
      %p149 = scmp.eq.s32.totalorder %s27, 1
      %p150 = scmp.ne.s32.totalorder %s145, %s147
      %p151 = scmp.eq.s32.totalorder %s27, 0
      %p152 = por %p150, %p151
      %p153 = scmp.ne.s32.totalorder %s145, %s147
      %p154 = scmp.eq.s32.totalorder %s32, 1
      %p155 = por %p153, %p154
      %p156 = scmp.ne.s32.totalorder %s147, %s148
      %p157 = scmp.eq.s32.totalorder %s32, 0
      %p158 = por %p156, %p157
      %p159 = scmp.ne.s32.totalorder %s147, %s148
      %p160 = scmp.eq.s32.totalorder %s33, 1
      %p161 = por %p159, %p160
      %p163 = scmp.ne.s32.totalorder %s148, %s162
      %p164 = scmp.eq.s32.totalorder %s33, 0
      %p165 = por %p163, %p164
      %s167 = sadd.s32 %s166, 1
      %p170 = scmp.eq.s32.totalorder %s27, 1
      %p171 = scmp.ne.s32.totalorder %s166, %s168
      %p172 = scmp.eq.s32.totalorder %s27, 0
      %p173 = por %p171, %p172
      %p174 = scmp.ne.s32.totalorder %s166, %s168
      %p175 = scmp.eq.s32.totalorder %s32, 1
      %p176 = por %p174, %p175
      %p177 = scmp.ne.s32.totalorder %s168, %s169
      %p178 = scmp.eq.s32.totalorder %s32, 0
      %p179 = por %p177, %p178
      %p180 = scmp.ne.s32.totalorder %s168, %s169
      %p181 = scmp.eq.s32.totalorder %s33, 1
      %p182 = por %p180, %p181
      %p184 = scmp.ne.s32.totalorder %s169, %s183
      %p185 = scmp.eq.s32.totalorder %s33, 0
      %p186 = por %p184, %p185
      %s188 = sadd.s32 %s187, 1
      %p191 = scmp.eq.s32.totalorder %s27, 1
      %p192 = scmp.ne.s32.totalorder %s187, %s189
      %p193 = scmp.eq.s32.totalorder %s27, 0
      %p194 = por %p192, %p193
      %p195 = scmp.ne.s32.totalorder %s187, %s189
      %p196 = scmp.eq.s32.totalorder %s32, 1
      %p197 = por %p195, %p196
      %p198 = scmp.ne.s32.totalorder %s189, %s190
      %p199 = scmp.eq.s32.totalorder %s32, 0
      %p200 = por %p198, %p199
      %p201 = scmp.ne.s32.totalorder %s189, %s190
      %p202 = scmp.eq.s32.totalorder %s33, 1
      %p203 = por %p201, %p202
      %p205 = scmp.ne.s32.totalorder %s190, %s204
      %p206 = scmp.eq.s32.totalorder %s33, 0
      %p207 = por %p205, %p206
      %s209 = sadd.s32 %s208, 1
      %p212 = scmp.eq.s32.totalorder %s27, 1
      %p213 = scmp.ne.s32.totalorder %s208, %s210
      %p214 = scmp.eq.s32.totalorder %s27, 0
      %p215 = por %p213, %p214
      %p216 = scmp.ne.s32.totalorder %s208, %s210
      %p217 = scmp.eq.s32.totalorder %s32, 1
      %p218 = por %p216, %p217
      %p219 = scmp.ne.s32.totalorder %s210, %s211
      %p220 = scmp.eq.s32.totalorder %s32, 0
      %p221 = por %p219, %p220
      %p222 = scmp.ne.s32.totalorder %s210, %s211
      %p223 = scmp.eq.s32.totalorder %s33, 1
      %p224 = por %p222, %p223
      %p226 = scmp.ne.s32.totalorder %s211, %s225
      %p227 = scmp.eq.s32.totalorder %s33, 0
      %p228 = por %p226, %p227
      %s230 = sadd.s32 %s229, 1
      %p233 = scmp.eq.s32.totalorder %s27, 1
      %p234 = scmp.ne.s32.totalorder %s229, %s231
      %p235 = scmp.eq.s32.totalorder %s27, 0
      %p236 = por %p234, %p235
      %p237 = scmp.ne.s32.totalorder %s229, %s231
      %p238 = scmp.eq.s32.totalorder %s32, 1
      %p239 = por %p237, %p238
      %p240 = scmp.ne.s32.totalorder %s231, %s232
      %p241 = scmp.eq.s32.totalorder %s32, 0
      %p242 = por %p240, %p241
      %p243 = scmp.ne.s32.totalorder %s231, %s232
      %p244 = scmp.eq.s32.totalorder %s33, 1
      %p245 = por %p243, %p244
      %p247 = scmp.ne.s32.totalorder %s232, %s246
      %p248 = scmp.eq.s32.totalorder %s33, 0
      %p249 = por %p247, %p248
      %s250 = ssub.s32 %s27, %s34
      %p251 = scmp.eq.s32.totalorder %s250, 0
      %s253 = sadd.s32 %s252, 1
      %s254 = scalar_select %p251, %s252, %s253
      %p257 = pneg %p251
      %p258 = scmp.eq.s32.totalorder %s27, 1
      %p259 = por %p257, %p258
      %p260 = scmp.ne.s32.totalorder %s252, %s255
      %p261 = scmp.eq.s32.totalorder %s27, 0
      %p262 = por %p260, %p261
      %p263 = scmp.ne.s32.totalorder %s252, %s255
      %p264 = scmp.eq.s32.totalorder %s32, 1
      %p265 = por %p263, %p264
      %p266 = scmp.ne.s32.totalorder %s255, %s256
      %p267 = scmp.eq.s32.totalorder %s32, 0
      %p268 = por %p266, %p267
      %p269 = scmp.ne.s32.totalorder %s255, %s256
      %p270 = scmp.eq.s32.totalorder %s33, 1
      %p271 = por %p269, %p270
      %p273 = scmp.ne.s32.totalorder %s256, %s272
      %p274 = scmp.eq.s32.totalorder %s33, 0
      %p275 = por %p273, %p274
      %p276 = scmp.le.s32.totalorder 1, %s27
      %p277 = scmp.lt.s32.totalorder %s27, 3
      %p278 = pnand %p276, %p277
      %p279 = pneg %p278
      // Predicated region
      $region9: #{tpu_custom_call.1} parent=5 // pred_check
        _
      $region10: #{tpu_custom_call.1} parent=5 // pred_check_branch
        %281 = sbr.rel (%p278) target = $region12
      $region11: #{tpu_custom_call.1} parent=5 // pred_region
        %s282 = ssub.s32 %s27, 1
        // Predicated region
        $region13: #{tpu_custom_call.1} parent=11 // pred_check
          %p283 = pneg %p74
        $region14: #{tpu_custom_call.1} parent=11 // pred_check_branch
          %285 = sbr.rel (%p283) target = $region16
        $region15: #{tpu_custom_call.1} parent=11 // pred_region
          %s287 = ssub.s32 256, 256
          %288 = vsyncadd [#allocation6], %s287
          %s289 = sshll.u32 [#allocation5], 4
          %s290 = int_to_ptr.vmem [resolvable:$true] %s289
          %295 = dma.hbm_to_vmem [thread:$0]  %s1, 256, %s290, [#allocation6], 128, 128, 8
        $region16: #{tpu_custom_call.1} parent=11 // pred_fallthru
          _
        // Predicated region
        $region17: #{tpu_custom_call.1} parent=11 // pred_check
          %p296 = pneg %p95
        $region18: #{tpu_custom_call.1} parent=11 // pred_check_branch
          %298 = sbr.rel (%p296) target = $region20
        $region19: #{tpu_custom_call.1} parent=11 // pred_region
          %s300 = ssub.s32 16, 16
          %301 = vsyncadd [#allocation6], %s300
          %s303 = sshll.u32 [#allocation7], 4
          %s304 = int_to_ptr.vmem [resolvable:$true] %s303
          %306 = dma.hbm_to_vmem [thread:$0]  %s2, 16, %s304, [#allocation6]
        $region20: #{tpu_custom_call.1} parent=11 // pred_fallthru
          _
        // Predicated region
        $region21: #{tpu_custom_call.1} parent=11 // pred_check
          %p307 = pneg %p116
        $region22: #{tpu_custom_call.1} parent=11 // pred_check_branch
          %309 = sbr.rel (%p307) target = $region24
        $region23: #{tpu_custom_call.1} parent=11 // pred_region
          %s311 = ssub.s32 256, 256
          %312 = vsyncadd [#allocation9], %s311
          %s313 = sshll.u32 [#allocation8], 4
          %s314 = int_to_ptr.vmem [resolvable:$true] %s313
          %319 = dma.hbm_to_vmem [thread:$0]  %s3, 256, %s314, [#allocation9], 128, 128, 8
        $region24: #{tpu_custom_call.1} parent=11 // pred_fallthru
          _
        // Predicated region
        $region25: #{tpu_custom_call.1} parent=11 // pred_check
          %p320 = pneg %p137
        $region26: #{tpu_custom_call.1} parent=11 // pred_check_branch
          %322 = sbr.rel (%p320) target = $region28
        $region27: #{tpu_custom_call.1} parent=11 // pred_region
          %s324 = ssub.s32 256, 256
          %325 = vsyncadd [#allocation9], %s324
          %s326 = sshll.u32 [#allocation10], 4
          %s327 = int_to_ptr.vmem [resolvable:$true] %s326
          %332 = dma.hbm_to_vmem [thread:$0]  %s4, 256, %s327, [#allocation9], 64, 64, 4
        $region28: #{tpu_custom_call.1} parent=11 // pred_fallthru
          _
        // Predicated region
        $region29: #{tpu_custom_call.1} parent=11 // pred_check
          %p333 = pneg %p158
        $region30: #{tpu_custom_call.1} parent=11 // pred_check_branch
          %335 = sbr.rel (%p333) target = $region32
        $region31: #{tpu_custom_call.1} parent=11 // pred_region
          %s337 = ssub.s32 16, 16
          %338 = vsyncadd [#allocation12], %s337
          %s340 = sshll.u32 [#allocation11], 4
          %s341 = int_to_ptr.vmem [resolvable:$true] %s340
          %343 = dma.hbm_to_vmem [thread:$0]  %s5, 16, %s341, [#allocation12]
        $region32: #{tpu_custom_call.1} parent=11 // pred_fallthru
          _
        // Predicated region
        $region33: #{tpu_custom_call.1} parent=11 // pred_check
          %p344 = pneg %p179
        $region34: #{tpu_custom_call.1} parent=11 // pred_check_branch
          %346 = sbr.rel (%p344) target = $region36
        $region35: #{tpu_custom_call.1} parent=11 // pred_region
          %s348 = ssub.s32 256, 256
          %349 = vsyncadd [#allocation12], %s348
          %s350 = sshll.u32 [#allocation13], 4
          %s351 = int_to_ptr.vmem [resolvable:$true] %s350
          %356 = dma.hbm_to_vmem [thread:$0]  %s6, 256, %s351, [#allocation12], 64, 64, 4
        $region36: #{tpu_custom_call.1} parent=11 // pred_fallthru
          _
        // Predicated region
        $region37: #{tpu_custom_call.1} parent=11 // pred_check
          %p357 = pneg %p200
        $region38: #{tpu_custom_call.1} parent=11 // pred_check_branch
          %359 = sbr.rel (%p357) target = $region40
        $region39: #{tpu_custom_call.1} parent=11 // pred_region
          %s361 = ssub.s32 16, 16
          %362 = vsyncadd [#allocation15], %s361
          %s364 = sshll.u32 [#allocation14], 4
          %s365 = int_to_ptr.vmem [resolvable:$true] %s364
          %367 = dma.hbm_to_vmem [thread:$0]  %s7, 16, %s365, [#allocation15]
        $region40: #{tpu_custom_call.1} parent=11 // pred_fallthru
          _
        // Predicated region
        $region41: #{tpu_custom_call.1} parent=11 // pred_check
          %p368 = pneg %p221
        $region42: #{tpu_custom_call.1} parent=11 // pred_check_branch
          %370 = sbr.rel (%p368) target = $region44
        $region43: #{tpu_custom_call.1} parent=11 // pred_region
          %s372 = ssub.s32 256, 256
          %373 = vsyncadd [#allocation15], %s372
          %s374 = sshll.u32 [#allocation16], 4
          %s375 = int_to_ptr.vmem [resolvable:$true] %s374
          %380 = dma.hbm_to_vmem [thread:$0]  %s8, 256, %s375, [#allocation15], 64, 64, 4
        $region44: #{tpu_custom_call.1} parent=11 // pred_fallthru
          _
        // Predicated region
        $region45: #{tpu_custom_call.1} parent=11 // pred_check
          %p381 = pneg %p242
        $region46: #{tpu_custom_call.1} parent=11 // pred_check_branch
          %383 = sbr.rel (%p381) target = $region48
        $region47: #{tpu_custom_call.1} parent=11 // pred_region
          %s385 = ssub.s32 1024, 1024
          %386 = vsyncadd [#allocation18], %s385
          %s387 = sshll.u32 [#allocation17], 4
          %s388 = int_to_ptr.vmem [resolvable:$true] %s387
          %393 = dma.hbm_to_vmem [thread:$0]  %s9, 1024, %s388, [#allocation18], 64, 64, 4
        $region48: #{tpu_custom_call.1} parent=11 // pred_fallthru
          _
      $region12: #{tpu_custom_call.1} parent=5 // pred_fallthru
        _
      %p394 = scmp.lt.s32.totalorder %s27, 2
      // Predicated region
      $region49: #{tpu_custom_call.1} parent=5 // pred_check
        %p395 = pneg %p394
      $region50: #{tpu_custom_call.1} parent=5 // pred_check_branch
        %397 = sbr.rel (%p395) target = $region52
      $region51: #{tpu_custom_call.1} parent=5 // pred_region
        // Predicated region
        $region53: #{tpu_custom_call.1} parent=51 // pred_check
          %p398 = pneg %p47
        $region54: #{tpu_custom_call.1} parent=51 // pred_check_branch
          %400 = sbr.rel (%p398) target = $region56
        $region55: #{tpu_custom_call.1} parent=51 // pred_region
          %s401 = sand.u32 %s37, 1
          %s402 = scalar_lea.sflag [#allocation3], %s401
          %s403 = sand.u32 %s37, 1
          %s404 = smul.addr %s403, 128
          %s405 = scalar_lea.vmem [#allocation2], %s404
          %s406 = smul.u32 8, %s27
          %s408 = ssub.s32 2048, 2048
          %409 = vsyncadd %s402, %s408
          %s410 = smul.addr %s406, 2
          %s411 = smul.addr %s410, 128
          %s412 = scalar_lea.hbm %s0, %s411
          %s413 = sshll.u32 %s405, 4
          %s414 = int_to_ptr.vmem [resolvable:$true] %s413
          %419 = dma.hbm_to_vmem [thread:$0]  %s412, 2048, %s414, %s402, 128, 128, 8
        $region56: #{tpu_custom_call.1} parent=51 // pred_fallthru
          _
      $region52: #{tpu_custom_call.1} parent=5 // pred_fallthru
        _
      %p420 = scmp.le.s32.totalorder 1, %s27
      %p421 = scmp.lt.s32.totalorder %s27, 3
      %p422 = pnand %p420, %p421
      %p423 = pneg %p422
      // Predicated region
      $region57: #{tpu_custom_call.1} parent=5 // pred_check
        _
      $region58: #{tpu_custom_call.1} parent=5 // pred_check_branch
        %425 = sbr.rel (%p422) target = $region60
      $region59: #{tpu_custom_call.1} parent=5 // pred_region
        %s426 = ssub.s32 %s27, 1
        %s427 = sand.u32 %s40, 1
        %s428 = scalar_lea.sflag [#allocation3], %s427
        %s429 = sand.u32 %s40, 1
        %s430 = smul.addr %s429, 128
        %s431 = scalar_lea.vmem [#allocation2], %s430
        // Predicated region
        $region61: #{tpu_custom_call.1} parent=59 // pred_check
          %p432 = pneg %p53
        $region62: #{tpu_custom_call.1} parent=59 // pred_check_branch
          %434 = sbr.rel (%p432) target = $region64
        $region63: #{tpu_custom_call.1} parent=59 // pred_region
          %435 = dma.done %s428, 2048
        $region64: #{tpu_custom_call.1} parent=59 // pred_fallthru
          _
        // Predicated region
        $region65: #{tpu_custom_call.1} parent=59 // pred_check
          %p436 = pneg %p74
        $region66: #{tpu_custom_call.1} parent=59 // pred_check_branch
          %438 = sbr.rel (%p436) target = $region68
        $region67: #{tpu_custom_call.1} parent=59 // pred_region
          %439 = dma.done [#allocation6], 256
        $region68: #{tpu_custom_call.1} parent=59 // pred_fallthru
          _
        // Predicated region
        $region69: #{tpu_custom_call.1} parent=59 // pred_check
          %p440 = pneg %p95
        $region70: #{tpu_custom_call.1} parent=59 // pred_check_branch
          %442 = sbr.rel (%p440) target = $region72
        $region71: #{tpu_custom_call.1} parent=59 // pred_region
          %443 = dma.done [#allocation6], 16
        $region72: #{tpu_custom_call.1} parent=59 // pred_fallthru
          _
        // Predicated region
        $region73: #{tpu_custom_call.1} parent=59 // pred_check
          %p444 = pneg %p116
        $region74: #{tpu_custom_call.1} parent=59 // pred_check_branch
          %446 = sbr.rel (%p444) target = $region76
        $region75: #{tpu_custom_call.1} parent=59 // pred_region
          %447 = dma.done [#allocation9], 256
        $region76: #{tpu_custom_call.1} parent=59 // pred_fallthru
          _
        // Predicated region
        $region77: #{tpu_custom_call.1} parent=59 // pred_check
          %p448 = pneg %p137
        $region78: #{tpu_custom_call.1} parent=59 // pred_check_branch
          %450 = sbr.rel (%p448) target = $region80
        $region79: #{tpu_custom_call.1} parent=59 // pred_region
          %451 = dma.done [#allocation9], 256
        $region80: #{tpu_custom_call.1} parent=59 // pred_fallthru
          _
        // Predicated region
        $region81: #{tpu_custom_call.1} parent=59 // pred_check
          %p452 = pneg %p158
        $region82: #{tpu_custom_call.1} parent=59 // pred_check_branch
          %454 = sbr.rel (%p452) target = $region84
        $region83: #{tpu_custom_call.1} parent=59 // pred_region
          %455 = dma.done [#allocation12], 16
        $region84: #{tpu_custom_call.1} parent=59 // pred_fallthru
          _
        // Predicated region
        $region85: #{tpu_custom_call.1} parent=59 // pred_check
          %p456 = pneg %p179
        $region86: #{tpu_custom_call.1} parent=59 // pred_check_branch
          %458 = sbr.rel (%p456) target = $region88
        $region87: #{tpu_custom_call.1} parent=59 // pred_region
          %459 = dma.done [#allocation12], 256
        $region88: #{tpu_custom_call.1} parent=59 // pred_fallthru
          _
        // Predicated region
        $region89: #{tpu_custom_call.1} parent=59 // pred_check
          %p460 = pneg %p200
        $region90: #{tpu_custom_call.1} parent=59 // pred_check_branch
          %462 = sbr.rel (%p460) target = $region92
        $region91: #{tpu_custom_call.1} parent=59 // pred_region
          %463 = dma.done [#allocation15], 16
        $region92: #{tpu_custom_call.1} parent=59 // pred_fallthru
          _
        // Predicated region
        $region93: #{tpu_custom_call.1} parent=59 // pred_check
          %p464 = pneg %p221
        $region94: #{tpu_custom_call.1} parent=59 // pred_check_branch
          %466 = sbr.rel (%p464) target = $region96
        $region95: #{tpu_custom_call.1} parent=59 // pred_region
          %467 = dma.done [#allocation15], 256
        $region96: #{tpu_custom_call.1} parent=59 // pred_fallthru
          _
        // Predicated region
        $region97: #{tpu_custom_call.1} parent=59 // pred_check
          %p468 = pneg %p242
        $region98: #{tpu_custom_call.1} parent=59 // pred_check_branch
          %470 = sbr.rel (%p468) target = $region100
        $region99: #{tpu_custom_call.1} parent=59 // pred_region
          %471 = dma.done [#allocation18], 1024
        $region100: #{tpu_custom_call.1} parent=59 // pred_fallthru
          _
        %s472 = sand.u32 %s40, 1
        %s473 = scalar_lea.sflag [#allocation3], %s472
        %s474 = sand.u32 %s40, 1
        %s475 = smul.addr %s474, 128
        %s476 = scalar_lea.vmem [#allocation2], %s475
        %p477 = pneg %p53
        %p478 = pneg %p50
        %p479 = pneg %p74
        %p480 = pneg %p71
        %p481 = pneg %p95
        %p482 = pneg %p92
        %p483 = pneg %p116
        %p484 = pneg %p113
        %p485 = pneg %p137
        %p486 = pneg %p134
        %p487 = pneg %p158
        %p488 = pneg %p155
        %p489 = pneg %p179
        %p490 = pneg %p176
        %p491 = pneg %p200
        %p492 = pneg %p197
        %p493 = pneg %p221
        %p494 = pneg %p218
        %p495 = pneg %p242
        %p496 = pneg %p239
        %p497 = pneg %p268
        %p498 = pneg %p265
        %s499 = sand.u32 %s255, 1
        %s500 = scalar_lea.sflag [#allocation4], %s499
        %s501 = sand.u32 %s255, 1
        %s502 = smul.addr %s501, 8
        %s503 = scalar_lea.vmem [#allocation19], %s502
        %s504 = smul.u32 8, %s32
        %v506 = vld [vmem:[%s431] sm:$0xff]
        %v507 = vld [vmem:[%s431 + $0x8] sm:$0xff]
        %v508 = vld [vmem:[%s431 + $0x10] sm:$0xff]
        %v509 = vld [vmem:[%s431 + $0x18] sm:$0xff]
        %v510 = vld [vmem:[%s431 + $0x20] sm:$0xff]
        %v511 = vld [vmem:[%s431 + $0x28] sm:$0xff]
        %v512 = vld [vmem:[%s431 + $0x30] sm:$0xff]
        %v513 = vld [vmem:[%s431 + $0x38] sm:$0xff]
        %v514 = vld [vmem:[%s431 + $0x40] sm:$0xff]
        %v515 = vld [vmem:[%s431 + $0x48] sm:$0xff]
        %v516 = vld [vmem:[%s431 + $0x50] sm:$0xff]
        %v517 = vld [vmem:[%s431 + $0x58] sm:$0xff]
        %v518 = vld [vmem:[%s431 + $0x60] sm:$0xff]
        %v519 = vld [vmem:[%s431 + $0x68] sm:$0xff]
        %v520 = vld [vmem:[%s431 + $0x70] sm:$0xff]
        %v521 = vld [vmem:[%s431 + $0x78] sm:$0xff]
        %vm522 = vcmask 261120
        %v523 = vsel %vm522, %v506, 0.0
        %v524 = vsel %vm522, %v507, 0.0
        %v525 = vadd.f32 %v523, %v524
        %v526 = vrot.slane %v525, 4
        %v527 = vadd.f32 %v525, %v526
        %v528 = vrot.slane %v527, 2
        %v529 = vadd.f32 %v527, %v528
        %v530 = vrot.slane %v529, 1
        %v531 = vadd.f32 %v529, %v530
        %v532 = vsel %vm522, %v508, 0.0
        %v533 = vsel %vm522, %v509, 0.0
        %v534 = vadd.f32 %v532, %v533
        %v535 = vrot.slane %v534, 4
        %v536 = vadd.f32 %v534, %v535
        %v537 = vrot.slane %v536, 2
        %v538 = vadd.f32 %v536, %v537
        %v539 = vrot.slane %v538, 1
        %v540 = vadd.f32 %v538, %v539
        %v541 = vsel %vm522, %v510, 0.0
        %v542 = vsel %vm522, %v511, 0.0
        %v543 = vadd.f32 %v541, %v542
        %v544 = vrot.slane %v543, 4
        %v545 = vadd.f32 %v543, %v544
        %v546 = vrot.slane %v545, 2
        %v547 = vadd.f32 %v545, %v546
        %v548 = vrot.slane %v547, 1
        %v549 = vadd.f32 %v547, %v548
        %v550 = vsel %vm522, %v512, 0.0
        %v551 = vsel %vm522, %v513, 0.0
        %v552 = vadd.f32 %v550, %v551
        %v553 = vrot.slane %v552, 4
        %v554 = vadd.f32 %v552, %v553
        %v555 = vrot.slane %v554, 2
        %v556 = vadd.f32 %v554, %v555
        %v557 = vrot.slane %v556, 1
        %v558 = vadd.f32 %v556, %v557
        %v559 = vsel %vm522, %v514, 0.0
        %v560 = vsel %vm522, %v515, 0.0
        %v561 = vadd.f32 %v559, %v560
        %v562 = vrot.slane %v561, 4
        %v563 = vadd.f32 %v561, %v562
        %v564 = vrot.slane %v563, 2
        %v565 = vadd.f32 %v563, %v564
        %v566 = vrot.slane %v565, 1
        %v567 = vadd.f32 %v565, %v566
        %v568 = vsel %vm522, %v516, 0.0
        %v569 = vsel %vm522, %v517, 0.0
        %v570 = vadd.f32 %v568, %v569
        %v571 = vrot.slane %v570, 4
        %v572 = vadd.f32 %v570, %v571
        %v573 = vrot.slane %v572, 2
        %v574 = vadd.f32 %v572, %v573
        %v575 = vrot.slane %v574, 1
        %v576 = vadd.f32 %v574, %v575
        %v577 = vsel %vm522, %v518, 0.0
        %v578 = vsel %vm522, %v519, 0.0
        %v579 = vadd.f32 %v577, %v578
        %v580 = vrot.slane %v579, 4
        %v581 = vadd.f32 %v579, %v580
        %v582 = vrot.slane %v581, 2
        %v583 = vadd.f32 %v581, %v582
        %v584 = vrot.slane %v583, 1
        %v585 = vadd.f32 %v583, %v584
        %v586 = vsel %vm522, %v520, 0.0
        %v587 = vsel %vm522, %v521, 0.0
        %v588 = vadd.f32 %v586, %v587
        %v589 = vrot.slane %v588, 4
        %v590 = vadd.f32 %v588, %v589
        %v591 = vrot.slane %v590, 2
        %v592 = vadd.f32 %v590, %v591
        %v593 = vrot.slane %v592, 1
        %v594 = vadd.f32 %v592, %v593
        %v595 = vmul.f32 %v531, 0.0625
        %v596 = vmul.f32 %v540, 0.0625
        %v597 = vmul.f32 %v549, 0.0625
        %v598 = vmul.f32 %v558, 0.0625
        %v599 = vmul.f32 %v567, 0.0625
        %v600 = vmul.f32 %v576, 0.0625
        %v601 = vmul.f32 %v585, 0.0625
        %v602 = vmul.f32 %v594, 0.0625
        %v603 = vld [vmem:[#allocation7] sm:$0x1]
        %v605 = vlaneseq
        %v606 = vshrl.u32 %v605, 7
        %v607 = vsub.s32 0, %v606
        %v608 = vrot.slane %v603, %v607
        %v610 = vadd.f32 %v595, %v608
        %v611 = vadd.f32 %v596, %v608
        %v612 = vadd.f32 %v597, %v608
        %v613 = vadd.f32 %v598, %v608
        %v614 = vadd.f32 %v599, %v608
        %v615 = vadd.f32 %v600, %v608
        %v616 = vadd.f32 %v601, %v608
        %v617 = vadd.f32 %v602, %v608
        %v618 = vld [vmem:[#allocation5] sm:$0xff]
        %v619 = vld [vmem:[#allocation5 + $0x8] sm:$0xff]
        %v620 = vadd.f32 %v506, %v618
        %v621 = vadd.f32 %v507, %v619
        %v622 = vadd.f32 %v508, %v618
        %v623 = vadd.f32 %v509, %v619
        %v624 = vadd.f32 %v510, %v618
        %v625 = vadd.f32 %v511, %v619
        %v626 = vadd.f32 %v512, %v618
        %v627 = vadd.f32 %v513, %v619
        %v628 = vadd.f32 %v514, %v618
        %v629 = vadd.f32 %v515, %v619
        %v630 = vadd.f32 %v516, %v618
        %v631 = vadd.f32 %v517, %v619
        %v632 = vadd.f32 %v518, %v618
        %v633 = vadd.f32 %v519, %v619
        %v634 = vadd.f32 %v520, %v618
        %v635 = vadd.f32 %v521, %v619
        %v636 = vpack.c.bf16 %v610, %v610
        %v637 = vpack.c.bf16 %v611, %v611
        %v638 = vpack.c.bf16 %v612, %v612
        %v639 = vpack.c.bf16 %v613, %v613
        %v640 = vpack.c.bf16 %v614, %v614
        %v641 = vpack.c.bf16 %v615, %v615
        %v642 = vpack.c.bf16 %v616, %v616
        %v643 = vpack.c.bf16 %v617, %v617
        %v644 = vld [vmem:[#allocation10] sm:$0xf]
        %v645 = vld [vmem:[#allocation10 + $0x4] sm:$0xf]
        %v646 = vld [vmem:[#allocation10 + $0x8] sm:$0xf]
        %v647 = vld [vmem:[#allocation10 + $0xc] sm:$0xf]
        %v648 = vld [vmem:[#allocation11] sm:$0x1]
        %v650 = vlaneseq
        %v651 = vshrl.u32 %v650, 7
        %v652 = vsub.s32 0, %v651
        %v653 = vrot.slane %v648, %v652
        %v663 = vunpack.c.l.b16 %v636
        %v664 = vunpack.c.l.b16 %v637
        %v665 = vunpack.c.l.b16 %v638
        %v666 = vunpack.c.l.b16 %v639
        %v667 = vunpack.c.l.b16 %v640
        %v668 = vunpack.c.l.b16 %v641
        %v669 = vunpack.c.l.b16 %v642
        %v670 = vunpack.c.l.b16 %v643
        %v671 = vrot.slane %v664, 7
        %vm672 = vcmask 1041409
        %v673 = vsel %vm672, %v671, %v663
        %v674 = vrot.slane %v665, 6
        %vm675 = vcmask 1042434
        %v676 = vsel %vm675, %v674, %v673
        %v677 = vrot.slane %v666, 5
        %vm678 = vcmask 1043459
        %v679 = vsel %vm678, %v677, %v676
        %v680 = vrot.slane %v667, 4
        %vm681 = vcmask 1044484
        %v682 = vsel %vm681, %v680, %v679
        %v683 = vrot.slane %v668, 3
        %vm684 = vcmask 1045509
        %v685 = vsel %vm684, %v683, %v682
        %v686 = vrot.slane %v669, 2
        %vm687 = vcmask 1046534
        %v688 = vsel %vm687, %v686, %v685
        %v689 = vrot.slane %v670, 1
        %vm690 = vcmask 1047559
        %v691 = vsel %vm690, %v689, %v688
        %v692 = vpack.c.b16 %v691, %v691
        %v697 = vunpack.c.l.b16 %v644
        %v698 = vunpack.c.l.b16 %v645
        %v699 = vunpack.c.l.b16 %v646
        %v700 = vunpack.c.l.b16 %v647
        %v701 = vpack.c.b16 %v698, %v697
        %v702 = vpack.c.b16 %v700, %v699
        %v706 = vsel %vm522, %v692, 0
        %708 = vmatprep.subr.bf16.mxu0 0
        %709 = vmatpush1.bf16.msra.mxu0 %v701
        %710 = vmatprep.subr.bf16.mxu0 0
        %711 = vmatpush1.bf16.msra.mxu0 %v702
        %712 = vmatprep.subr.bf16.mxu0 0
        %713 = vmatpush1.bf16.msra.mxu0 0
        %714 = vmatprep.subr.bf16.mxu0 0
        %715 = vmatpush1.bf16.msra.mxu0 0
        %716 = vmatprep.subr.bf16.mxu0 0
        %717 = vmatpush1.bf16.msra.mxu0 0
        %718 = vmatprep.subr.bf16.mxu0 0
        %719 = vmatpush1.bf16.msra.mxu0 0
        %720 = vmatprep.subr.bf16.mxu0 0
        %721 = vmatpush1.bf16.msra.mxu0 0
        %722 = vmatprep.subr.bf16.mxu0 0
        %723 = vmatpush1.bf16.msra.mxu0 0
        %724 = vmatprep.subr.bf16.mxu0 0
        %725 = vmatpush1.bf16.msra.mxu0 0
        %726 = vmatprep.subr.bf16.mxu0 0
        %727 = vmatpush1.bf16.msra.mxu0 0
        %728 = vmatprep.subr.bf16.mxu0 0
        %729 = vmatpush1.bf16.msra.mxu0 0
        %730 = vmatprep.subr.bf16.mxu0 0
        %731 = vmatpush1.bf16.msra.mxu0 0
        %732 = vmatprep.subr.bf16.mxu0 0
        %733 = vmatpush1.bf16.msra.mxu0 0
        %734 = vmatprep.subr.bf16.mxu0 0
        %735 = vmatpush1.bf16.msra.mxu0 0
        %736 = vmatprep.subr.bf16.mxu0 0
        %737 = vmatpush1.bf16.msra.mxu0 0
        %738 = vmatprep.subr.bf16.mxu0 0
        %739 = vmatpush1.bf16.msra.mxu0 0
        %740 = vmatprep.mubr.bf16.mxu0 0
        %741 = vmatmul.mubr.bf16.gmra.mrb[0].mxu0 %v706
        %v742 = vpop.f32.mrb[0].mxu0
        %v743 = vadd.f32 %v653, %v742
        %v744 = vpop.f32.mrb[0].mxu0
        %v745 = vpop.f32.mrb[0].mxu0
        %v746 = vpop.f32.mrb[0].mxu0
        %747 = vdwg.mxu0
        %v748 = vpack.c.bf16 %v621, %v620
        %v749 = vpack.c.bf16 %v623, %v622
        %v750 = vpack.c.bf16 %v625, %v624
        %v751 = vpack.c.bf16 %v627, %v626
        %v752 = vpack.c.bf16 %v629, %v628
        %v753 = vpack.c.bf16 %v631, %v630
        %v754 = vpack.c.bf16 %v633, %v632
        %v755 = vpack.c.bf16 %v635, %v634
        %756 = vrot.lane.b32.xlu0 %v701, 96
        %v757 = vpop.permute.xlu0 %756
        %758 = vrot.lane.b32.xlu0 %v702, 96
        %v759 = vpop.permute.xlu0 %758
        %762 = vrot.lane.b32.xlu0 %v653, 96
        %v763 = vpop.permute.xlu0 %762
        %v766 = vsel %vm522, %v748, 0
        %v769 = vsel %vm522, %v749, 0
        %v772 = vsel %vm522, %v750, 0
        %v775 = vsel %vm522, %v751, 0
        %v778 = vsel %vm522, %v752, 0
        %v781 = vsel %vm522, %v753, 0
        %v784 = vsel %vm522, %v754, 0
        %v787 = vsel %vm522, %v755, 0
        %789 = vmatprep.subr.bf16.mxu0 0
        %790 = vmatpush1.bf16.msra.mxu0 %v757
        %791 = vmatprep.subr.bf16.mxu0 0
        %792 = vmatpush1.bf16.msra.mxu0 %v759
        %793 = vmatprep.subr.bf16.mxu0 0
        %794 = vmatpush1.bf16.msra.mxu0 0
        %795 = vmatprep.subr.bf16.mxu0 0
        %796 = vmatpush1.bf16.msra.mxu0 0
        %797 = vmatprep.subr.bf16.mxu0 0
        %798 = vmatpush1.bf16.msra.mxu0 0
        %799 = vmatprep.subr.bf16.mxu0 0
        %800 = vmatpush1.bf16.msra.mxu0 0
        %801 = vmatprep.subr.bf16.mxu0 0
        %802 = vmatpush1.bf16.msra.mxu0 0
        %803 = vmatprep.subr.bf16.mxu0 0
        %804 = vmatpush1.bf16.msra.mxu0 0
        %805 = vmatprep.subr.bf16.mxu0 0
        %806 = vmatpush1.bf16.msra.mxu0 0
        %807 = vmatprep.subr.bf16.mxu0 0
        %808 = vmatpush1.bf16.msra.mxu0 0
        %809 = vmatprep.subr.bf16.mxu0 0
        %810 = vmatpush1.bf16.msra.mxu0 0
        %811 = vmatprep.subr.bf16.mxu0 0
        %812 = vmatpush1.bf16.msra.mxu0 0
        %813 = vmatprep.subr.bf16.mxu0 0
        %814 = vmatpush1.bf16.msra.mxu0 0
        %815 = vmatprep.subr.bf16.mxu0 0
        %816 = vmatpush1.bf16.msra.mxu0 0
        %817 = vmatprep.subr.bf16.mxu0 0
        %818 = vmatpush1.bf16.msra.mxu0 0
        %819 = vmatprep.subr.bf16.mxu0 0
        %820 = vmatpush1.bf16.msra.mxu0 0
        %821 = vmatprep.mubr.bf16.mxu0 0
        %822 = vmatmul.mubr.bf16.gmra.mrb[0].mxu0 %v766
        %v823 = vpop.f32.mrb[0].mxu0
        %v824 = vadd.f32 %v763, %v823
        %v825 = vpop.f32.mrb[0].mxu0
        %v826 = vpop.f32.mrb[0].mxu0
        %v827 = vadd.f32 %v763, %v826
        %v828 = vpop.f32.mrb[0].mxu0
        %829 = vmatprep.mubr.bf16.mxu0 0
        %830 = vmatmul.mubr.bf16.gmra.mrb[0].mxu0 %v769
        %v831 = vpop.f32.mrb[0].mxu0
        %v832 = vadd.f32 %v763, %v831
        %v833 = vpop.f32.mrb[0].mxu0
        %v834 = vpop.f32.mrb[0].mxu0
        %v835 = vadd.f32 %v763, %v834
        %v836 = vpop.f32.mrb[0].mxu0
        %837 = vmatprep.mubr.bf16.mxu0 0
        %838 = vmatmul.mubr.bf16.gmra.mrb[0].mxu0 %v772
        %v839 = vpop.f32.mrb[0].mxu0
        %v840 = vadd.f32 %v763, %v839
        %v841 = vpop.f32.mrb[0].mxu0
        %v842 = vpop.f32.mrb[0].mxu0
        %v843 = vadd.f32 %v763, %v842
        %v844 = vpop.f32.mrb[0].mxu0
        %845 = vmatprep.mubr.bf16.mxu0 0
        %846 = vmatmul.mubr.bf16.gmra.mrb[0].mxu0 %v775
        %v847 = vpop.f32.mrb[0].mxu0
        %v848 = vadd.f32 %v763, %v847
        %v849 = vpop.f32.mrb[0].mxu0
        %v850 = vpop.f32.mrb[0].mxu0
        %v851 = vadd.f32 %v763, %v850
        %v852 = vpop.f32.mrb[0].mxu0
        %853 = vmatprep.mubr.bf16.mxu0 0
        %854 = vmatmul.mubr.bf16.gmra.mrb[0].mxu0 %v778
        %v855 = vpop.f32.mrb[0].mxu0
        %v856 = vadd.f32 %v763, %v855
        %v857 = vpop.f32.mrb[0].mxu0
        %v858 = vpop.f32.mrb[0].mxu0
        %v859 = vadd.f32 %v763, %v858
        %v860 = vpop.f32.mrb[0].mxu0
        %861 = vmatprep.mubr.bf16.mxu0 0
        %862 = vmatmul.mubr.bf16.gmra.mrb[0].mxu0 %v781
        %v863 = vpop.f32.mrb[0].mxu0
        %v864 = vadd.f32 %v763, %v863
        %v865 = vpop.f32.mrb[0].mxu0
        %v866 = vpop.f32.mrb[0].mxu0
        %v867 = vadd.f32 %v763, %v866
        %v868 = vpop.f32.mrb[0].mxu0
        %869 = vmatprep.mubr.bf16.mxu0 0
        %870 = vmatmul.mubr.bf16.gmra.mrb[0].mxu0 %v784
        %v871 = vpop.f32.mrb[0].mxu0
        %v872 = vadd.f32 %v763, %v871
        %v873 = vpop.f32.mrb[0].mxu0
        %v874 = vpop.f32.mrb[0].mxu0
        %v875 = vadd.f32 %v763, %v874
        %v876 = vpop.f32.mrb[0].mxu0
        %877 = vmatprep.mubr.bf16.mxu0 0
        %878 = vmatmul.mubr.bf16.gmra.mrb[0].mxu0 %v787
        %v879 = vpop.f32.mrb[0].mxu0
        %v880 = vadd.f32 %v763, %v879
        %v881 = vpop.f32.mrb[0].mxu0
        %v882 = vpop.f32.mrb[0].mxu0
        %v883 = vadd.f32 %v763, %v882
        %v884 = vpop.f32.mrb[0].mxu0
        %885 = vdwg.mxu0
        %v887 = vcombine.high %v743, %v743
        %v889 = vunpack.c.l.s4 1966171168
        %v890 = vunpack.c.0.s8 %v889
        %v891 = vlaneseq
        %v892 = vshrl.u32 %v891, 7
        %v893 = vsub.s32 %v890, %v892
        %v894 = vrot.slane %v743, %v893
        %v896 = vunpack.c.l.s4 1966171168
        %v897 = vunpack.c.0.s8 %v896
        %v898 = vlaneseq
        %v899 = vshrl.u32 %v898, 7
        %v900 = vsub.s32 %v897, %v899
        %v901 = vrot.slane %v887, %v900
        %v902 = vcombine.high %v894, %v894
        %v903 = vcombine.high %v901, %v901
        %v905 = vunpack.c.l.s4 1966171168
        %v906 = vunpack.c.0.s8 %v905
        %v907 = vlaneseq
        %v908 = vshrl.u32 %v907, 7
        %v909 = vsub.s32 %v906, %v908
        %v910 = vrot.slane %v894, %v909
        %v912 = vunpack.c.l.s4 1966171168
        %v913 = vunpack.c.0.s8 %v912
        %v914 = vlaneseq
        %v915 = vshrl.u32 %v914, 7
        %v916 = vsub.s32 %v913, %v915
        %v917 = vrot.slane %v901, %v916
        %v919 = vunpack.c.l.s4 1966171168
        %v920 = vunpack.c.0.s8 %v919
        %v921 = vlaneseq
        %v922 = vshrl.u32 %v921, 7
        %v923 = vsub.s32 %v920, %v922
        %v924 = vrot.slane %v902, %v923
        %v926 = vunpack.c.l.s4 1966171168
        %v927 = vunpack.c.0.s8 %v926
        %v928 = vlaneseq
        %v929 = vshrl.u32 %v928, 7
        %v930 = vsub.s32 %v927, %v929
        %v931 = vrot.slane %v903, %v930
        %v932 = vcombine.high %v910, %v910
        %v933 = vcombine.high %v917, %v917
        %v934 = vcombine.high %v924, %v924
        %v935 = vcombine.high %v931, %v931
        %v936 = vlaneseq
        %v937 = vshrl.u32 %v936, 7
        %v938 = vsub.s32 0, %v937
        %v939 = vrot.slane %v910, %v938
        %v940 = vlaneseq
        %v941 = vshrl.u32 %v940, 7
        %v942 = vsub.s32 0, %v941
        %v943 = vrot.slane %v924, %v942
        %v944 = vlaneseq
        %v945 = vshrl.u32 %v944, 7
        %v946 = vsub.s32 0, %v945
        %v947 = vrot.slane %v932, %v946
        %v948 = vlaneseq
        %v949 = vshrl.u32 %v948, 7
        %v950 = vsub.s32 0, %v949
        %v951 = vrot.slane %v934, %v950
        %v952 = vlaneseq
        %v953 = vshrl.u32 %v952, 7
        %v954 = vsub.s32 0, %v953
        %v955 = vrot.slane %v917, %v954
        %v956 = vlaneseq
        %v957 = vshrl.u32 %v956, 7
        %v958 = vsub.s32 0, %v957
        %v959 = vrot.slane %v931, %v958
        %v960 = vlaneseq
        %v961 = vshrl.u32 %v960, 7
        %v962 = vsub.s32 0, %v961
        %v963 = vrot.slane %v933, %v962
        %v964 = vlaneseq
        %v965 = vshrl.u32 %v964, 7
        %v966 = vsub.s32 0, %v965
        %v967 = vrot.slane %v935, %v966
        %v976 = vmul.f32 %v824, %v939
        %v977 = vmul.f32 %v827, %v939
        %v978 = vmul.f32 %v832, %v943
        %v979 = vmul.f32 %v835, %v943
        %v980 = vmul.f32 %v840, %v947
        %v981 = vmul.f32 %v843, %v947
        %v982 = vmul.f32 %v848, %v951
        %v983 = vmul.f32 %v851, %v951
        %v984 = vmul.f32 %v856, %v955
        %v985 = vmul.f32 %v859, %v955
        %v986 = vmul.f32 %v864, %v959
        %v987 = vmul.f32 %v867, %v959
        %v988 = vmul.f32 %v872, %v963
        %v989 = vmul.f32 %v875, %v963
        %v990 = vmul.f32 %v880, %v967
        %v991 = vmul.f32 %v883, %v967
        %v992 = vpack.c.bf16 %v977, %v976
        %v993 = vpack.c.bf16 %v979, %v978
        %v994 = vpack.c.bf16 %v981, %v980
        %v995 = vpack.c.bf16 %v983, %v982
        %v996 = vpack.c.bf16 %v985, %v984
        %v997 = vpack.c.bf16 %v987, %v986
        %v998 = vpack.c.bf16 %v989, %v988
        %v999 = vpack.c.bf16 %v991, %v990
        %v1000 = vld [vmem:[#allocation16] sm:$0xf]
        %v1001 = vld [vmem:[#allocation16 + $0x4] sm:$0xf]
        %v1002 = vld [vmem:[#allocation16 + $0x8] sm:$0xf]
        %v1003 = vld [vmem:[#allocation16 + $0xc] sm:$0xf]
        %v1008 = vunpack.c.l.b16 %v1000
        %v1009 = vunpack.c.l.b16 %v1001
        %v1010 = vunpack.c.l.b16 %v1002
        %v1011 = vunpack.c.l.b16 %v1003
        %v1012 = vpack.c.b16 %v1009, %v1008
        %v1013 = vpack.c.b16 %v1011, %v1010
        %v1017 = vsel %vm522, %v992, 0
        %v1020 = vsel %vm522, %v993, 0
        %v1023 = vsel %vm522, %v994, 0
        %v1026 = vsel %vm522, %v995, 0
        %v1029 = vsel %vm522, %v996, 0
        %v1032 = vsel %vm522, %v997, 0
        %v1035 = vsel %vm522, %v998, 0
        %v1038 = vsel %vm522, %v999, 0
        %1040 = vmatprep.subr.bf16.mxu0 0
        %1041 = vmatpush1.bf16.msra.mxu0 %v1012
        %1042 = vmatprep.subr.bf16.mxu0 0
        %1043 = vmatpush1.bf16.msra.mxu0 %v1013
        %1044 = vmatprep.subr.bf16.mxu0 0
        %1045 = vmatpush1.bf16.msra.mxu0 0
        %1046 = vmatprep.subr.bf16.mxu0 0
        %1047 = vmatpush1.bf16.msra.mxu0 0
        %1048 = vmatprep.subr.bf16.mxu0 0
        %1049 = vmatpush1.bf16.msra.mxu0 0
        %1050 = vmatprep.subr.bf16.mxu0 0
        %1051 = vmatpush1.bf16.msra.mxu0 0
        %1052 = vmatprep.subr.bf16.mxu0 0
        %1053 = vmatpush1.bf16.msra.mxu0 0
        %1054 = vmatprep.subr.bf16.mxu0 0
        %1055 = vmatpush1.bf16.msra.mxu0 0
        %1056 = vmatprep.subr.bf16.mxu0 0
        %1057 = vmatpush1.bf16.msra.mxu0 0
        %1058 = vmatprep.subr.bf16.mxu0 0
        %1059 = vmatpush1.bf16.msra.mxu0 0
        %1060 = vmatprep.subr.bf16.mxu0 0
        %1061 = vmatpush1.bf16.msra.mxu0 0
        %1062 = vmatprep.subr.bf16.mxu0 0
        %1063 = vmatpush1.bf16.msra.mxu0 0
        %1064 = vmatprep.subr.bf16.mxu0 0
        %1065 = vmatpush1.bf16.msra.mxu0 0
        %1066 = vmatprep.subr.bf16.mxu0 0
        %1067 = vmatpush1.bf16.msra.mxu0 0
        %1068 = vmatprep.subr.bf16.mxu0 0
        %1069 = vmatpush1.bf16.msra.mxu0 0
        %1070 = vmatprep.subr.bf16.mxu0 0
        %1071 = vmatpush1.bf16.msra.mxu0 0
        %1072 = vmatprep.mubr.bf16.mxu0 0
        %1073 = vmatmul.mubr.bf16.gmra.mrb[0].mxu0 %v1017
        %v1074 = vpop.f32.mrb[0].mxu0
        %v1075 = vadd.f32 0.0, %v1074
        %v1076 = vpop.f32.mrb[0].mxu0
        %v1077 = vpop.f32.mrb[0].mxu0
        %v1078 = vadd.f32 0.0, %v1077
        %v1079 = vpop.f32.mrb[0].mxu0
        %1080 = vmatprep.mubr.bf16.mxu0 0
        %1081 = vmatmul.mubr.bf16.gmra.mrb[0].mxu0 %v1020
        %v1082 = vpop.f32.mrb[0].mxu0
        %v1083 = vadd.f32 0.0, %v1082
        %v1084 = vpop.f32.mrb[0].mxu0
        %v1085 = vpop.f32.mrb[0].mxu0
        %v1086 = vadd.f32 0.0, %v1085
        %v1087 = vpop.f32.mrb[0].mxu0
        %1088 = vmatprep.mubr.bf16.mxu0 0
        %1089 = vmatmul.mubr.bf16.gmra.mrb[0].mxu0 %v1023
        %v1090 = vpop.f32.mrb[0].mxu0
        %v1091 = vadd.f32 0.0, %v1090
        %v1092 = vpop.f32.mrb[0].mxu0
        %v1093 = vpop.f32.mrb[0].mxu0
        %v1094 = vadd.f32 0.0, %v1093
        %v1095 = vpop.f32.mrb[0].mxu0
        %1096 = vmatprep.mubr.bf16.mxu0 0
        %1097 = vmatmul.mubr.bf16.gmra.mrb[0].mxu0 %v1026
        %v1098 = vpop.f32.mrb[0].mxu0
        %v1099 = vadd.f32 0.0, %v1098
        %v1100 = vpop.f32.mrb[0].mxu0
        %v1101 = vpop.f32.mrb[0].mxu0
        %v1102 = vadd.f32 0.0, %v1101
        %v1103 = vpop.f32.mrb[0].mxu0
        %1104 = vmatprep.mubr.bf16.mxu0 0
        %1105 = vmatmul.mubr.bf16.gmra.mrb[0].mxu0 %v1029
        %v1106 = vpop.f32.mrb[0].mxu0
        %v1107 = vadd.f32 0.0, %v1106
        %v1108 = vpop.f32.mrb[0].mxu0
        %v1109 = vpop.f32.mrb[0].mxu0
        %v1110 = vadd.f32 0.0, %v1109
        %v1111 = vpop.f32.mrb[0].mxu0
        %1112 = vmatprep.mubr.bf16.mxu0 0
        %1113 = vmatmul.mubr.bf16.gmra.mrb[0].mxu0 %v1032
        %v1114 = vpop.f32.mrb[0].mxu0
        %v1115 = vadd.f32 0.0, %v1114
        %v1116 = vpop.f32.mrb[0].mxu0
        %v1117 = vpop.f32.mrb[0].mxu0
        %v1118 = vadd.f32 0.0, %v1117
        %v1119 = vpop.f32.mrb[0].mxu0
        %1120 = vmatprep.mubr.bf16.mxu0 0
        %1121 = vmatmul.mubr.bf16.gmra.mrb[0].mxu0 %v1035
        %v1122 = vpop.f32.mrb[0].mxu0
        %v1123 = vadd.f32 0.0, %v1122
        %v1124 = vpop.f32.mrb[0].mxu0
        %v1125 = vpop.f32.mrb[0].mxu0
        %v1126 = vadd.f32 0.0, %v1125
        %v1127 = vpop.f32.mrb[0].mxu0
        %1128 = vmatprep.mubr.bf16.mxu0 0
        %1129 = vmatmul.mubr.bf16.gmra.mrb[0].mxu0 %v1038
        %v1130 = vpop.f32.mrb[0].mxu0
        %v1131 = vadd.f32 0.0, %v1130
        %v1132 = vpop.f32.mrb[0].mxu0
        %v1133 = vpop.f32.mrb[0].mxu0
        %v1134 = vadd.f32 0.0, %v1133
        %v1135 = vpop.f32.mrb[0].mxu0
        %1136 = vdwg.mxu0
        %v1137 = vld [vmem:[#allocation8] sm:$0xff]
        %v1138 = vld [vmem:[#allocation8 + $0x8] sm:$0xff]
        %v1139 = vadd.f32 %v1075, %v1137
        %v1140 = vadd.f32 %v1078, %v1138
        %v1141 = vadd.f32 %v1083, %v1137
        %v1142 = vadd.f32 %v1086, %v1138
        %v1143 = vadd.f32 %v1091, %v1137
        %v1144 = vadd.f32 %v1094, %v1138
        %v1145 = vadd.f32 %v1099, %v1137
        %v1146 = vadd.f32 %v1102, %v1138
        %v1147 = vadd.f32 %v1107, %v1137
        %v1148 = vadd.f32 %v1110, %v1138
        %v1149 = vadd.f32 %v1115, %v1137
        %v1150 = vadd.f32 %v1118, %v1138
        %v1151 = vadd.f32 %v1123, %v1137
        %v1152 = vadd.f32 %v1126, %v1138
        %v1153 = vadd.f32 %v1131, %v1137
        %v1154 = vadd.f32 %v1134, %v1138
        %1155 = vrot.lane.b32.xlu0 %v743, 32
        %v1156 = vpop.permute.xlu0 %1155
        %v1158 = vmul.f32 %v743, %v1156
        %v1159 = vpack.c.bf16 %v1158, %v1158
        %1161 = vrot.lane.b32.xlu0 %v1159, 96
        %v1162 = vpop.permute.xlu0 %1161
        %v1164 = vsel %vm522, %v1162, 0
        %1166 = vmatprep.subr.bf16.mxu0 0
        %1167 = vmatpush1.bf16.msra.mxu0 %v1012
        %1168 = vmatprep.subr.bf16.mxu0 0
        %1169 = vmatpush1.bf16.msra.mxu0 %v1013
        %1170 = vmatprep.subr.bf16.mxu0 0
        %1171 = vmatpush1.bf16.msra.mxu0 0
        %1172 = vmatprep.subr.bf16.mxu0 0
        %1173 = vmatpush1.bf16.msra.mxu0 0
        %1174 = vmatprep.subr.bf16.mxu0 0
        %1175 = vmatpush1.bf16.msra.mxu0 0
        %1176 = vmatprep.subr.bf16.mxu0 0
        %1177 = vmatpush1.bf16.msra.mxu0 0
        %1178 = vmatprep.subr.bf16.mxu0 0
        %1179 = vmatpush1.bf16.msra.mxu0 0
        %1180 = vmatprep.subr.bf16.mxu0 0
        %1181 = vmatpush1.bf16.msra.mxu0 0
        %1182 = vmatprep.subr.bf16.mxu0 0
        %1183 = vmatpush1.bf16.msra.mxu0 0
        %1184 = vmatprep.subr.bf16.mxu0 0
        %1185 = vmatpush1.bf16.msra.mxu0 0
        %1186 = vmatprep.subr.bf16.mxu0 0
        %1187 = vmatpush1.bf16.msra.mxu0 0
        %1188 = vmatprep.subr.bf16.mxu0 0
        %1189 = vmatpush1.bf16.msra.mxu0 0
        %1190 = vmatprep.subr.bf16.mxu0 0
        %1191 = vmatpush1.bf16.msra.mxu0 0
        %1192 = vmatprep.subr.bf16.mxu0 0
        %1193 = vmatpush1.bf16.msra.mxu0 0
        %1194 = vmatprep.subr.bf16.mxu0 0
        %1195 = vmatpush1.bf16.msra.mxu0 0
        %1196 = vmatprep.subr.bf16.mxu0 0
        %1197 = vmatpush1.bf16.msra.mxu0 0
        %1198 = vmatprep.mubr.bf16.mxu0 0
        %1199 = vmatmul.mubr.bf16.gmra.mrb[0].mxu0 %v1164
        %v1200 = vpop.f32.mrb[0].mxu0
        %v1201 = vadd.f32 0.0, %v1200
        %v1202 = vpop.f32.mrb[0].mxu0
        %v1203 = vpop.f32.mrb[0].mxu0
        %v1204 = vpop.f32.mrb[0].mxu0
        %1205 = vdwg.mxu0
        %v1206 = vmax.f32 %v1139, %v1140
        %v1207 = vrot.slane %v1206, 4
        %v1208 = vmax.f32 %v1206, %v1207
        %v1209 = vrot.slane %v1208, 2
        %v1210 = vmax.f32 %v1208, %v1209
        %v1211 = vrot.slane %v1210, 1
        %v1212 = vmax.f32 %v1210, %v1211
        %v1213 = vmax.f32 %v1141, %v1142
        %v1214 = vrot.slane %v1213, 4
        %v1215 = vmax.f32 %v1213, %v1214
        %v1216 = vrot.slane %v1215, 2
        %v1217 = vmax.f32 %v1215, %v1216
        %v1218 = vrot.slane %v1217, 1
        %v1219 = vmax.f32 %v1217, %v1218
        %v1220 = vmax.f32 %v1143, %v1144
        %v1221 = vrot.slane %v1220, 4
        %v1222 = vmax.f32 %v1220, %v1221
        %v1223 = vrot.slane %v1222, 2
        %v1224 = vmax.f32 %v1222, %v1223
        %v1225 = vrot.slane %v1224, 1
        %v1226 = vmax.f32 %v1224, %v1225
        %v1227 = vmax.f32 %v1145, %v1146
        %v1228 = vrot.slane %v1227, 4
        %v1229 = vmax.f32 %v1227, %v1228
        %v1230 = vrot.slane %v1229, 2
        %v1231 = vmax.f32 %v1229, %v1230
        %v1232 = vrot.slane %v1231, 1
        %v1233 = vmax.f32 %v1231, %v1232
        %v1234 = vmax.f32 %v1147, %v1148
        %v1235 = vrot.slane %v1234, 4
        %v1236 = vmax.f32 %v1234, %v1235
        %v1237 = vrot.slane %v1236, 2
        %v1238 = vmax.f32 %v1236, %v1237
        %v1239 = vrot.slane %v1238, 1
        %v1240 = vmax.f32 %v1238, %v1239
        %v1241 = vmax.f32 %v1149, %v1150
        %v1242 = vrot.slane %v1241, 4
        %v1243 = vmax.f32 %v1241, %v1242
        %v1244 = vrot.slane %v1243, 2
        %v1245 = vmax.f32 %v1243, %v1244
        %v1246 = vrot.slane %v1245, 1
        %v1247 = vmax.f32 %v1245, %v1246
        %v1248 = vmax.f32 %v1151, %v1152
        %v1249 = vrot.slane %v1248, 4
        %v1250 = vmax.f32 %v1248, %v1249
        %v1251 = vrot.slane %v1250, 2
        %v1252 = vmax.f32 %v1250, %v1251
        %v1253 = vrot.slane %v1252, 1
        %v1254 = vmax.f32 %v1252, %v1253
        %v1255 = vmax.f32 %v1153, %v1154
        %v1256 = vrot.slane %v1255, 4
        %v1257 = vmax.f32 %v1255, %v1256
        %v1258 = vrot.slane %v1257, 2
        %v1259 = vmax.f32 %v1257, %v1258
        %v1260 = vrot.slane %v1259, 1
        %v1261 = vmax.f32 %v1259, %v1260
        %v1270 = vsel %vm672, %v1219, %v1212
        %v1271 = vsel %vm675, %v1226, %v1270
        %v1272 = vsel %vm678, %v1233, %v1271
        %v1273 = vsel %vm681, %v1240, %v1272
        %v1274 = vsel %vm684, %v1247, %v1273
        %v1275 = vsel %vm687, %v1254, %v1274
        %v1276 = vsel %vm690, %v1261, %v1275
        %v1278 = vmax.f32 %v1201, %v1276
        %v1279 = vsub.f32 %v1201, %v1278
        %v1280 = vmul.f32 %v1279, 1.442695
        %v1281 = vpow.pop %v1280
        %v1283 = vcombine.high %v1278, %v1278
        %v1285 = vunpack.c.l.s4 1966171168
        %v1286 = vunpack.c.0.s8 %v1285
        %v1287 = vlaneseq
        %v1288 = vshrl.u32 %v1287, 7
        %v1289 = vsub.s32 %v1286, %v1288
        %v1290 = vrot.slane %v1278, %v1289
        %v1292 = vunpack.c.l.s4 1966171168
        %v1293 = vunpack.c.0.s8 %v1292
        %v1294 = vlaneseq
        %v1295 = vshrl.u32 %v1294, 7
        %v1296 = vsub.s32 %v1293, %v1295
        %v1297 = vrot.slane %v1283, %v1296
        %v1298 = vcombine.high %v1290, %v1290
        %v1299 = vcombine.high %v1297, %v1297
        %v1301 = vunpack.c.l.s4 1966171168
        %v1302 = vunpack.c.0.s8 %v1301
        %v1303 = vlaneseq
        %v1304 = vshrl.u32 %v1303, 7
        %v1305 = vsub.s32 %v1302, %v1304
        %v1306 = vrot.slane %v1290, %v1305
        %v1308 = vunpack.c.l.s4 1966171168
        %v1309 = vunpack.c.0.s8 %v1308
        %v1310 = vlaneseq
        %v1311 = vshrl.u32 %v1310, 7
        %v1312 = vsub.s32 %v1309, %v1311
        %v1313 = vrot.slane %v1297, %v1312
        %v1315 = vunpack.c.l.s4 1966171168
        %v1316 = vunpack.c.0.s8 %v1315
        %v1317 = vlaneseq
        %v1318 = vshrl.u32 %v1317, 7
        %v1319 = vsub.s32 %v1316, %v1318
        %v1320 = vrot.slane %v1298, %v1319
        %v1322 = vunpack.c.l.s4 1966171168
        %v1323 = vunpack.c.0.s8 %v1322
        %v1324 = vlaneseq
        %v1325 = vshrl.u32 %v1324, 7
        %v1326 = vsub.s32 %v1323, %v1325
        %v1327 = vrot.slane %v1299, %v1326
        %v1328 = vcombine.high %v1306, %v1306
        %v1329 = vcombine.high %v1313, %v1313
        %v1330 = vcombine.high %v1320, %v1320
        %v1331 = vcombine.high %v1327, %v1327
        %v1332 = vlaneseq
        %v1333 = vshrl.u32 %v1332, 7
        %v1334 = vsub.s32 0, %v1333
        %v1335 = vrot.slane %v1306, %v1334
        %v1336 = vlaneseq
        %v1337 = vshrl.u32 %v1336, 7
        %v1338 = vsub.s32 0, %v1337
        %v1339 = vrot.slane %v1320, %v1338
        %v1340 = vlaneseq
        %v1341 = vshrl.u32 %v1340, 7
        %v1342 = vsub.s32 0, %v1341
        %v1343 = vrot.slane %v1328, %v1342
        %v1344 = vlaneseq
        %v1345 = vshrl.u32 %v1344, 7
        %v1346 = vsub.s32 0, %v1345
        %v1347 = vrot.slane %v1330, %v1346
        %v1348 = vlaneseq
        %v1349 = vshrl.u32 %v1348, 7
        %v1350 = vsub.s32 0, %v1349
        %v1351 = vrot.slane %v1313, %v1350
        %v1352 = vlaneseq
        %v1353 = vshrl.u32 %v1352, 7
        %v1354 = vsub.s32 0, %v1353
        %v1355 = vrot.slane %v1327, %v1354
        %v1356 = vlaneseq
        %v1357 = vshrl.u32 %v1356, 7
        %v1358 = vsub.s32 0, %v1357
        %v1359 = vrot.slane %v1329, %v1358
        %v1360 = vlaneseq
        %v1361 = vshrl.u32 %v1360, 7
        %v1362 = vsub.s32 0, %v1361
        %v1363 = vrot.slane %v1331, %v1362
        %v1372 = vsub.f32 %v1139, %v1335
        %v1373 = vsub.f32 %v1140, %v1335
        %v1374 = vsub.f32 %v1141, %v1339
        %v1375 = vsub.f32 %v1142, %v1339
        %v1376 = vsub.f32 %v1143, %v1343
        %v1377 = vsub.f32 %v1144, %v1343
        %v1378 = vsub.f32 %v1145, %v1347
        %v1379 = vsub.f32 %v1146, %v1347
        %v1380 = vsub.f32 %v1147, %v1351
        %v1381 = vsub.f32 %v1148, %v1351
        %v1382 = vsub.f32 %v1149, %v1355
        %v1383 = vsub.f32 %v1150, %v1355
        %v1384 = vsub.f32 %v1151, %v1359
        %v1385 = vsub.f32 %v1152, %v1359
        %v1386 = vsub.f32 %v1153, %v1363
        %v1387 = vsub.f32 %v1154, %v1363
        %v1388 = vmul.f32 %v1372, 1.442695
        %v1389 = vpow.pop %v1388
        %v1390 = vmul.f32 %v1373, 1.442695
        %v1391 = vpow.pop %v1390
        %v1392 = vmul.f32 %v1374, 1.442695
        %v1393 = vpow.pop %v1392
        %v1394 = vmul.f32 %v1375, 1.442695
        %v1395 = vpow.pop %v1394
        %v1396 = vmul.f32 %v1376, 1.442695
        %v1397 = vpow.pop %v1396
        %v1398 = vmul.f32 %v1377, 1.442695
        %v1399 = vpow.pop %v1398
        %v1400 = vmul.f32 %v1378, 1.442695
        %v1401 = vpow.pop %v1400
        %v1402 = vmul.f32 %v1379, 1.442695
        %v1403 = vpow.pop %v1402
        %v1404 = vmul.f32 %v1380, 1.442695
        %v1405 = vpow.pop %v1404
        %v1406 = vmul.f32 %v1381, 1.442695
        %v1407 = vpow.pop %v1406
        %v1408 = vmul.f32 %v1382, 1.442695
        %v1409 = vpow.pop %v1408
        %v1410 = vmul.f32 %v1383, 1.442695
        %v1411 = vpow.pop %v1410
        %v1412 = vmul.f32 %v1384, 1.442695
        %v1413 = vpow.pop %v1412
        %v1414 = vmul.f32 %v1385, 1.442695
        %v1415 = vpow.pop %v1414
        %v1416 = vmul.f32 %v1386, 1.442695
        %v1417 = vpow.pop %v1416
        %v1418 = vmul.f32 %v1387, 1.442695
        %v1419 = vpow.pop %v1418
        %v1420 = vadd.f32 %v1389, %v1391
        %v1421 = vrot.slane %v1420, 4
        %v1422 = vadd.f32 %v1420, %v1421
        %v1423 = vrot.slane %v1422, 2
        %v1424 = vadd.f32 %v1422, %v1423
        %v1425 = vrot.slane %v1424, 1
        %v1426 = vadd.f32 %v1424, %v1425
        %v1427 = vadd.f32 %v1393, %v1395
        %v1428 = vrot.slane %v1427, 4
        %v1429 = vadd.f32 %v1427, %v1428
        %v1430 = vrot.slane %v1429, 2
        %v1431 = vadd.f32 %v1429, %v1430
        %v1432 = vrot.slane %v1431, 1
        %v1433 = vadd.f32 %v1431, %v1432
        %v1434 = vadd.f32 %v1397, %v1399
        %v1435 = vrot.slane %v1434, 4
        %v1436 = vadd.f32 %v1434, %v1435
        %v1437 = vrot.slane %v1436, 2
        %v1438 = vadd.f32 %v1436, %v1437
        %v1439 = vrot.slane %v1438, 1
        %v1440 = vadd.f32 %v1438, %v1439
        %v1441 = vadd.f32 %v1401, %v1403
        %v1442 = vrot.slane %v1441, 4
        %v1443 = vadd.f32 %v1441, %v1442
        %v1444 = vrot.slane %v1443, 2
        %v1445 = vadd.f32 %v1443, %v1444
        %v1446 = vrot.slane %v1445, 1
        %v1447 = vadd.f32 %v1445, %v1446
        %v1448 = vadd.f32 %v1405, %v1407
        %v1449 = vrot.slane %v1448, 4
        %v1450 = vadd.f32 %v1448, %v1449
        %v1451 = vrot.slane %v1450, 2
        %v1452 = vadd.f32 %v1450, %v1451
        %v1453 = vrot.slane %v1452, 1
        %v1454 = vadd.f32 %v1452, %v1453
        %v1455 = vadd.f32 %v1409, %v1411
        %v1456 = vrot.slane %v1455, 4
        %v1457 = vadd.f32 %v1455, %v1456
        %v1458 = vrot.slane %v1457, 2
        %v1459 = vadd.f32 %v1457, %v1458
        %v1460 = vrot.slane %v1459, 1
        %v1461 = vadd.f32 %v1459, %v1460
        %v1462 = vadd.f32 %v1413, %v1415
        %v1463 = vrot.slane %v1462, 4
        %v1464 = vadd.f32 %v1462, %v1463
        %v1465 = vrot.slane %v1464, 2
        %v1466 = vadd.f32 %v1464, %v1465
        %v1467 = vrot.slane %v1466, 1
        %v1468 = vadd.f32 %v1466, %v1467
        %v1469 = vadd.f32 %v1417, %v1419
        %v1470 = vrot.slane %v1469, 4
        %v1471 = vadd.f32 %v1469, %v1470
        %v1472 = vrot.slane %v1471, 2
        %v1473 = vadd.f32 %v1471, %v1472
        %v1474 = vrot.slane %v1473, 1
        %v1475 = vadd.f32 %v1473, %v1474
        %v1484 = vsel %vm672, %v1433, %v1426
        %v1485 = vsel %vm675, %v1440, %v1484
        %v1486 = vsel %vm678, %v1447, %v1485
        %v1487 = vsel %vm681, %v1454, %v1486
        %v1488 = vsel %vm684, %v1461, %v1487
        %v1489 = vsel %vm687, %v1468, %v1488
        %v1490 = vsel %vm690, %v1475, %v1489
        %v1492 = vadd.f32 %v1281, %v1490
        %v1493 = vrcp.pop %v1492
        %v1494 = vmul.f32 %v1281, %v1493
        %v1496 = vcombine.high %v1493, %v1493
        %v1498 = vunpack.c.l.s4 1966171168
        %v1499 = vunpack.c.0.s8 %v1498
        %v1500 = vlaneseq
        %v1501 = vshrl.u32 %v1500, 7
        %v1502 = vsub.s32 %v1499, %v1501
        %v1503 = vrot.slane %v1493, %v1502
        %v1505 = vunpack.c.l.s4 1966171168
        %v1506 = vunpack.c.0.s8 %v1505
        %v1507 = vlaneseq
        %v1508 = vshrl.u32 %v1507, 7
        %v1509 = vsub.s32 %v1506, %v1508
        %v1510 = vrot.slane %v1496, %v1509
        %v1511 = vcombine.high %v1503, %v1503
        %v1512 = vcombine.high %v1510, %v1510
        %v1514 = vunpack.c.l.s4 1966171168
        %v1515 = vunpack.c.0.s8 %v1514
        %v1516 = vlaneseq
        %v1517 = vshrl.u32 %v1516, 7
        %v1518 = vsub.s32 %v1515, %v1517
        %v1519 = vrot.slane %v1503, %v1518
        %v1521 = vunpack.c.l.s4 1966171168
        %v1522 = vunpack.c.0.s8 %v1521
        %v1523 = vlaneseq
        %v1524 = vshrl.u32 %v1523, 7
        %v1525 = vsub.s32 %v1522, %v1524
        %v1526 = vrot.slane %v1510, %v1525
        %v1528 = vunpack.c.l.s4 1966171168
        %v1529 = vunpack.c.0.s8 %v1528
        %v1530 = vlaneseq
        %v1531 = vshrl.u32 %v1530, 7
        %v1532 = vsub.s32 %v1529, %v1531
        %v1533 = vrot.slane %v1511, %v1532
        %v1535 = vunpack.c.l.s4 1966171168
        %v1536 = vunpack.c.0.s8 %v1535
        %v1537 = vlaneseq
        %v1538 = vshrl.u32 %v1537, 7
        %v1539 = vsub.s32 %v1536, %v1538
        %v1540 = vrot.slane %v1512, %v1539
        %v1541 = vcombine.high %v1519, %v1519
        %v1542 = vcombine.high %v1526, %v1526
        %v1543 = vcombine.high %v1533, %v1533
        %v1544 = vcombine.high %v1540, %v1540
        %v1545 = vlaneseq
        %v1546 = vshrl.u32 %v1545, 7
        %v1547 = vsub.s32 0, %v1546
        %v1548 = vrot.slane %v1519, %v1547
        %v1549 = vlaneseq
        %v1550 = vshrl.u32 %v1549, 7
        %v1551 = vsub.s32 0, %v1550
        %v1552 = vrot.slane %v1533, %v1551
        %v1553 = vlaneseq
        %v1554 = vshrl.u32 %v1553, 7
        %v1555 = vsub.s32 0, %v1554
        %v1556 = vrot.slane %v1541, %v1555
        %v1557 = vlaneseq
        %v1558 = vshrl.u32 %v1557, 7
        %v1559 = vsub.s32 0, %v1558
        %v1560 = vrot.slane %v1543, %v1559
        %v1561 = vlaneseq
        %v1562 = vshrl.u32 %v1561, 7
        %v1563 = vsub.s32 0, %v1562
        %v1564 = vrot.slane %v1526, %v1563
        %v1565 = vlaneseq
        %v1566 = vshrl.u32 %v1565, 7
        %v1567 = vsub.s32 0, %v1566
        %v1568 = vrot.slane %v1540, %v1567
        %v1569 = vlaneseq
        %v1570 = vshrl.u32 %v1569, 7
        %v1571 = vsub.s32 0, %v1570
        %v1572 = vrot.slane %v1542, %v1571
        %v1573 = vlaneseq
        %v1574 = vshrl.u32 %v1573, 7
        %v1575 = vsub.s32 0, %v1574
        %v1576 = vrot.slane %v1544, %v1575
        %v1585 = vmul.f32 %v1389, %v1548
        %v1586 = vmul.f32 %v1391, %v1548
        %v1587 = vmul.f32 %v1393, %v1552
        %v1588 = vmul.f32 %v1395, %v1552
        %v1589 = vmul.f32 %v1397, %v1556
        %v1590 = vmul.f32 %v1399, %v1556
        %v1591 = vmul.f32 %v1401, %v1560
        %v1592 = vmul.f32 %v1403, %v1560
        %v1593 = vmul.f32 %v1405, %v1564
        %v1594 = vmul.f32 %v1407, %v1564
        %v1595 = vmul.f32 %v1409, %v1568
        %v1596 = vmul.f32 %v1411, %v1568
        %v1597 = vmul.f32 %v1413, %v1572
        %v1598 = vmul.f32 %v1415, %v1572
        %v1599 = vmul.f32 %v1417, %v1576
        %v1600 = vmul.f32 %v1419, %v1576
        %v1601 = vpack.c.bf16 %v1494, %v1494
        %v1602 = vld [vmem:[#allocation17] sm:$0xf]
        %v1603 = vld [vmem:[#allocation17 + $0x4] sm:$0xf]
        %v1604 = vld [vmem:[#allocation17 + $0x8] sm:$0xf]
        %v1605 = vld [vmem:[#allocation17 + $0xc] sm:$0xf]
        %v1606 = vld [vmem:[#allocation17 + $0x10] sm:$0xf]
        %v1607 = vld [vmem:[#allocation17 + $0x14] sm:$0xf]
        %v1608 = vld [vmem:[#allocation17 + $0x18] sm:$0xf]
        %v1609 = vld [vmem:[#allocation17 + $0x1c] sm:$0xf]
        %v1610 = vld [vmem:[#allocation17 + $0x20] sm:$0xf]
        %v1611 = vld [vmem:[#allocation17 + $0x24] sm:$0xf]
        %v1612 = vld [vmem:[#allocation17 + $0x28] sm:$0xf]
        %v1613 = vld [vmem:[#allocation17 + $0x2c] sm:$0xf]
        %v1614 = vld [vmem:[#allocation17 + $0x30] sm:$0xf]
        %v1615 = vld [vmem:[#allocation17 + $0x34] sm:$0xf]
        %v1616 = vld [vmem:[#allocation17 + $0x38] sm:$0xf]
        %v1617 = vld [vmem:[#allocation17 + $0x3c] sm:$0xf]
        %v1634 = vunpack.c.l.b16 %v1602
        %v1635 = vunpack.c.l.b16 %v1603
        %v1636 = vunpack.c.l.b16 %v1604
        %v1637 = vunpack.c.l.b16 %v1605
        %v1638 = vunpack.c.l.b16 %v1606
        %v1639 = vunpack.c.l.b16 %v1607
        %v1640 = vunpack.c.l.b16 %v1608
        %v1641 = vunpack.c.l.b16 %v1609
        %v1642 = vunpack.c.l.b16 %v1610
        %v1643 = vunpack.c.l.b16 %v1611
        %v1644 = vunpack.c.l.b16 %v1612
        %v1645 = vunpack.c.l.b16 %v1613
        %v1646 = vunpack.c.l.b16 %v1614
        %v1647 = vunpack.c.l.b16 %v1615
        %v1648 = vunpack.c.l.b16 %v1616
        %v1649 = vunpack.c.l.b16 %v1617
        %v1650 = vpack.c.b16 %v1635, %v1634
        %v1651 = vpack.c.b16 %v1637, %v1636
        %v1652 = vpack.c.b16 %v1639, %v1638
        %v1653 = vpack.c.b16 %v1641, %v1640
        %v1654 = vpack.c.b16 %v1643, %v1642
        %v1655 = vpack.c.b16 %v1645, %v1644
        %v1656 = vpack.c.b16 %v1647, %v1646
        %v1657 = vpack.c.b16 %v1649, %v1648
        %1666 = vmatprep.subr.bf16.mxu0 0
        %1667 = vmatpush1.bf16.msra.mxu0 %v1650
        %1668 = vmatprep.subr.bf16.mxu0 0
        %1669 = vmatpush1.bf16.msra.mxu0 %v1651
        %1670 = vmatprep.subr.bf16.mxu0 0
        %1671 = vmatpush1.bf16.msra.mxu0 %v1652
        %1672 = vmatprep.subr.bf16.mxu0 0
        %1673 = vmatpush1.bf16.msra.mxu0 %v1653
        %1674 = vmatprep.subr.bf16.mxu0 0
        %1675 = vmatpush1.bf16.msra.mxu0 %v1654
        %1676 = vmatprep.subr.bf16.mxu0 0
        %1677 = vmatpush1.bf16.msra.mxu0 %v1655
        %1678 = vmatprep.subr.bf16.mxu0 0
        %1679 = vmatpush1.bf16.msra.mxu0 %v1656
        %1680 = vmatprep.subr.bf16.mxu0 0
        %1681 = vmatpush1.bf16.msra.mxu0 %v1657
        %1682 = vmatprep.subr.bf16.mxu0 0
        %1683 = vmatpush1.bf16.msra.mxu0 0
        %1684 = vmatprep.subr.bf16.mxu0 0
        %1685 = vmatpush1.bf16.msra.mxu0 0
        %1686 = vmatprep.subr.bf16.mxu0 0
        %1687 = vmatpush1.bf16.msra.mxu0 0
        %1688 = vmatprep.subr.bf16.mxu0 0
        %1689 = vmatpush1.bf16.msra.mxu0 0
        %1690 = vmatprep.subr.bf16.mxu0 0
        %1691 = vmatpush1.bf16.msra.mxu0 0
        %1692 = vmatprep.subr.bf16.mxu0 0
        %1693 = vmatpush1.bf16.msra.mxu0 0
        %1694 = vmatprep.subr.bf16.mxu0 0
        %1695 = vmatpush1.bf16.msra.mxu0 0
        %1696 = vmatprep.subr.bf16.mxu0 0
        %1697 = vmatpush1.bf16.msra.mxu0 0
        %1698 = vmatprep.mubr.bf16.mxu0 0
        %1699 = vmatmul.mubr.bf16.gmra.mrb[0].mxu0 %v1601
        %v1700 = vpop.f32.mrb[0].mxu0
        %v1701 = vadd.f32 0.0, %v1700
        %v1702 = vpop.f32.mrb[0].mxu0
        %v1703 = vpop.f32.mrb[0].mxu0
        %v1704 = vpop.f32.mrb[0].mxu0
        %1705 = vdwg.mxu0
        %v1706 = vpack.c.bf16 %v1586, %v1585
        %v1707 = vpack.c.bf16 %v1588, %v1587
        %v1708 = vpack.c.bf16 %v1590, %v1589
        %v1709 = vpack.c.bf16 %v1592, %v1591
        %v1710 = vpack.c.bf16 %v1594, %v1593
        %v1711 = vpack.c.bf16 %v1596, %v1595
        %v1712 = vpack.c.bf16 %v1598, %v1597
        %v1713 = vpack.c.bf16 %v1600, %v1599
        %1714 = vmatprep.subr.bf16.mxu0 0
        %1715 = vmatpush1.bf16.msra.mxu0 %v1650
        %1716 = vmatprep.subr.bf16.mxu0 0
        %1717 = vmatpush1.bf16.msra.mxu0 %v1651
        %1718 = vmatprep.subr.bf16.mxu0 0
        %1719 = vmatpush1.bf16.msra.mxu0 %v1652
        %1720 = vmatprep.subr.bf16.mxu0 0
        %1721 = vmatpush1.bf16.msra.mxu0 %v1653
        %1722 = vmatprep.subr.bf16.mxu0 0
        %1723 = vmatpush1.bf16.msra.mxu0 %v1654
        %1724 = vmatprep.subr.bf16.mxu0 0
        %1725 = vmatpush1.bf16.msra.mxu0 %v1655
        %1726 = vmatprep.subr.bf16.mxu0 0
        %1727 = vmatpush1.bf16.msra.mxu0 %v1656
        %1728 = vmatprep.subr.bf16.mxu0 0
        %1729 = vmatpush1.bf16.msra.mxu0 %v1657
        %1730 = vmatprep.subr.bf16.mxu0 0
        %1731 = vmatpush1.bf16.msra.mxu0 0
        %1732 = vmatprep.subr.bf16.mxu0 0
        %1733 = vmatpush1.bf16.msra.mxu0 0
        %1734 = vmatprep.subr.bf16.mxu0 0
        %1735 = vmatpush1.bf16.msra.mxu0 0
        %1736 = vmatprep.subr.bf16.mxu0 0
        %1737 = vmatpush1.bf16.msra.mxu0 0
        %1738 = vmatprep.subr.bf16.mxu0 0
        %1739 = vmatpush1.bf16.msra.mxu0 0
        %1740 = vmatprep.subr.bf16.mxu0 0
        %1741 = vmatpush1.bf16.msra.mxu0 0
        %1742 = vmatprep.subr.bf16.mxu0 0
        %1743 = vmatpush1.bf16.msra.mxu0 0
        %1744 = vmatprep.subr.bf16.mxu0 0
        %1745 = vmatpush1.bf16.msra.mxu0 0
        %1746 = vmatprep.mubr.bf16.mxu0 0
        %1747 = vmatmul.mubr.bf16.gmra.mrb[0].mxu0 %v1706
        %v1748 = vpop.f32.mrb[0].mxu0
        %v1749 = vadd.f32 0.0, %v1748
        %v1750 = vpop.f32.mrb[0].mxu0
        %v1751 = vpop.f32.mrb[0].mxu0
        %v1752 = vadd.f32 0.0, %v1751
        %v1753 = vpop.f32.mrb[0].mxu0
        %1754 = vmatprep.mubr.bf16.mxu0 0
        %1755 = vmatmul.mubr.bf16.gmra.mrb[0].mxu0 %v1707
        %v1756 = vpop.f32.mrb[0].mxu0
        %v1757 = vadd.f32 0.0, %v1756
        %v1758 = vpop.f32.mrb[0].mxu0
        %v1759 = vpop.f32.mrb[0].mxu0
        %v1760 = vadd.f32 0.0, %v1759
        %v1761 = vpop.f32.mrb[0].mxu0
        %1762 = vmatprep.mubr.bf16.mxu0 0
        %1763 = vmatmul.mubr.bf16.gmra.mrb[0].mxu0 %v1708
        %v1764 = vpop.f32.mrb[0].mxu0
        %v1765 = vadd.f32 0.0, %v1764
        %v1766 = vpop.f32.mrb[0].mxu0
        %v1767 = vpop.f32.mrb[0].mxu0
        %v1768 = vadd.f32 0.0, %v1767
        %v1769 = vpop.f32.mrb[0].mxu0
        %1770 = vmatprep.mubr.bf16.mxu0 0
        %1771 = vmatmul.mubr.bf16.gmra.mrb[0].mxu0 %v1709
        %v1772 = vpop.f32.mrb[0].mxu0
        %v1773 = vadd.f32 0.0, %v1772
        %v1774 = vpop.f32.mrb[0].mxu0
        %v1775 = vpop.f32.mrb[0].mxu0
        %v1776 = vadd.f32 0.0, %v1775
        %v1777 = vpop.f32.mrb[0].mxu0
        %1778 = vmatprep.mubr.bf16.mxu0 0
        %1779 = vmatmul.mubr.bf16.gmra.mrb[0].mxu0 %v1710
        %v1780 = vpop.f32.mrb[0].mxu0
        %v1781 = vadd.f32 0.0, %v1780
        %v1782 = vpop.f32.mrb[0].mxu0
        %v1783 = vpop.f32.mrb[0].mxu0
        %v1784 = vadd.f32 0.0, %v1783
        %v1785 = vpop.f32.mrb[0].mxu0
        %1786 = vmatprep.mubr.bf16.mxu0 0
        %1787 = vmatmul.mubr.bf16.gmra.mrb[0].mxu0 %v1711
        %v1788 = vpop.f32.mrb[0].mxu0
        %v1789 = vadd.f32 0.0, %v1788
        %v1790 = vpop.f32.mrb[0].mxu0
        %v1791 = vpop.f32.mrb[0].mxu0
        %v1792 = vadd.f32 0.0, %v1791
        %v1793 = vpop.f32.mrb[0].mxu0
        %1794 = vmatprep.mubr.bf16.mxu0 0
        %1795 = vmatmul.mubr.bf16.gmra.mrb[0].mxu0 %v1712
        %v1796 = vpop.f32.mrb[0].mxu0
        %v1797 = vadd.f32 0.0, %v1796
        %v1798 = vpop.f32.mrb[0].mxu0
        %v1799 = vpop.f32.mrb[0].mxu0
        %v1800 = vadd.f32 0.0, %v1799
        %v1801 = vpop.f32.mrb[0].mxu0
        %1802 = vmatprep.mubr.bf16.mxu0 0
        %1803 = vmatmul.mubr.bf16.gmra.mrb[0].mxu0 %v1713
        %v1804 = vpop.f32.mrb[0].mxu0
        %v1805 = vadd.f32 0.0, %v1804
        %v1806 = vpop.f32.mrb[0].mxu0
        %v1807 = vpop.f32.mrb[0].mxu0
        %v1808 = vadd.f32 0.0, %v1807
        %v1809 = vpop.f32.mrb[0].mxu0
        %1810 = vdwg.mxu0
        %v1811 = vld [vmem:[#allocation10] sm:$0xf]
        %v1812 = vld [vmem:[#allocation10 + $0x4] sm:$0xf]
        %v1813 = vld [vmem:[#allocation10 + $0x8] sm:$0xf]
        %v1814 = vld [vmem:[#allocation10 + $0xc] sm:$0xf]
        %v1815 = vld [vmem:[#allocation11] sm:$0x1]
        %v1817 = vlaneseq
        %v1818 = vshrl.u32 %v1817, 7
        %v1819 = vsub.s32 0, %v1818
        %v1820 = vrot.slane %v1815, %v1819
        %v1825 = vunpack.c.l.b16 %v1811
        %v1826 = vunpack.c.l.b16 %v1812
        %v1827 = vunpack.c.l.b16 %v1813
        %v1828 = vunpack.c.l.b16 %v1814
        %v1829 = vpack.c.b16 %v1826, %v1825
        %v1830 = vpack.c.b16 %v1828, %v1827
        %1831 = vrot.lane.b32.xlu0 %v1829, 64
        %v1832 = vpop.permute.xlu0 %1831
        %1833 = vrot.lane.b32.xlu0 %v1830, 64
        %v1834 = vpop.permute.xlu0 %1833
        %1837 = vrot.lane.b32.xlu0 %v1820, 64
        %v1838 = vpop.permute.xlu0 %1837
        %1840 = vmatprep.subr.bf16.mxu0 0
        %1841 = vmatpush1.bf16.msra.mxu0 %v1832
        %1842 = vmatprep.subr.bf16.mxu0 0
        %1843 = vmatpush1.bf16.msra.mxu0 %v1834
        %1844 = vmatprep.subr.bf16.mxu0 0
        %1845 = vmatpush1.bf16.msra.mxu0 0
        %1846 = vmatprep.subr.bf16.mxu0 0
        %1847 = vmatpush1.bf16.msra.mxu0 0
        %1848 = vmatprep.subr.bf16.mxu0 0
        %1849 = vmatpush1.bf16.msra.mxu0 0
        %1850 = vmatprep.subr.bf16.mxu0 0
        %1851 = vmatpush1.bf16.msra.mxu0 0
        %1852 = vmatprep.subr.bf16.mxu0 0
        %1853 = vmatpush1.bf16.msra.mxu0 0
        %1854 = vmatprep.subr.bf16.mxu0 0
        %1855 = vmatpush1.bf16.msra.mxu0 0
        %1856 = vmatprep.subr.bf16.mxu0 0
        %1857 = vmatpush1.bf16.msra.mxu0 0
        %1858 = vmatprep.subr.bf16.mxu0 0
        %1859 = vmatpush1.bf16.msra.mxu0 0
        %1860 = vmatprep.subr.bf16.mxu0 0
        %1861 = vmatpush1.bf16.msra.mxu0 0
        %1862 = vmatprep.subr.bf16.mxu0 0
        %1863 = vmatpush1.bf16.msra.mxu0 0
        %1864 = vmatprep.subr.bf16.mxu0 0
        %1865 = vmatpush1.bf16.msra.mxu0 0
        %1866 = vmatprep.subr.bf16.mxu0 0
        %1867 = vmatpush1.bf16.msra.mxu0 0
        %1868 = vmatprep.subr.bf16.mxu0 0
        %1869 = vmatpush1.bf16.msra.mxu0 0
        %1870 = vmatprep.subr.bf16.mxu0 0
        %1871 = vmatpush1.bf16.msra.mxu0 0
        %1872 = vmatprep.mubr.bf16.mxu0 0
        %1873 = vmatmul.mubr.bf16.gmra.mrb[0].mxu0 %v766
        %v1874 = vpop.f32.mrb[0].mxu0
        %v1875 = vadd.f32 %v1838, %v1874
        %v1876 = vpop.f32.mrb[0].mxu0
        %v1877 = vpop.f32.mrb[0].mxu0
        %v1878 = vadd.f32 %v1838, %v1877
        %v1879 = vpop.f32.mrb[0].mxu0
        %1880 = vmatprep.mubr.bf16.mxu0 0
        %1881 = vmatmul.mubr.bf16.gmra.mrb[0].mxu0 %v769
        %v1882 = vpop.f32.mrb[0].mxu0
        %v1883 = vadd.f32 %v1838, %v1882
        %v1884 = vpop.f32.mrb[0].mxu0
        %v1885 = vpop.f32.mrb[0].mxu0
        %v1886 = vadd.f32 %v1838, %v1885
        %v1887 = vpop.f32.mrb[0].mxu0
        %1888 = vmatprep.mubr.bf16.mxu0 0
        %1889 = vmatmul.mubr.bf16.gmra.mrb[0].mxu0 %v772
        %v1890 = vpop.f32.mrb[0].mxu0
        %v1891 = vadd.f32 %v1838, %v1890
        %v1892 = vpop.f32.mrb[0].mxu0
        %v1893 = vpop.f32.mrb[0].mxu0
        %v1894 = vadd.f32 %v1838, %v1893
        %v1895 = vpop.f32.mrb[0].mxu0
        %1896 = vmatprep.mubr.bf16.mxu0 0
        %1897 = vmatmul.mubr.bf16.gmra.mrb[0].mxu0 %v775
        %v1898 = vpop.f32.mrb[0].mxu0
        %v1899 = vadd.f32 %v1838, %v1898
        %v1900 = vpop.f32.mrb[0].mxu0
        %v1901 = vpop.f32.mrb[0].mxu0
        %v1902 = vadd.f32 %v1838, %v1901
        %v1903 = vpop.f32.mrb[0].mxu0
        %1904 = vmatprep.mubr.bf16.mxu0 0
        %1905 = vmatmul.mubr.bf16.gmra.mrb[0].mxu0 %v778
        %v1906 = vpop.f32.mrb[0].mxu0
        %v1907 = vadd.f32 %v1838, %v1906
        %v1908 = vpop.f32.mrb[0].mxu0
        %v1909 = vpop.f32.mrb[0].mxu0
        %v1910 = vadd.f32 %v1838, %v1909
        %v1911 = vpop.f32.mrb[0].mxu0
        %1912 = vmatprep.mubr.bf16.mxu0 0
        %1913 = vmatmul.mubr.bf16.gmra.mrb[0].mxu0 %v781
        %v1914 = vpop.f32.mrb[0].mxu0
        %v1915 = vadd.f32 %v1838, %v1914
        %v1916 = vpop.f32.mrb[0].mxu0
        %v1917 = vpop.f32.mrb[0].mxu0
        %v1918 = vadd.f32 %v1838, %v1917
        %v1919 = vpop.f32.mrb[0].mxu0
        %1920 = vmatprep.mubr.bf16.mxu0 0
        %1921 = vmatmul.mubr.bf16.gmra.mrb[0].mxu0 %v784
        %v1922 = vpop.f32.mrb[0].mxu0
        %v1923 = vadd.f32 %v1838, %v1922
        %v1924 = vpop.f32.mrb[0].mxu0
        %v1925 = vpop.f32.mrb[0].mxu0
        %v1926 = vadd.f32 %v1838, %v1925
        %v1927 = vpop.f32.mrb[0].mxu0
        %1928 = vmatprep.mubr.bf16.mxu0 0
        %1929 = vmatmul.mubr.bf16.gmra.mrb[0].mxu0 %v787
        %v1930 = vpop.f32.mrb[0].mxu0
        %v1931 = vadd.f32 %v1838, %v1930
        %v1932 = vpop.f32.mrb[0].mxu0
        %v1933 = vpop.f32.mrb[0].mxu0
        %v1934 = vadd.f32 %v1838, %v1933
        %v1935 = vpop.f32.mrb[0].mxu0
        %1936 = vdwg.mxu0
        %1937 = vrot.lane.b32.xlu0 %v743, 64
        %v1938 = vpop.permute.xlu0 %1937
        %v1940 = vmul.f32 %v1701, %v1938
        %v1941 = vmul.f32 %v1749, %v1875
        %v1942 = vmul.f32 %v1752, %v1878
        %v1943 = vmul.f32 %v1757, %v1883
        %v1944 = vmul.f32 %v1760, %v1886
        %v1945 = vmul.f32 %v1765, %v1891
        %v1946 = vmul.f32 %v1768, %v1894
        %v1947 = vmul.f32 %v1773, %v1899
        %v1948 = vmul.f32 %v1776, %v1902
        %v1949 = vmul.f32 %v1781, %v1907
        %v1950 = vmul.f32 %v1784, %v1910
        %v1951 = vmul.f32 %v1789, %v1915
        %v1952 = vmul.f32 %v1792, %v1918
        %v1953 = vmul.f32 %v1797, %v1923
        %v1954 = vmul.f32 %v1800, %v1926
        %v1955 = vmul.f32 %v1805, %v1931
        %v1956 = vmul.f32 %v1808, %v1934
        %v1957 = vsel %vm522, %v1941, 0.0
        %v1958 = vsel %vm522, %v1942, 0.0
        %v1959 = vadd.f32 %v1957, %v1958
        %v1960 = vrot.slane %v1959, 4
        %v1961 = vadd.f32 %v1959, %v1960
        %v1962 = vrot.slane %v1961, 2
        %v1963 = vadd.f32 %v1961, %v1962
        %v1964 = vrot.slane %v1963, 1
        %v1965 = vadd.f32 %v1963, %v1964
        %v1966 = vsel %vm522, %v1943, 0.0
        %v1967 = vsel %vm522, %v1944, 0.0
        %v1968 = vadd.f32 %v1966, %v1967
        %v1969 = vrot.slane %v1968, 4
        %v1970 = vadd.f32 %v1968, %v1969
        %v1971 = vrot.slane %v1970, 2
        %v1972 = vadd.f32 %v1970, %v1971
        %v1973 = vrot.slane %v1972, 1
        %v1974 = vadd.f32 %v1972, %v1973
        %v1975 = vsel %vm522, %v1945, 0.0
        %v1976 = vsel %vm522, %v1946, 0.0
        %v1977 = vadd.f32 %v1975, %v1976
        %v1978 = vrot.slane %v1977, 4
        %v1979 = vadd.f32 %v1977, %v1978
        %v1980 = vrot.slane %v1979, 2
        %v1981 = vadd.f32 %v1979, %v1980
        %v1982 = vrot.slane %v1981, 1
        %v1983 = vadd.f32 %v1981, %v1982
        %v1984 = vsel %vm522, %v1947, 0.0
        %v1985 = vsel %vm522, %v1948, 0.0
        %v1986 = vadd.f32 %v1984, %v1985
        %v1987 = vrot.slane %v1986, 4
        %v1988 = vadd.f32 %v1986, %v1987
        %v1989 = vrot.slane %v1988, 2
        %v1990 = vadd.f32 %v1988, %v1989
        %v1991 = vrot.slane %v1990, 1
        %v1992 = vadd.f32 %v1990, %v1991
        %v1993 = vsel %vm522, %v1949, 0.0
        %v1994 = vsel %vm522, %v1950, 0.0
        %v1995 = vadd.f32 %v1993, %v1994
        %v1996 = vrot.slane %v1995, 4
        %v1997 = vadd.f32 %v1995, %v1996
        %v1998 = vrot.slane %v1997, 2
        %v1999 = vadd.f32 %v1997, %v1998
        %v2000 = vrot.slane %v1999, 1
        %v2001 = vadd.f32 %v1999, %v2000
        %v2002 = vsel %vm522, %v1951, 0.0
        %v2003 = vsel %vm522, %v1952, 0.0
        %v2004 = vadd.f32 %v2002, %v2003
        %v2005 = vrot.slane %v2004, 4
        %v2006 = vadd.f32 %v2004, %v2005
        %v2007 = vrot.slane %v2006, 2
        %v2008 = vadd.f32 %v2006, %v2007
        %v2009 = vrot.slane %v2008, 1
        %v2010 = vadd.f32 %v2008, %v2009
        %v2011 = vsel %vm522, %v1953, 0.0
        %v2012 = vsel %vm522, %v1954, 0.0
        %v2013 = vadd.f32 %v2011, %v2012
        %v2014 = vrot.slane %v2013, 4
        %v2015 = vadd.f32 %v2013, %v2014
        %v2016 = vrot.slane %v2015, 2
        %v2017 = vadd.f32 %v2015, %v2016
        %v2018 = vrot.slane %v2017, 1
        %v2019 = vadd.f32 %v2017, %v2018
        %v2020 = vsel %vm522, %v1955, 0.0
        %v2021 = vsel %vm522, %v1956, 0.0
        %v2022 = vadd.f32 %v2020, %v2021
        %v2023 = vrot.slane %v2022, 4
        %v2024 = vadd.f32 %v2022, %v2023
        %v2025 = vrot.slane %v2024, 2
        %v2026 = vadd.f32 %v2024, %v2025
        %v2027 = vrot.slane %v2026, 1
        %v2028 = vadd.f32 %v2026, %v2027
        %v2037 = vsel %vm672, %v1974, %v1965
        %v2038 = vsel %vm675, %v1983, %v2037
        %v2039 = vsel %vm678, %v1992, %v2038
        %v2040 = vsel %vm681, %v2001, %v2039
        %v2041 = vsel %vm684, %v2010, %v2040
        %v2042 = vsel %vm687, %v2019, %v2041
        %v2043 = vsel %vm690, %v2028, %v2042
        %v2045 = vadd.f32 %v1940, %v2043
        %v2046 = vpack.c.bf16 %v2045, %v2045
        %v2047 = vld [vmem:[#allocation13] sm:$0xf]
        %v2048 = vld [vmem:[#allocation13 + $0x4] sm:$0xf]
        %v2049 = vld [vmem:[#allocation13 + $0x8] sm:$0xf]
        %v2050 = vld [vmem:[#allocation13 + $0xc] sm:$0xf]
        %v2051 = vld [vmem:[#allocation14] sm:$0x1]
        %v2053 = vlaneseq
        %v2054 = vshrl.u32 %v2053, 7
        %v2055 = vsub.s32 0, %v2054
        %v2056 = vrot.slane %v2051, %v2055
        %v2062 = vunpack.c.l.b16 %v2047
        %v2063 = vunpack.c.l.b16 %v2048
        %v2064 = vunpack.c.l.b16 %v2049
        %v2065 = vunpack.c.l.b16 %v2050
        %v2066 = vpack.c.b16 %v2063, %v2062
        %v2067 = vpack.c.b16 %v2065, %v2064
        %v2071 = vsel %vm522, %v2046, 0
        %2073 = vmatprep.subr.bf16.mxu0 0
        %2074 = vmatpush1.bf16.msra.mxu0 %v2066
        %2075 = vmatprep.subr.bf16.mxu0 0
        %2076 = vmatpush1.bf16.msra.mxu0 %v2067
        %2077 = vmatprep.subr.bf16.mxu0 0
        %2078 = vmatpush1.bf16.msra.mxu0 0
        %2079 = vmatprep.subr.bf16.mxu0 0
        %2080 = vmatpush1.bf16.msra.mxu0 0
        %2081 = vmatprep.subr.bf16.mxu0 0
        %2082 = vmatpush1.bf16.msra.mxu0 0
        %2083 = vmatprep.subr.bf16.mxu0 0
        %2084 = vmatpush1.bf16.msra.mxu0 0
        %2085 = vmatprep.subr.bf16.mxu0 0
        %2086 = vmatpush1.bf16.msra.mxu0 0
        %2087 = vmatprep.subr.bf16.mxu0 0
        %2088 = vmatpush1.bf16.msra.mxu0 0
        %2089 = vmatprep.subr.bf16.mxu0 0
        %2090 = vmatpush1.bf16.msra.mxu0 0
        %2091 = vmatprep.subr.bf16.mxu0 0
        %2092 = vmatpush1.bf16.msra.mxu0 0
        %2093 = vmatprep.subr.bf16.mxu0 0
        %2094 = vmatpush1.bf16.msra.mxu0 0
        %2095 = vmatprep.subr.bf16.mxu0 0
        %2096 = vmatpush1.bf16.msra.mxu0 0
        %2097 = vmatprep.subr.bf16.mxu0 0
        %2098 = vmatpush1.bf16.msra.mxu0 0
        %2099 = vmatprep.subr.bf16.mxu0 0
        %2100 = vmatpush1.bf16.msra.mxu0 0
        %2101 = vmatprep.subr.bf16.mxu0 0
        %2102 = vmatpush1.bf16.msra.mxu0 0
        %2103 = vmatprep.subr.bf16.mxu0 0
        %2104 = vmatpush1.bf16.msra.mxu0 0
        %2105 = vmatprep.mubr.bf16.mxu0 0
        %2106 = vmatmul.mubr.bf16.gmra.mrb[0].mxu0 %v2071
        %v2107 = vpop.f32.mrb[0].mxu0
        %v2108 = vadd.f32 %v2056, %v2107
        %v2109 = vpop.f32.mrb[0].mxu0
        %v2110 = vpop.f32.mrb[0].mxu0
        %v2111 = vpop.f32.mrb[0].mxu0
        %2112 = vdwg.mxu0
        %vm2113 = vcmask 130048
        %2114 = vst.msk [vmem:[%s503] sm:$0xff] %vm2113, %v2108
        %s2115 = sand.u32 %s255, 1
        %s2116 = scalar_lea.sflag [#allocation4], %s2115
        %s2117 = sand.u32 %s255, 1
        %s2118 = smul.addr %s2117, 8
        %s2119 = scalar_lea.vmem [#allocation19], %s2118
        // Predicated region
        $region101: #{tpu_custom_call.1} parent=59 // pred_check
          %p2120 = pneg %p265
        $region102: #{tpu_custom_call.1} parent=59 // pred_check_branch
          %2122 = sbr.rel (%p2120) target = $region104
        $region103: #{tpu_custom_call.1} parent=59 // pred_region
          %s2124 = ssub.s32 128, 128
          %2125 = vsyncadd %s2116, %s2124
          %s2126 = smul.addr %s32, 128
          %s2127 = scalar_lea.hbm %s10, %s2126
          %s2129 = sshll.u32 %s2119, 4
          %s2130 = int_to_ptr.vmem [resolvable:$true] %s2129
          %2132 = dma.vmem_to_hbm [thread:$0]  %s2130, 128, %s2127, %s2116
        $region104: #{tpu_custom_call.1} parent=59 // pred_fallthru
          _
      $region60: #{tpu_custom_call.1} parent=5 // pred_fallthru
        _
      %p2133 = scmp.le.s32.totalorder 2, %s27
      // Predicated region
      $region105: #{tpu_custom_call.1} parent=5 // pred_check
        %p2134 = pneg %p2133
      $region106: #{tpu_custom_call.1} parent=5 // pred_check_branch
        %2136 = sbr.rel (%p2134) target = $region108
      $region107: #{tpu_custom_call.1} parent=5 // pred_region
        %s2137 = ssub.s32 %s27, 2
        // Predicated region
        $region109: #{tpu_custom_call.1} parent=107 // pred_check
          %p2138 = pneg %p271
        $region110: #{tpu_custom_call.1} parent=107 // pred_check_branch
          %2140 = sbr.rel (%p2138) target = $region112
        $region111: #{tpu_custom_call.1} parent=107 // pred_region
          %s2141 = sand.u32 %s256, 1
          %s2142 = scalar_lea.sflag [#allocation4], %s2141
          %s2143 = sand.u32 %s256, 1
          %s2144 = smul.addr %s2143, 8
          %s2145 = scalar_lea.vmem [#allocation19], %s2144
          %2146 = dma.done %s2142, 128
        $region112: #{tpu_custom_call.1} parent=107 // pred_fallthru
          _
      $region108: #{tpu_custom_call.1} parent=5 // pred_fallthru
        _
    $region6: #{tpu_custom_call.1} parent=1 // loop_footer
      %s31 = sadd.s32 1, %s27
    $region7: #{tpu_custom_call.1} parent=1 // loop_footer_branch
      %26 = sbr.rel target = $region3
    $region8: #{tpu_custom_call.1} parent=1 // loop_exit
      _
    %2147 = vsyncpa [#allocation3], 1
    %s2148 = scalar_lea.sflag [#allocation3], 1
    %2149 = vsyncpa %s2148, 1
    %2150 = vsyncpa [#allocation6], 1
    %2151 = vsyncpa [#allocation9], 1
    %2152 = vsyncpa [#allocation12], 1
    %2153 = vsyncpa [#allocation15], 1
    %2154 = vsyncpa [#allocation18], 1
    %2155 = vsyncpa [#allocation4], 1
    %s2156 = scalar_lea.sflag [#allocation4], 1
    %2157 = vsyncpa %s2156, 1

</llo_original>
